<compile_context>
chip_gen: v7x
topology: tpu7x:2x2x1
jax: 0.10.0
libtpu: 0.0.40
codegen_flags: <defaults>
</compile_context>

<pallas_src>
import functools

import jax
import jax.numpy as jnp
from jax.experimental import pallas as pl
from jax.experimental.pallas import tpu as pltpu

NUM_CLASSES = 1
NUM_MASK_PARAMS = 67          # (64 feat channels + 2 coords) * 1 + 1 bias
NUM_GEN_PARAMS = 134          # mask params + reg params
MASK_BRANCH_CH = 64
MLP_HIDDEN = 32
MLP_OUT = 2
PARAM_PAD = 256               # params head padded/permuted to 2 x 128 lanes


# ----------------------------------------------------------------------------
# Fused Pallas kernel: the whole CondLaneNetONNX forward in one program.
# ----------------------------------------------------------------------------
def _condlane_kernel(*refs, num_ins):
    (x0,
     wbb1, bbb1, wbb2, bbb2, wbb3, bbb3,
     wlat1, blat1, wlat2, blat2, wlat3, blat3,
     wh1, bh1, wh2, bh2,
     wmb, bmb,
     s1, s2, u2, u1, coords,
     same_f, nbhd_f, tie_f, k_iota, pos_iota,
     b1big, b2big,
     c1big_hbm, c2big_hbm,
     maskreg_ref, small_ref,
     c1v, c2v, dsem) = refs

    f32 = jnp.float32

    # ---- background prefetch of the large, last-used range-MLP weights ------
    cp1 = pltpu.make_async_copy(c1big_hbm, c1v, dsem.at[0])
    cp2 = pltpu.make_async_copy(c2big_hbm, c2v, dsem.at[1])
    cp1.start()
    cp2.start()

    def conv(w_ref, x, b_ref, relu=False):
        # 1x1 conv in (Cout, Cin) @ (Cin, HW) orientation -> lane-dense output
        y = jnp.dot(w_ref[...], x, preferred_element_type=f32) + b_ref[...]
        return jnp.maximum(y, 0.0) if relu else y

    def mm(a, b):
        return jnp.dot(a, b, preferred_element_type=f32)

    def sel(x, m_ref):
        # selection matmul against a bf16 0/1 matrix (exact values; half DMA)
        return mm(x, m_ref[...].astype(f32))

    # ---- backbone: stride-2 subsample (selection matmul) + 1x1 conv + relu --
    c1 = conv(wbb1, x0[...], bbb1, relu=True)            # (8,   HW1)
    c2 = conv(wbb2, sel(c1, s1), bbb2, relu=True)        # (16,  HW2)
    c3 = conv(wbb3, sel(c2, s2), bbb3, relu=True)        # (32,  HW3)

    # ---- FPN neck (top-down, nearest 2x upsample as selection matmul) -------
    p3 = conv(wlat3, c3, blat3)                           # (16, HW3)  = out[1]
    p2 = conv(wlat2, c2, blat2) + sel(p3, u2)             # (16, HW2)
    p1 = conv(wlat1, c1, blat1) + sel(p2, u1)             # (16, HW1)  = out[0]

    # ---- ctnet head on out[1]: merged hidden stage + block-diag 2nd stage ---
    h1a = conv(wh1, p3, bh1, relu=True)                   # (32,  n_pos)
    head2 = conv(wh2, h1a, bh2)                           # (257, n_pos)
    gp = head2[0:PARAM_PAD, :]                            # (256, n_pos) permuted/padded params
    hm = head2[PARAM_PAD:PARAM_PAD + NUM_CLASSES, :]      # (1,   n_pos)

    # ---- heatmap: clamp(sigmoid) once + 3x3/stride1/pad1 max-pool NMS -------
    sc_row = jnp.clip(jax.nn.sigmoid(hm), 1e-4, 1.0 - 1e-4)      # (1, n_pos)
    same = same_f[...] != 0.0
    nbhd = nbhd_f[...] != 0.0
    tie = tie_f[...] != 0.0
    NEG = f32(-1.0)                                               # < 1e-4 and < 0

    sc_col = jnp.max(jnp.where(same, sc_row, NEG), axis=1, keepdims=True)    # (n_pos,1)
    hmax_col = jnp.max(jnp.where(nbhd, sc_row, NEG), axis=1, keepdims=True)  # (n_pos,1)
    keep_col = (hmax_col == sc_col).astype(f32)
    heat_col = sc_col * keep_col
    heat_row = jnp.max(jnp.where(same, heat_col, NEG), axis=0, keepdims=True)  # (1,n_pos)

    # ---- top-k via exact rank (ties -> smaller index first, like topk) ------
    gt = heat_col > heat_row
    eq = heat_col == heat_row
    better = jnp.where(gt | (eq & tie), 1.0, 0.0)                 # [r,c]: r beats c
    rank_row = jnp.sum(better, axis=0, keepdims=True)             # (1, n_pos)
    onehot = rank_row == k_iota[...]                              # (num_ins, n_pos)
    onehot_f = onehot.astype(f32)
    scores = jnp.sum(jnp.where(onehot, heat_row, 0.0), axis=1, keepdims=True)
    inds_f = jnp.sum(jnp.where(onehot, pos_iota[...], 0.0), axis=1, keepdims=True)

    # ---- gather permuted params at top-k positions, stack mask/reg halves ---
    g = jax.lax.dot_general(onehot_f, gp, (((1,), (1,)), ((), ())),
                            preferred_element_type=f32)           # (num_ins, 256)
    # vreg-aligned split at lane 128, stacked along sublanes -> no lane-crossing
    g8 = jnp.concatenate([g[:, 0:128], g[:, 128:256]], axis=0)    # (2*num_ins, 128)
    feat8 = g8[:, 0:MASK_BRANCH_CH]                               # (2*num_ins, 64)
    x8 = g8[:, 64:65]
    y8 = g8[:, 65:66]
    bias8 = g8[:, 66:67]

    # ---- mask branch + FUSED dynamic mask/reg heads (single MXU op) ---------
    mbf = conv(wmb, p1, bmb, relu=True)                           # (64, HW1)
    co = coords[...]                                              # (2,  HW1)
    out8 = mm(feat8, mbf)                                         # (2*num_ins, HW1)
    full8 = out8 + x8 * co[0:1, :] + y8 * co[1:2, :] + bias8
    maskreg_ref[...] = full8                                      # rows 0:4 masks, 4:8 regs

    # ---- range MLP: per-(instance, column) over rows as block-diag matmuls --
    cp1.wait()
    cp2.wait()
    masks4 = full8[0:num_ins, :]                                  # (num_ins, HW1)
    hid = jnp.maximum(mm(masks4, c1v[...]) + b1big[...], 0.0)     # (num_ins, w*32)
    fr = mm(hid, c2v[...]) + b2big[...]                           # (num_ins, w*2)

    # ---- pack the narrow outputs into one lane-padded buffer ----------------
    small_ref[...] = jnp.zeros_like(small_ref)
    nfr = fr.shape[1]
    small_ref[:, 0:nfr] = fr
    small_ref[:, nfr:nfr + 1] = scores
    small_ref[:, nfr + 1:nfr + 2] = inds_f


# ----------------------------------------------------------------------------
# Static selection / interpolation matrices.
# ----------------------------------------------------------------------------
def _subsample_matrix(h, w):
    """(h*w, (h//2)*(w//2)) selection matrix implementing x[:, ::2, ::2]."""
    hh, ww = h // 2, w // 2
    q = jnp.arange(hh * ww)
    src = (q // ww) * 2 * w + (q % ww) * 2
    return jax.nn.one_hot(src, h * w, dtype=jnp.float32).T


def _upsample_matrix(h, w):
    """(h*w, 4*h*w) selection matrix implementing nearest 2x upsampling."""
    H, W = 2 * h, 2 * w
    q = jnp.arange(H * W)
    src = (q // W // 2) * w + (q % W) // 2
    return jax.nn.one_hot(src, h * w, dtype=jnp.float32).T


def make_coords(h, w):
    ys = jnp.linspace(-1.0, 1.0, h, dtype=jnp.float32)
    xs = jnp.linspace(-1.0, 1.0, w, dtype=jnp.float32)
    y = jnp.broadcast_to(ys[:, None], (h, w))
    x = jnp.broadcast_to(xs[None, :], (h, w))
    return jnp.stack([x, y], axis=0).reshape(2, h * w)   # (2, h*w), h-major


# ----------------------------------------------------------------------------
# Parameter construction (deterministic, synthetic). Weights are (Cout, Cin).
# ----------------------------------------------------------------------------
def init_params(key):
    def lin(k, cout, cin, scale=0.1):
        kw, kb = jax.random.split(k)
        return (scale * jax.random.normal(kw, (cout, cin), jnp.float32),
                0.01 * jax.random.normal(kb, (cout,), jnp.float32))

    keys = jax.random.split(key, 12)
    p = {}
    p["bb1"] = lin(keys[0], 8, 3)
    p["bb2"] = lin(keys[1], 16, 8)
    p["bb3"] = lin(keys[2], 32, 16)
    p["lat1"] = lin(keys[3], 16, 8)
    p["lat2"] = lin(keys[4], 16, 16)
    p["lat3"] = lin(keys[5], 16, 32)
    p["hm1"] = lin(keys[6], 16, 16)
    p["hm2"] = lin(keys[7], NUM_CLASSES, 16)
    p["pr1"] = lin(keys[8], 16, 16)
    p["pr2"] = lin(keys[9], NUM_GEN_PARAMS, 16)
    p["mb"] = lin(keys[10], MASK_BRANCH_CH, 16)
    kk = jax.random.split(keys[11], 2)
    p["mlp1"] = lin(kk[0], MLP_HIDDEN, 16)   # input dim = h_mask
    p["mlp2"] = lin(kk[1], MLP_OUT, MLP_HIDDEN)
    return p


# ----------------------------------------------------------------------------
# One-time, weight-load-time preparation (call OUTSIDE jit): every constant
# the fused kernel consumes.  Nothing here re-runs per forward call.
# ----------------------------------------------------------------------------
def prepare_inputs(params, H, W, num_ins=4):
    f32, bf16 = jnp.float32, jnp.bfloat16
    h1, w1 = H // 2, W // 2
    h2, w2 = h1 // 2, w1 // 2
    h3, w3 = h2 // 2, w2 // 2
    n_pos = h3 * w3

    def wb(name):
        w, b = params[name]
        return w.astype(f32), b.reshape(-1, 1).astype(f32)

    # merged ctnet head, stage 1: rows 0:16 hm hidden, rows 16:32 params hidden
    w_hm1, b_hm1 = params["hm1"]
    w_pr1, b_pr1 = params["pr1"]
    w_hm2, b_hm2 = params["hm2"]
    w_pr2, b_pr2 = params["pr2"]
    wh1 = jnp.concatenate([w_hm1, w_pr1], axis=0)                 # (32, 16)
    bh1 = jnp.concatenate([b_hm1, b_pr1], axis=0).reshape(-1, 1)

    # params-head channels permuted + zero-padded to 256:
    #   0:64 mask feat | 64,65 mask xy | 66 mask bias | 67:128 pad
    # 128:192 reg feat |192,193 reg xy |194 reg bias  |195:256 pad
    def permute_pad(a):
        z = jnp.zeros((128 - NUM_MASK_PARAMS,) + a.shape[1:], a.dtype)
        return jnp.concatenate([a[:NUM_MASK_PARAMS], z,
                                a[NUM_MASK_PARAMS:], z], axis=0)  # (256, ...)
    w_pr2p = permute_pad(w_pr2)
    b_pr2p = permute_pad(b_pr2.reshape(-1, 1))

    # merged ctnet head, stage 2 (block-diagonal over the hidden halves)
    wh2 = jnp.zeros((PARAM_PAD + NUM_CLASSES, 32), f32)
    wh2 = wh2.at[0:PARAM_PAD, 16:32].set(w_pr2p)
    wh2 = wh2.at[PARAM_PAD:, 0:16].set(w_hm2)
    bh2 = jnp.concatenate([b_pr2p, b_hm2.reshape(-1, 1)], axis=0)  # (257, 1)

    # 0/1 selection matrices: exact in bf16 -> half the DMA bytes
    s1 = _subsample_matrix(h1, w1).astype(bf16)
    s2 = _subsample_matrix(h2, w2).astype(bf16)
    u2 = _upsample_matrix(h3, w3).astype(bf16)
    u1 = _upsample_matrix(h2, w2).astype(bf16)
    coords = make_coords(h1, w1)

    # static NMS / top-k masks (symmetric 3x3 neighborhood, tie-break r<c)
    idx = jnp.arange(n_pos)
    rr, cc = idx[:, None], idx[None, :]
    yr, xr = rr // w3, rr % w3
    yc, xc = cc // w3, cc % w3
    same_f = (rr == cc).astype(f32)
    nbhd_f = ((jnp.abs(yr - yc) <= 1) & (jnp.abs(xr - xc) <= 1)).astype(f32)
    tie_f = (rr < cc).astype(f32)
    k_iota = jnp.broadcast_to(
        jnp.arange(num_ins, dtype=f32)[:, None], (num_ins, n_pos)).copy()
    pos_iota = jnp.broadcast_to(
        jnp.arange(n_pos, dtype=f32)[None, :], (num_ins, n_pos)).copy()

    # range MLP expanded to block-diagonal matrices over the width axis (kept
    # f32 since they embed real MLP weights); prefetched async in the kernel.
    w_mlp1, b_mlp1 = params["mlp1"]
    w_mlp2, b_mlp2 = params["mlp2"]
    eye_w = jnp.eye(w1, dtype=f32)
    c1big = jnp.einsum("kh,wv->hwvk", w_mlp1, eye_w).reshape(
        h1 * w1, w1 * MLP_HIDDEN)
    b1big = jnp.tile(b_mlp1[None, :], (1, w1))
    c2big = jnp.einsum("vu,ck->vkuc", eye_w, w_mlp2).reshape(
        w1 * MLP_HIDDEN, w1 * MLP_OUT)
    b2big = jnp.tile(b_mlp2[None, :], (1, w1))

    tail = []
    for name in ("bb1", "bb2", "bb3", "lat1", "lat2", "lat3"):
        w, b = wb(name)
        tail += [w, b]
    tail += [wh1, bh1, wh2, bh2]
    w_mb, b_mb = wb("mb")
    tail += [w_mb, b_mb]
    tail += [s1, s2, u2, u1, coords,
             same_f, nbhd_f, tie_f, k_iota, pos_iota,
             b1big, b2big, c1big, c2big]
    return tuple(tail)


# ----------------------------------------------------------------------------
# Full forward pass (mirrors CondLaneNetONNX.forward), one fused pallas_call.
# ----------------------------------------------------------------------------
def condlanenet_forward(img, prepared, num_ins=4):
    _, cin, H, W = img.shape
    h1, w1 = H // 2, W // 2        # out[0] / mask-branch resolution

    # Sole per-call wrapper op: stride-2 pick + reshape of the tiny raw image
    # into the lane-dense (C, HW) layout (in-kernel equivalents would cost a
    # 512 KiB selection-matrix DMA or a strided lane load).
    x0 = img[0, :, ::2, ::2].reshape(cin, h1 * w1)

    inputs = (x0,) + tuple(prepared)
    vmem = pl.BlockSpec(memory_space=pltpu.MemorySpace.VMEM)
    hbm = pl.BlockSpec(memory_space=pl.ANY)   # manually async-prefetched inside

    kernel = functools.partial(_condlane_kernel, num_ins=num_ins)
    maskreg, small = pl.pallas_call(
        kernel,
        out_shape=(
            jax.ShapeDtypeStruct((2 * num_ins, h1 * w1), jnp.float32),   # masks|regs
            jax.ShapeDtypeStruct((num_ins, 128), jnp.float32),           # fr|scores|inds
        ),
        in_specs=[vmem] * (len(inputs) - 2) + [hbm, hbm],
        out_specs=(vmem, vmem),
        scratch_shapes=[
            pltpu.VMEM((h1 * w1, w1 * MLP_HIDDEN), jnp.float32),  # c1big landing
            pltpu.VMEM((w1 * MLP_HIDDEN, w1 * MLP_OUT), jnp.float32),
            pltpu.SemaphoreType.DMA((2,)),
        ],
    )(*inputs)

    # model-boundary slices/reshapes only (no transposes)
    masks = maskreg[:num_ins].reshape(num_ins, h1, w1)
    regs = maskreg[num_ins:].reshape(num_ins, h1, w1)
    nfr = w1 * MLP_OUT
    feat_range = small[:, :nfr].reshape(num_ins, w1, MLP_OUT)
    scores = small[:, nfr]
    inds = small[:, nfr + 1].astype(jnp.int32)
    return scores, inds, regs, masks, feat_range


# ----------------------------------------------------------------------------
if __name__ == "__main__":
    key = jax.random.PRNGKey(0)
    img = jax.random.normal(key, (1, 3, 32, 32), jnp.float32)   # NCHW, batch=1

    weights = init_params(jax.random.PRNGKey(1))
    # one-time, weight-load-time prep (outside jit): no per-call XLA ops
    prepared = prepare_inputs(weights, H=32, W=32, num_ins=4)

    fwd = jax.jit(functools.partial(condlanenet_forward, num_ins=4))
    scores, inds, regs, masks, feat_range = fwd(img, prepared)
    jax.block_until_ready((scores, inds, regs, masks, feat_range))

    assert scores.shape == (4,)
    assert inds.shape == (4,)
    assert regs.shape == (4, 16, 16)
    assert masks.shape == (4, 16, 16)
    assert feat_range.shape == (4, 16, 2)
    # lightweight, non-flaky sanity checks
    assert bool(jnp.all(jnp.isfinite(masks))) and bool(jnp.all(jnp.isfinite(regs)))
    assert bool(jnp.all(jnp.isfinite(feat_range)))
    assert bool(jnp.all(scores[:-1] >= scores[1:]))           # top-k descending
    assert bool(jnp.all((inds >= 0) & (inds < 16)))           # valid 4x4 flat idx
    # TODO(synk): original ResNet backbone / 3x3 FPN convs replaced by
    # deterministic synthetic 1x1-conv stand-ins (no checkpoint available).
    print("KERNEL_OK")
</pallas_src>

<mosaic_0001>
module attributes {stable_mosaic.version = 11 : i64} {
  func.func @_condlane_kernel(%arg0: memref<3x256xf32, #tpu.memory_space<vmem>>, %arg1: memref<8x3xf32, #tpu.memory_space<vmem>>, %arg2: memref<8x1xf32, #tpu.memory_space<vmem>>, %arg3: memref<16x8xf32, #tpu.memory_space<vmem>>, %arg4: memref<16x1xf32, #tpu.memory_space<vmem>>, %arg5: memref<32x16xf32, #tpu.memory_space<vmem>>, %arg6: memref<32x1xf32, #tpu.memory_space<vmem>>, %arg7: memref<16x8xf32, #tpu.memory_space<vmem>>, %arg8: memref<16x1xf32, #tpu.memory_space<vmem>>, %arg9: memref<16x16xf32, #tpu.memory_space<vmem>>, %arg10: memref<16x1xf32, #tpu.memory_space<vmem>>, %arg11: memref<16x32xf32, #tpu.memory_space<vmem>>, %arg12: memref<16x1xf32, #tpu.memory_space<vmem>>, %arg13: memref<32x16xf32, #tpu.memory_space<vmem>>, %arg14: memref<32x1xf32, #tpu.memory_space<vmem>>, %arg15: memref<257x32xf32, #tpu.memory_space<vmem>>, %arg16: memref<257x1xf32, #tpu.memory_space<vmem>>, %arg17: memref<64x16xf32, #tpu.memory_space<vmem>>, %arg18: memref<64x1xf32, #tpu.memory_space<vmem>>, %arg19: memref<256x64xbf16, #tpu.memory_space<vmem>>, %arg20: memref<64x16xbf16, #tpu.memory_space<vmem>>, %arg21: memref<16x64xbf16, #tpu.memory_space<vmem>>, %arg22: memref<64x256xbf16, #tpu.memory_space<vmem>>, %arg23: memref<2x256xf32, #tpu.memory_space<vmem>>, %arg24: memref<16x16xf32, #tpu.memory_space<vmem>>, %arg25: memref<16x16xf32, #tpu.memory_space<vmem>>, %arg26: memref<16x16xf32, #tpu.memory_space<vmem>>, %arg27: memref<4x16xf32, #tpu.memory_space<vmem>>, %arg28: memref<4x16xf32, #tpu.memory_space<vmem>>, %arg29: memref<1x512xf32, #tpu.memory_space<vmem>>, %arg30: memref<1x32xf32, #tpu.memory_space<vmem>>, %arg31: memref<256x512xf32, #tpu.memory_space<any>>, %arg32: memref<512x32xf32, #tpu.memory_space<any>>, %arg33: memref<8x256xf32, #tpu.memory_space<vmem>>, %arg34: memref<4x128xf32, #tpu.memory_space<vmem>>, %arg35: memref<256x512xf32, #tpu.memory_space<vmem>>, %arg36: memref<512x32xf32, #tpu.memory_space<vmem>>, %arg37: memref<2x!tpu.dma_semaphore, #tpu.memory_space<semaphore_mem>>) attributes {dimension_semantics = [], scalar_prefetch = 0 : i64, scratch_operands = 3 : i64, tpu.core_type = #tpu.core_type<tc>} {
    %c0_i32 = arith.constant 0 : i32
    %0 = tpu.memref_slice %arg37[%c0_i32] : memref<2x!tpu.dma_semaphore, #tpu.memory_space<semaphore_mem>> -> memref<1x!tpu.dma_semaphore, #tpu.memory_space<semaphore_mem>>
    %1 = tpu.memref_squeeze %0 : memref<1x!tpu.dma_semaphore, #tpu.memory_space<semaphore_mem>> -> memref<!tpu.dma_semaphore, #tpu.memory_space<semaphore_mem>>
    tpu.enqueue_dma source(%arg31 : memref<256x512xf32, #tpu.memory_space<any>>) target(%arg35 : memref<256x512xf32, #tpu.memory_space<vmem>>) target_semaphore(%1 : memref<!tpu.dma_semaphore, #tpu.memory_space<semaphore_mem>>)
    %c1_i32 = arith.constant 1 : i32
    %2 = tpu.memref_slice %arg37[%c1_i32] : memref<2x!tpu.dma_semaphore, #tpu.memory_space<semaphore_mem>> -> memref<1x!tpu.dma_semaphore, #tpu.memory_space<semaphore_mem>>
    %3 = tpu.memref_squeeze %2 : memref<1x!tpu.dma_semaphore, #tpu.memory_space<semaphore_mem>> -> memref<!tpu.dma_semaphore, #tpu.memory_space<semaphore_mem>>
    tpu.enqueue_dma source(%arg32 : memref<512x32xf32, #tpu.memory_space<any>>) target(%arg36 : memref<512x32xf32, #tpu.memory_space<vmem>>) target_semaphore(%3 : memref<!tpu.dma_semaphore, #tpu.memory_space<semaphore_mem>>)
    %c0 = arith.constant 0 : index
    %c0_0 = arith.constant 0 : index
    %4 = vector.load %arg0[%c0, %c0_0] : memref<3x256xf32, #tpu.memory_space<vmem>>, vector<3x256xf32>
    %c0_1 = arith.constant 0 : index
    %c0_2 = arith.constant 0 : index
    %5 = vector.load %arg1[%c0_1, %c0_2] : memref<8x3xf32, #tpu.memory_space<vmem>>, vector<8x3xf32>
    %cst = arith.constant dense<0.000000e+00> : vector<8x256xf32>
    %6 = tpu.matmul %5, %4, %cst {dimension_numbers = #tpu.dot_dimension_numbers<[1], [0], [0], [1], [0, 0, 1, 1], [], []>} : vector<8x3xf32>, vector<3x256xf32>, vector<8x256xf32> -> vector<8x256xf32>
    %c0_3 = arith.constant 0 : index
    %c0_4 = arith.constant 0 : index
    %7 = vector.load %arg2[%c0_3, %c0_4] : memref<8x1xf32, #tpu.memory_space<vmem>>, vector<8x1xf32>
    %8 = vector.broadcast %7 : vector<8x1xf32> to vector<8x256xf32>
    %9 = arith.addf %6, %8 : vector<8x256xf32>
    %cst_5 = arith.constant 0.000000e+00 : f32
    %10 = vector.broadcast %cst_5 : f32 to vector<8x256xf32>
    %11 = arith.maximumf %9, %10 : vector<8x256xf32>
    %c0_6 = arith.constant 0 : index
    %c0_7 = arith.constant 0 : index
    %12 = vector.load %arg19[%c0_6, %c0_7] : memref<256x64xbf16, #tpu.memory_space<vmem>>, vector<256x64xbf16>
    %13 = arith.extf %12 : vector<256x64xbf16> to vector<256x64xf32>
    %cst_8 = arith.constant dense<0.000000e+00> : vector<8x64xf32>
    %14 = tpu.matmul %11, %13, %cst_8 {dimension_numbers = #tpu.dot_dimension_numbers<[1], [0], [0], [1], [0, 0, 1, 1], [], []>} : vector<8x256xf32>, vector<256x64xf32>, vector<8x64xf32> -> vector<8x64xf32>
    %c0_9 = arith.constant 0 : index
    %c0_10 = arith.constant 0 : index
    %15 = vector.load %arg3[%c0_9, %c0_10] : memref<16x8xf32, #tpu.memory_space<vmem>>, vector<16x8xf32>
    %cst_11 = arith.constant dense<0.000000e+00> : vector<16x64xf32>
    %16 = tpu.matmul %15, %14, %cst_11 {dimension_numbers = #tpu.dot_dimension_numbers<[1], [0], [0], [1], [0, 0, 1, 1], [], []>} : vector<16x8xf32>, vector<8x64xf32>, vector<16x64xf32> -> vector<16x64xf32>
    %c0_12 = arith.constant 0 : index
    %c0_13 = arith.constant 0 : index
    %17 = vector.load %arg4[%c0_12, %c0_13] : memref<16x1xf32, #tpu.memory_space<vmem>>, vector<16x1xf32>
    %18 = vector.broadcast %17 : vector<16x1xf32> to vector<16x64xf32>
    %19 = arith.addf %16, %18 : vector<16x64xf32>
    %cst_14 = arith.constant 0.000000e+00 : f32
    %20 = vector.broadcast %cst_14 : f32 to vector<16x64xf32>
    %21 = arith.maximumf %19, %20 : vector<16x64xf32>
    %c0_15 = arith.constant 0 : index
    %c0_16 = arith.constant 0 : index
    %22 = vector.load %arg20[%c0_15, %c0_16] : memref<64x16xbf16, #tpu.memory_space<vmem>>, vector<64x16xbf16>
    %23 = arith.extf %22 : vector<64x16xbf16> to vector<64x16xf32>
    %cst_17 = arith.constant dense<0.000000e+00> : vector<16x16xf32>
    %24 = tpu.matmul %21, %23, %cst_17 {dimension_numbers = #tpu.dot_dimension_numbers<[1], [0], [0], [1], [0, 0, 1, 1], [], []>} : vector<16x64xf32>, vector<64x16xf32>, vector<16x16xf32> -> vector<16x16xf32>
    %c0_18 = arith.constant 0 : index
    %c0_19 = arith.constant 0 : index
    %25 = vector.load %arg5[%c0_18, %c0_19] : memref<32x16xf32, #tpu.memory_space<vmem>>, vector<32x16xf32>
    %cst_20 = arith.constant dense<0.000000e+00> : vector<32x16xf32>
    %26 = tpu.matmul %25, %24, %cst_20 {dimension_numbers = #tpu.dot_dimension_numbers<[1], [0], [0], [1], [0, 0, 1, 1], [], []>} : vector<32x16xf32>, vector<16x16xf32>, vector<32x16xf32> -> vector<32x16xf32>
    %c0_21 = arith.constant 0 : index
    %c0_22 = arith.constant 0 : index
    %27 = vector.load %arg6[%c0_21, %c0_22] : memref<32x1xf32, #tpu.memory_space<vmem>>, vector<32x1xf32>
    %28 = vector.broadcast %27 : vector<32x1xf32> to vector<32x16xf32>
    %29 = arith.addf %26, %28 : vector<32x16xf32>
    %cst_23 = arith.constant 0.000000e+00 : f32
    %30 = vector.broadcast %cst_23 : f32 to vector<32x16xf32>
    %31 = arith.maximumf %29, %30 : vector<32x16xf32>
    %c0_24 = arith.constant 0 : index
    %c0_25 = arith.constant 0 : index
    %32 = vector.load %arg11[%c0_24, %c0_25] : memref<16x32xf32, #tpu.memory_space<vmem>>, vector<16x32xf32>
    %cst_26 = arith.constant dense<0.000000e+00> : vector<16x16xf32>
    %33 = tpu.matmul %32, %31, %cst_26 {dimension_numbers = #tpu.dot_dimension_numbers<[1], [0], [0], [1], [0, 0, 1, 1], [], []>} : vector<16x32xf32>, vector<32x16xf32>, vector<16x16xf32> -> vector<16x16xf32>
    %c0_27 = arith.constant 0 : index
    %c0_28 = arith.constant 0 : index
    %34 = vector.load %arg12[%c0_27, %c0_28] : memref<16x1xf32, #tpu.memory_space<vmem>>, vector<16x1xf32>
    %35 = vector.broadcast %34 : vector<16x1xf32> to vector<16x16xf32>
    %36 = arith.addf %33, %35 : vector<16x16xf32>
    %c0_29 = arith.constant 0 : index
    %c0_30 = arith.constant 0 : index
    %37 = vector.load %arg9[%c0_29, %c0_30] : memref<16x16xf32, #tpu.memory_space<vmem>>, vector<16x16xf32>
    %cst_31 = arith.constant dense<0.000000e+00> : vector<16x64xf32>
    %38 = tpu.matmul %37, %21, %cst_31 {dimension_numbers = #tpu.dot_dimension_numbers<[1], [0], [0], [1], [0, 0, 1, 1], [], []>} : vector<16x16xf32>, vector<16x64xf32>, vector<16x64xf32> -> vector<16x64xf32>
    %c0_32 = arith.constant 0 : index
    %c0_33 = arith.constant 0 : index
    %39 = vector.load %arg10[%c0_32, %c0_33] : memref<16x1xf32, #tpu.memory_space<vmem>>, vector<16x1xf32>
    %40 = vector.broadcast %39 : vector<16x1xf32> to vector<16x64xf32>
    %41 = arith.addf %38, %40 : vector<16x64xf32>
    %c0_34 = arith.constant 0 : index
    %c0_35 = arith.constant 0 : index
    %42 = vector.load %arg21[%c0_34, %c0_35] : memref<16x64xbf16, #tpu.memory_space<vmem>>, vector<16x64xbf16>
    %43 = arith.extf %42 : vector<16x64xbf16> to vector<16x64xf32>
    %cst_36 = arith.constant dense<0.000000e+00> : vector<16x64xf32>
    %44 = tpu.matmul %36, %43, %cst_36 {dimension_numbers = #tpu.dot_dimension_numbers<[1], [0], [0], [1], [0, 0, 1, 1], [], []>} : vector<16x16xf32>, vector<16x64xf32>, vector<16x64xf32> -> vector<16x64xf32>
    %45 = arith.addf %41, %44 : vector<16x64xf32>
    %c0_37 = arith.constant 0 : index
    %c0_38 = arith.constant 0 : index
    %46 = vector.load %arg7[%c0_37, %c0_38] : memref<16x8xf32, #tpu.memory_space<vmem>>, vector<16x8xf32>
    %cst_39 = arith.constant dense<0.000000e+00> : vector<16x256xf32>
    %47 = tpu.matmul %46, %11, %cst_39 {dimension_numbers = #tpu.dot_dimension_numbers<[1], [0], [0], [1], [0, 0, 1, 1], [], []>} : vector<16x8xf32>, vector<8x256xf32>, vector<16x256xf32> -> vector<16x256xf32>
    %c0_40 = arith.constant 0 : index
    %c0_41 = arith.constant 0 : index
    %48 = vector.load %arg8[%c0_40, %c0_41] : memref<16x1xf32, #tpu.memory_space<vmem>>, vector<16x1xf32>
    %49 = vector.broadcast %48 : vector<16x1xf32> to vector<16x256xf32>
    %50 = arith.addf %47, %49 : vector<16x256xf32>
    %c0_42 = arith.constant 0 : index
    %c0_43 = arith.constant 0 : index
    %51 = vector.load %arg22[%c0_42, %c0_43] : memref<64x256xbf16, #tpu.memory_space<vmem>>, vector<64x256xbf16>
    %52 = arith.extf %51 : vector<64x256xbf16> to vector<64x256xf32>
    %cst_44 = arith.constant dense<0.000000e+00> : vector<16x256xf32>
    %53 = tpu.matmul %45, %52, %cst_44 {dimension_numbers = #tpu.dot_dimension_numbers<[1], [0], [0], [1], [0, 0, 1, 1], [], []>} : vector<16x64xf32>, vector<64x256xf32>, vector<16x256xf32> -> vector<16x256xf32>
    %54 = arith.addf %50, %53 : vector<16x256xf32>
    %c0_45 = arith.constant 0 : index
    %c0_46 = arith.constant 0 : index
    %55 = vector.load %arg13[%c0_45, %c0_46] : memref<32x16xf32, #tpu.memory_space<vmem>>, vector<32x16xf32>
    %cst_47 = arith.constant dense<0.000000e+00> : vector<32x16xf32>
    %56 = tpu.matmul %55, %36, %cst_47 {dimension_numbers = #tpu.dot_dimension_numbers<[1], [0], [0], [1], [0, 0, 1, 1], [], []>} : vector<32x16xf32>, vector<16x16xf32>, vector<32x16xf32> -> vector<32x16xf32>
    %c0_48 = arith.constant 0 : index
    %c0_49 = arith.constant 0 : index
    %57 = vector.load %arg14[%c0_48, %c0_49] : memref<32x1xf32, #tpu.memory_space<vmem>>, vector<32x1xf32>
    %58 = vector.broadcast %57 : vector<32x1xf32> to vector<32x16xf32>
    %59 = arith.addf %56, %58 : vector<32x16xf32>
    %cst_50 = arith.constant 0.000000e+00 : f32
    %60 = vector.broadcast %cst_50 : f32 to vector<32x16xf32>
    %61 = arith.maximumf %59, %60 : vector<32x16xf32>
    %c0_51 = arith.constant 0 : index
    %c0_52 = arith.constant 0 : index
    %62 = vector.load %arg15[%c0_51, %c0_52] : memref<257x32xf32, #tpu.memory_space<vmem>>, vector<257x32xf32>
    %cst_53 = arith.constant dense<0.000000e+00> : vector<257x16xf32>
    %63 = tpu.matmul %62, %61, %cst_53 {dimension_numbers = #tpu.dot_dimension_numbers<[1], [0], [0], [1], [0, 0, 1, 1], [], []>} : vector<257x32xf32>, vector<32x16xf32>, vector<257x16xf32> -> vector<257x16xf32>
    %c0_54 = arith.constant 0 : index
    %c0_55 = arith.constant 0 : index
    %64 = vector.load %arg16[%c0_54, %c0_55] : memref<257x1xf32, #tpu.memory_space<vmem>>, vector<257x1xf32>
    %65 = vector.broadcast %64 : vector<257x1xf32> to vector<257x16xf32>
    %66 = arith.addf %63, %65 : vector<257x16xf32>
    %67 = vector.extract_strided_slice %66 {offsets = [0, 0], sizes = [256, 16], strides = [1, 1]} : vector<257x16xf32> to vector<256x16xf32>
    %68 = vector.extract_strided_slice %66 {offsets = [256, 0], sizes = [1, 16], strides = [1, 1]} : vector<257x16xf32> to vector<1x16xf32>
    %69 = arith.negf %68 : vector<1x16xf32>
    %70 = math.exp %69 : vector<1x16xf32>
    %cst_56 = arith.constant 1.000000e+00 : f32
    %71 = vector.broadcast %cst_56 : f32 to vector<1x16xf32>
    %72 = arith.addf %71, %70 : vector<1x16xf32>
    %73 = arith.divf %71, %72 : vector<1x16xf32>
    %cst_57 = arith.constant 9.99999974E-5 : f32
    %cst_58 = arith.constant 0.999899983 : f32
    %74 = vector.broadcast %cst_57 : f32 to vector<1x16xf32>
    %75 = arith.maximumf %74, %73 : vector<1x16xf32>
    %76 = vector.broadcast %cst_58 : f32 to vector<1x16xf32>
    %77 = arith.minimumf %76, %75 : vector<1x16xf32>
    %c0_59 = arith.constant 0 : index
    %c0_60 = arith.constant 0 : index
    %78 = vector.load %arg24[%c0_59, %c0_60] : memref<16x16xf32, #tpu.memory_space<vmem>>, vector<16x16xf32>
    %cst_61 = arith.constant 0.000000e+00 : f32
    %79 = vector.broadcast %cst_61 : f32 to vector<16x16xf32>
    %80 = arith.cmpf one, %78, %79 : vector<16x16xf32>
    %c0_62 = arith.constant 0 : index
    %c0_63 = arith.constant 0 : index
    %81 = vector.load %arg25[%c0_62, %c0_63] : memref<16x16xf32, #tpu.memory_space<vmem>>, vector<16x16xf32>
    %cst_64 = arith.constant 0.000000e+00 : f32
    %82 = vector.broadcast %cst_64 : f32 to vector<16x16xf32>
    %83 = arith.cmpf one, %81, %82 : vector<16x16xf32>
    %c0_65 = arith.constant 0 : index
    %c0_66 = arith.constant 0 : index
    %84 = vector.load %arg26[%c0_65, %c0_66] : memref<16x16xf32, #tpu.memory_space<vmem>>, vector<16x16xf32>
    %cst_67 = arith.constant 0.000000e+00 : f32
    %85 = vector.broadcast %cst_67 : f32 to vector<16x16xf32>
    %86 = arith.cmpf one, %84, %85 : vector<16x16xf32>
    %cst_68 = arith.constant -1.000000e+00 : f32
    %87 = vector.shape_cast %77 : vector<1x16xf32> to vector<1x16xf32>
    %88 = vector.broadcast %87 : vector<1x16xf32> to vector<16x16xf32>
    %89 = vector.broadcast %cst_68 : f32 to vector<16x16xf32>
    %90 = arith.select %80, %88, %89 : vector<16x16xi1>, vector<16x16xf32>
    %cst_69 = arith.constant dense<0xFF800000> : vector<16xf32>
    %91 = vector.multi_reduction <maximumf>, %90, %cst_69 [1] : vector<16x16xf32> to vector<16xf32>
    %92 = vector.shape_cast %91 : vector<16xf32> to vector<16x1xf32>
    %cst_70 = arith.constant -1.000000e+00 : f32
    %93 = vector.shape_cast %77 : vector<1x16xf32> to vector<1x16xf32>
    %94 = vector.broadcast %93 : vector<1x16xf32> to vector<16x16xf32>
    %95 = vector.broadcast %cst_70 : f32 to vector<16x16xf32>
    %96 = arith.select %83, %94, %95 : vector<16x16xi1>, vector<16x16xf32>
    %cst_71 = arith.constant dense<0xFF800000> : vector<16xf32>
    %97 = vector.multi_reduction <maximumf>, %96, %cst_71 [1] : vector<16x16xf32> to vector<16xf32>
    %98 = vector.shape_cast %97 : vector<16xf32> to vector<16x1xf32>
    %99 = arith.cmpf oeq, %98, %92 : vector<16x1xf32>
    %100 = arith.extui %99 : vector<16x1xi1> to vector<16x1xi32>
    %101 = arith.sitofp %100 : vector<16x1xi32> to vector<16x1xf32>
    %102 = arith.mulf %92, %101 : vector<16x1xf32>
    %cst_72 = arith.constant -1.000000e+00 : f32
    %103 = vector.shape_cast %102 : vector<16x1xf32> to vector<16x1xf32>
    %104 = vector.broadcast %103 : vector<16x1xf32> to vector<16x16xf32>
    %105 = vector.broadcast %cst_72 : f32 to vector<16x16xf32>
    %106 = arith.select %80, %104, %105 : vector<16x16xi1>, vector<16x16xf32>
    %cst_73 = arith.constant dense<0xFF800000> : vector<16xf32>
    %107 = vector.multi_reduction <maximumf>, %106, %cst_73 [0] : vector<16x16xf32> to vector<16xf32>
    %108 = vector.shape_cast %107 : vector<16xf32> to vector<1x16xf32>
    %109 = vector.broadcast %102 : vector<16x1xf32> to vector<16x16xf32>
    %110 = vector.broadcast %108 : vector<1x16xf32> to vector<16x16xf32>
    %111 = arith.cmpf ogt, %109, %110 : vector<16x16xf32>
    %112 = vector.broadcast %102 : vector<16x1xf32> to vector<16x16xf32>
    %113 = vector.broadcast %108 : vector<1x16xf32> to vector<16x16xf32>
    %114 = arith.cmpf oeq, %112, %113 : vector<16x16xf32>
    %115 = arith.andi %114, %86 : vector<16x16xi1>
    %116 = arith.ori %111, %115 : vector<16x16xi1>
    %cst_74 = arith.constant 1.000000e+00 : f32
    %cst_75 = arith.constant 0.000000e+00 : f32
    %117 = vector.broadcast %cst_74 : f32 to vector<16x16xf32>
    %118 = vector.broadcast %cst_75 : f32 to vector<16x16xf32>
    %119 = arith.select %116, %117, %118 : vector<16x16xi1>, vector<16x16xf32>
    %cst_76 = arith.constant dense<0.000000e+00> : vector<16xf32>
    %120 = vector.multi_reduction <add>, %119, %cst_76 [0] : vector<16x16xf32> to vector<16xf32>
    %121 = vector.shape_cast %120 : vector<16xf32> to vector<1x16xf32>
    %c0_77 = arith.constant 0 : index
    %c0_78 = arith.constant 0 : index
    %122 = vector.load %arg27[%c0_77, %c0_78] : memref<4x16xf32, #tpu.memory_space<vmem>>, vector<4x16xf32>
    %123 = vector.broadcast %121 : vector<1x16xf32> to vector<4x16xf32>
    %124 = arith.cmpf oeq, %123, %122 : vector<4x16xf32>
    %125 = arith.extui %124 : vector<4x16xi1> to vector<4x16xi32>
    %126 = arith.sitofp %125 : vector<4x16xi32> to vector<4x16xf32>
    %cst_79 = arith.constant 0.000000e+00 : f32
    %127 = vector.shape_cast %108 : vector<1x16xf32> to vector<1x16xf32>
    %128 = vector.broadcast %127 : vector<1x16xf32> to vector<4x16xf32>
    %129 = vector.broadcast %cst_79 : f32 to vector<4x16xf32>
    %130 = arith.select %124, %128, %129 : vector<4x16xi1>, vector<4x16xf32>
    %cst_80 = arith.constant dense<0.000000e+00> : vector<4xf32>
    %131 = vector.multi_reduction <add>, %130, %cst_80 [1] : vector<4x16xf32> to vector<4xf32>
    %132 = vector.shape_cast %131 : vector<4xf32> to vector<4x1xf32>
    %c0_81 = arith.constant 0 : index
    %c0_82 = arith.constant 0 : index
    %133 = vector.load %arg28[%c0_81, %c0_82] : memref<4x16xf32, #tpu.memory_space<vmem>>, vector<4x16xf32>
    %cst_83 = arith.constant 0.000000e+00 : f32
    %134 = vector.broadcast %cst_83 : f32 to vector<4x16xf32>
    %135 = arith.select %124, %133, %134 : vector<4x16xi1>, vector<4x16xf32>
    %cst_84 = arith.constant dense<0.000000e+00> : vector<4xf32>
    %136 = vector.multi_reduction <add>, %135, %cst_84 [1] : vector<4x16xf32> to vector<4xf32>
    %137 = vector.shape_cast %136 : vector<4xf32> to vector<4x1xf32>
    %cst_85 = arith.constant dense<0.000000e+00> : vector<4x256xf32>
    %138 = tpu.matmul %126, %67, %cst_85 {dimension_numbers = #tpu.dot_dimension_numbers<[1], [1], [0], [0], [0, 0, 1, 0], [], []>} : vector<4x16xf32>, vector<256x16xf32>, vector<4x256xf32> -> vector<4x256xf32>
    %139 = vector.extract_strided_slice %138 {offsets = [0, 0], sizes = [4, 128], strides = [1, 1]} : vector<4x256xf32> to vector<4x128xf32>
    %140 = vector.extract_strided_slice %138 {offsets = [0, 128], sizes = [4, 128], strides = [1, 1]} : vector<4x256xf32> to vector<4x128xf32>
    %141 = tpu.concatenate %139, %140 in 0 : vector<4x128xf32>, vector<4x128xf32> -> vector<8x128xf32>
    %142 = vector.extract_strided_slice %141 {offsets = [0, 0], sizes = [8, 64], strides = [1, 1]} : vector<8x128xf32> to vector<8x64xf32>
    %143 = vector.extract_strided_slice %141 {offsets = [0, 64], sizes = [8, 1], strides = [1, 1]} : vector<8x128xf32> to vector<8x1xf32>
    %144 = vector.extract_strided_slice %141 {offsets = [0, 65], sizes = [8, 1], strides = [1, 1]} : vector<8x128xf32> to vector<8x1xf32>
    %145 = vector.extract_strided_slice %141 {offsets = [0, 66], sizes = [8, 1], strides = [1, 1]} : vector<8x128xf32> to vector<8x1xf32>
    %c0_86 = arith.constant 0 : index
    %c0_87 = arith.constant 0 : index
    %146 = vector.load %arg17[%c0_86, %c0_87] : memref<64x16xf32, #tpu.memory_space<vmem>>, vector<64x16xf32>
    %cst_88 = arith.constant dense<0.000000e+00> : vector<64x256xf32>
    %147 = tpu.matmul %146, %54, %cst_88 {dimension_numbers = #tpu.dot_dimension_numbers<[1], [0], [0], [1], [0, 0, 1, 1], [], []>} : vector<64x16xf32>, vector<16x256xf32>, vector<64x256xf32> -> vector<64x256xf32>
    %c0_89 = arith.constant 0 : index
    %c0_90 = arith.constant 0 : index
    %148 = vector.load %arg18[%c0_89, %c0_90] : memref<64x1xf32, #tpu.memory_space<vmem>>, vector<64x1xf32>
    %149 = vector.broadcast %148 : vector<64x1xf32> to vector<64x256xf32>
    %150 = arith.addf %147, %149 : vector<64x256xf32>
    %cst_91 = arith.constant 0.000000e+00 : f32
    %151 = vector.broadcast %cst_91 : f32 to vector<64x256xf32>
    %152 = arith.maximumf %150, %151 : vector<64x256xf32>
    %c0_92 = arith.constant 0 : index
    %c0_93 = arith.constant 0 : index
    %153 = vector.load %arg23[%c0_92, %c0_93] : memref<2x256xf32, #tpu.memory_space<vmem>>, vector<2x256xf32>
    %cst_94 = arith.constant dense<0.000000e+00> : vector<8x256xf32>
    %154 = tpu.matmul %142, %152, %cst_94 {dimension_numbers = #tpu.dot_dimension_numbers<[1], [0], [0], [1], [0, 0, 1, 1], [], []>} : vector<8x64xf32>, vector<64x256xf32>, vector<8x256xf32> -> vector<8x256xf32>
    %155 = vector.extract_strided_slice %153 {offsets = [0, 0], sizes = [1, 256], strides = [1, 1]} : vector<2x256xf32> to vector<1x256xf32>
    %156 = vector.broadcast %143 : vector<8x1xf32> to vector<8x256xf32>
    %157 = vector.broadcast %155 : vector<1x256xf32> to vector<8x256xf32>
    %158 = arith.mulf %156, %157 : vector<8x256xf32>
    %159 = arith.addf %154, %158 : vector<8x256xf32>
    %160 = vector.extract_strided_slice %153 {offsets = [1, 0], sizes = [1, 256], strides = [1, 1]} : vector<2x256xf32> to vector<1x256xf32>
    %161 = vector.broadcast %144 : vector<8x1xf32> to vector<8x256xf32>
    %162 = vector.broadcast %160 : vector<1x256xf32> to vector<8x256xf32>
    %163 = arith.mulf %161, %162 : vector<8x256xf32>
    %164 = arith.addf %159, %163 : vector<8x256xf32>
    %165 = vector.broadcast %145 : vector<8x1xf32> to vector<8x256xf32>
    %166 = arith.addf %164, %165 : vector<8x256xf32>
    %c0_95 = arith.constant 0 : index
    %c0_96 = arith.constant 0 : index
    %167 = vector.load %arg33[%c0_95, %c0_96] : memref<8x256xf32, #tpu.memory_space<vmem>>, vector<8x256xf32>
    tpu.vector_store %arg33[%c0_95, %c0_96], %166 {strides = array<i32>} : memref<8x256xf32, #tpu.memory_space<vmem>>, vector<8x256xf32>,
    %c0_i32_97 = arith.constant 0 : i32
    %168 = tpu.memref_slice %arg37[%c0_i32_97] : memref<2x!tpu.dma_semaphore, #tpu.memory_space<semaphore_mem>> -> memref<1x!tpu.dma_semaphore, #tpu.memory_space<semaphore_mem>>
    %169 = tpu.memref_squeeze %168 : memref<1x!tpu.dma_semaphore, #tpu.memory_space<semaphore_mem>> -> memref<!tpu.dma_semaphore, #tpu.memory_space<semaphore_mem>>
    tpu.wait_dma2 semaphore(%169 : memref<!tpu.dma_semaphore, #tpu.memory_space<semaphore_mem>>) src(%arg31 : memref<256x512xf32, #tpu.memory_space<any>>) dst(%arg35 : memref<256x512xf32, #tpu.memory_space<vmem>>)
    %c1_i32_98 = arith.constant 1 : i32
    %170 = tpu.memref_slice %arg37[%c1_i32_98] : memref<2x!tpu.dma_semaphore, #tpu.memory_space<semaphore_mem>> -> memref<1x!tpu.dma_semaphore, #tpu.memory_space<semaphore_mem>>
    %171 = tpu.memref_squeeze %170 : memref<1x!tpu.dma_semaphore, #tpu.memory_space<semaphore_mem>> -> memref<!tpu.dma_semaphore, #tpu.memory_space<semaphore_mem>>
    tpu.wait_dma2 semaphore(%171 : memref<!tpu.dma_semaphore, #tpu.memory_space<semaphore_mem>>) src(%arg32 : memref<512x32xf32, #tpu.memory_space<any>>) dst(%arg36 : memref<512x32xf32, #tpu.memory_space<vmem>>)
    %172 = vector.extract_strided_slice %166 {offsets = [0, 0], sizes = [4, 256], strides = [1, 1]} : vector<8x256xf32> to vector<4x256xf32>
    %c0_99 = arith.constant 0 : index
    %c0_100 = arith.constant 0 : index
    %173 = vector.load %arg35[%c0_99, %c0_100] : memref<256x512xf32, #tpu.memory_space<vmem>>, vector<256x512xf32>
    %cst_101 = arith.constant dense<0.000000e+00> : vector<4x512xf32>
    %174 = tpu.matmul %172, %173, %cst_101 {dimension_numbers = #tpu.dot_dimension_numbers<[1], [0], [0], [1], [0, 0, 1, 1], [], []>} : vector<4x256xf32>, vector<256x512xf32>, vector<4x512xf32> -> vector<4x512xf32>
    %c0_102 = arith.constant 0 : index
    %c0_103 = arith.constant 0 : index
    %175 = vector.load %arg29[%c0_102, %c0_103] : memref<1x512xf32, #tpu.memory_space<vmem>>, vector<1x512xf32>
    %176 = vector.broadcast %175 : vector<1x512xf32> to vector<4x512xf32>
    %177 = arith.addf %174, %176 : vector<4x512xf32>
    %cst_104 = arith.constant 0.000000e+00 : f32
    %178 = vector.broadcast %cst_104 : f32 to vector<4x512xf32>
    %179 = arith.maximumf %177, %178 : vector<4x512xf32>
    %c0_105 = arith.constant 0 : index
    %c0_106 = arith.constant 0 : index
    %180 = vector.load %arg36[%c0_105, %c0_106] : memref<512x32xf32, #tpu.memory_space<vmem>>, vector<512x32xf32>
    %cst_107 = arith.constant dense<0.000000e+00> : vector<4x32xf32>
    %181 = tpu.matmul %179, %180, %cst_107 {dimension_numbers = #tpu.dot_dimension_numbers<[1], [0], [0], [1], [0, 0, 1, 1], [], []>} : vector<4x512xf32>, vector<512x32xf32>, vector<4x32xf32> -> vector<4x32xf32>
    %c0_108 = arith.constant 0 : index
    %c0_109 = arith.constant 0 : index
    %182 = vector.load %arg30[%c0_108, %c0_109] : memref<1x32xf32, #tpu.memory_space<vmem>>, vector<1x32xf32>
    %183 = vector.broadcast %182 : vector<1x32xf32> to vector<4x32xf32>
    %184 = arith.addf %181, %183 : vector<4x32xf32>
    %cst_110 = arith.constant 0.000000e+00 : f32
    %185 = vector.broadcast %cst_110 : f32 to vector<4x128xf32>
    %c0_111 = arith.constant 0 : index
    %c0_112 = arith.constant 0 : index
    %186 = vector.load %arg34[%c0_111, %c0_112] : memref<4x128xf32, #tpu.memory_space<vmem>>, vector<4x128xf32>
    tpu.vector_store %arg34[%c0_111, %c0_112], %185 {strides = array<i32>} : memref<4x128xf32, #tpu.memory_space<vmem>>, vector<4x128xf32>,
    %c0_113 = arith.constant 0 : index
    %c0_114 = arith.constant 0 : index
    %187 = vector.load %arg34[%c0_113, %c0_114] : memref<4x128xf32, #tpu.memory_space<vmem>>, vector<4x32xf32>
    tpu.vector_store %arg34[%c0_113, %c0_114], %184 {strides = array<i32>} : memref<4x128xf32, #tpu.memory_space<vmem>>, vector<4x32xf32>,
    %c0_115 = arith.constant 0 : index
    %c32 = arith.constant 32 : index
    %188 = vector.load %arg34[%c0_115, %c32] : memref<4x128xf32, #tpu.memory_space<vmem>>, vector<4x1xf32>
    tpu.vector_store %arg34[%c0_115, %c32], %132 {strides = array<i32>} : memref<4x128xf32, #tpu.memory_space<vmem>>, vector<4x1xf32>,
    %c0_116 = arith.constant 0 : index
    %c33 = arith.constant 33 : index
    %189 = vector.load %arg34[%c0_116, %c33] : memref<4x128xf32, #tpu.memory_space<vmem>>, vector<4x1xf32>
    tpu.vector_store %arg34[%c0_116, %c33], %137 {strides = array<i32>} : memref<4x128xf32, #tpu.memory_space<vmem>>, vector<4x1xf32>,
    return
  }
}

</mosaic_0001>

<llo_original>
// kernel: squeeze.3
$region0: #{squeeze.3}
  %s0 = inlined_call_operand.vmem [shape: f32[1,3,16,16], index: 0, kind: input, shape index: {}]
  %s1 = inlined_call_operand.vmem [shape: f32[3,256], index: 1, kind: output, shape index: {}]
  $region1: #{squeeze.3} parent=0
    #allocation0 [shape = 'u8[8192]{0}', space=vmem, size = 0x2000, scoped, tag = 'scoped mem for output reshape']
    %v2 = vld [vmem:[%s0] ss:$8 sm:$0xf]
    %s3 = smov 48
    %v4 = vld [vmem:[%s0] ss:$8 sm:%s3]
    %vm5 = vcmask 1045508
    %v6 = vsel %vm5, %v4, %v2
    %vm7 = vcmask 130048
    %8 = vst.msk [vmem:[#allocation0] ss:$8 sm:$0x3] %vm7, %v6
    %s9 = scalar_lea.vmem [#allocation0], 4294967281
    %10 = vst.msk [vmem:[%s9] ss:$8 sm:$0xc] %vm7, %v6
    %s11 = scalar_lea.vmem [#allocation0], 4294967266
    %12 = vst.msk [vmem:[%s11] ss:$8 sm:$0x30] %vm7, %v6
    %s13 = scalar_lea.vmem %s0, 7
    %s14 = smov 3
    %v15 = vld [vmem:[%s13] ss:$16 sm:%s14]
    %s16 = scalar_lea.vmem %s0, 87
    %s17 = smov 12
    %v18 = vld [vmem:[%s16] ss:$-24 sm:%s17]
    %vm19 = vcmask 1043458
    %v20 = vsel %vm19, %v18, %v15
    %s21 = scalar_lea.vmem %s0, 4294967263
    %s22 = smov 48
    %v23 = vld [vmem:[%s21] ss:$16 sm:%s22]
    %vm24 = vcmask 1045508
    %v25 = vsel %vm24, %v23, %v20
    %26 = vrot.lane.b32.xlu0 %v25, 112
    %v27 = vpop.permute.xlu0 %26
    %vm28 = vcmask 1048448
    %29 = vst.msk [vmem:[#allocation0] sm:$0x7] %vm28, %v27
    %s30 = scalar_lea.vmem [#allocation0], 5
    %31 = vst.msk [vmem:[%s30] sm:$0x38] %vm28, %v27
    %s32 = scalar_lea.vmem %s0, 6
    %s33 = smov 3
    %v34 = vld [vmem:[%s32] ss:$16 sm:%s33]
    %s35 = scalar_lea.vmem %s0, 86
    %s36 = smov 12
    %v37 = vld [vmem:[%s35] ss:$-24 sm:%s36]
    %vm38 = vcmask 1043458
    %v39 = vsel %vm38, %v37, %v34
    %s40 = scalar_lea.vmem %s0, 4294967262
    %s41 = smov 48
    %v42 = vld [vmem:[%s40] ss:$16 sm:%s41]
    %vm43 = vcmask 1045508
    %v44 = vsel %vm43, %v42, %v39
    %45 = vrot.lane.b32.xlu0 %v44, 96
    %v46 = vpop.permute.xlu0 %45
    %vm47 = vcmask 917248
    %48 = vst.msk [vmem:[#allocation0] sm:$0x7] %vm47, %v46
    %s49 = scalar_lea.vmem [#allocation0], 5
    %50 = vst.msk [vmem:[%s49] sm:$0x38] %vm47, %v46
    %s51 = scalar_lea.vmem %s0, 5
    %s52 = smov 3
    %v53 = vld [vmem:[%s51] ss:$16 sm:%s52]
    %s54 = scalar_lea.vmem %s0, 85
    %s55 = smov 12
    %v56 = vld [vmem:[%s54] ss:$-24 sm:%s55]
    %vm57 = vcmask 1043458
    %v58 = vsel %vm57, %v56, %v53
    %s59 = scalar_lea.vmem %s0, 4294967261
    %s60 = smov 48
    %v61 = vld [vmem:[%s59] ss:$16 sm:%s60]
    %vm62 = vcmask 1045508
    %v63 = vsel %vm62, %v61, %v58
    %64 = vrot.lane.b32.xlu0 %v63, 80
    %v65 = vpop.permute.xlu0 %64
    %vm66 = vcmask 786048
    %67 = vst.msk [vmem:[#allocation0] sm:$0x7] %vm66, %v65
    %s68 = scalar_lea.vmem [#allocation0], 5
    %69 = vst.msk [vmem:[%s68] sm:$0x38] %vm66, %v65
    %s70 = scalar_lea.vmem %s0, 4
    %s71 = smov 3
    %v72 = vld [vmem:[%s70] ss:$16 sm:%s71]
    %s73 = scalar_lea.vmem %s0, 84
    %s74 = smov 12
    %v75 = vld [vmem:[%s73] ss:$-24 sm:%s74]
    %vm76 = vcmask 1043458
    %v77 = vsel %vm76, %v75, %v72
    %s78 = scalar_lea.vmem %s0, 4294967260
    %s79 = smov 48
    %v80 = vld [vmem:[%s78] ss:$16 sm:%s79]
    %vm81 = vcmask 1045508
    %v82 = vsel %vm81, %v80, %v77
    %83 = vrot.lane.b32.xlu0 %v82, 64
    %v84 = vpop.permute.xlu0 %83
    %vm85 = vcmask 654848
    %86 = vst.msk [vmem:[#allocation0] sm:$0x7] %vm85, %v84
    %s87 = scalar_lea.vmem [#allocation0], 5
    %88 = vst.msk [vmem:[%s87] sm:$0x38] %vm85, %v84
    %s89 = scalar_lea.vmem %s0, 3
    %s90 = smov 3
    %v91 = vld [vmem:[%s89] ss:$16 sm:%s90]
    %s92 = scalar_lea.vmem %s0, 83
    %s93 = smov 12
    %v94 = vld [vmem:[%s92] ss:$-24 sm:%s93]
    %vm95 = vcmask 1043458
    %v96 = vsel %vm95, %v94, %v91
    %s97 = scalar_lea.vmem %s0, 4294967259
    %s98 = smov 48
    %v99 = vld [vmem:[%s97] ss:$16 sm:%s98]
    %vm100 = vcmask 1045508
    %v101 = vsel %vm100, %v99, %v96
    %102 = vrot.lane.b32.xlu0 %v101, 48
    %v103 = vpop.permute.xlu0 %102
    %vm104 = vcmask 523648
    %105 = vst.msk [vmem:[#allocation0] sm:$0x7] %vm104, %v103
    %s106 = scalar_lea.vmem [#allocation0], 5
    %107 = vst.msk [vmem:[%s106] sm:$0x38] %vm104, %v103
    %s108 = scalar_lea.vmem %s0, 2
    %s109 = smov 3
    %v110 = vld [vmem:[%s108] ss:$16 sm:%s109]
    %s111 = scalar_lea.vmem %s0, 82
    %s112 = smov 12
    %v113 = vld [vmem:[%s111] ss:$-24 sm:%s112]
    %vm114 = vcmask 1043458
    %v115 = vsel %vm114, %v113, %v110
    %s116 = scalar_lea.vmem %s0, 4294967258
    %s117 = smov 48
    %v118 = vld [vmem:[%s116] ss:$16 sm:%s117]
    %vm119 = vcmask 1045508
    %v120 = vsel %vm119, %v118, %v115
    %121 = vrot.lane.b32.xlu0 %v120, 32
    %v122 = vpop.permute.xlu0 %121
    %vm123 = vcmask 392448
    %124 = vst.msk [vmem:[#allocation0] sm:$0x7] %vm123, %v122
    %s125 = scalar_lea.vmem [#allocation0], 5
    %126 = vst.msk [vmem:[%s125] sm:$0x38] %vm123, %v122
    %s127 = scalar_lea.vmem %s0, 1
    %s128 = smov 3
    %v129 = vld [vmem:[%s127] ss:$16 sm:%s128]
    %s130 = scalar_lea.vmem %s0, 81
    %s131 = smov 12
    %v132 = vld [vmem:[%s130] ss:$-24 sm:%s131]
    %vm133 = vcmask 1043458
    %v134 = vsel %vm133, %v132, %v129
    %s135 = scalar_lea.vmem %s0, 4294967257
    %s136 = smov 48
    %v137 = vld [vmem:[%s135] ss:$16 sm:%s136]
    %vm138 = vcmask 1045508
    %v139 = vsel %vm138, %v137, %v134
    %140 = vrot.lane.b32.xlu0 %v139, 16
    %v141 = vpop.permute.xlu0 %140
    %vm142 = vcmask 261248
    %143 = vst.msk [vmem:[#allocation0] sm:$0x7] %vm142, %v141
    %s144 = scalar_lea.vmem [#allocation0], 5
    %145 = vst.msk [vmem:[%s144] sm:$0x38] %vm142, %v141
    %s147 = sshllo.u32 0, 4
    %v149 = vld [vmem:[#allocation0] sm:%s147]
    %s150 = sshllo.u32 0, 4
    %151 = vst [vmem:[%s1] sm:%s150] %v149
    %s152 = scalar_lea.vmem [#allocation0], 8
    %v153 = vld [vmem:[%s152] sm:%s147]
    %s154 = sshllo.u32 0, 4
    %s155 = scalar_lea.vmem %s1, 4
    %156 = vst [vmem:[%s155] sm:%s154] %v153

// kernel: condlanenet_forward.1
$region0: #{condlanenet_forward.1}
  #allocation0 [shape = 'u32[]', space=smem, size = 0x4, offset = 0x4, fixed_abs, tag = 'smem constant byte address 0x4 - core index']
  #allocation1 [shape = 'u32[144,128]{1,0:T(1,128)}', space=vmem, size = 0x12000, scoped, tag = 'internal scratch']
  #allocation2 [shape = 'f32[256,512]{1,0:T(8,128)}', space=vmem, size = 0x80000, scoped, tag = 'scratch operand']
  #allocation3 [shape = 'f32[512,32]{1,0:T(8,128)}', space=vmem, size = 0x40000, scoped, tag = 'scratch operand']
  #allocation4 [shape = 's32[2]{0}', space=sflag, size = 0x8, scoped, tag = 'scratch operand']
  #allocation5 [shape = 's32[]', space=sflag, size = 0x4, offset = 0, fixed_abs, tag = 'sflag constant byte address 0x0 - dummy sync flag']
  #allocation6 [shape = 's32[]', space=sflag, size = 0x4, offset = 0, fixed_abs, tag = 'sflag constant byte address 0x0 - dummy sync flag']
  %s0 = inlined_call_operand.smem [shape: u32[35], index: -1, kind: input, shape index: {}]
  %s1 = sld [smem:[%s0]]
  %s2 = scalar_lea.smem %s0, 1
  %s3 = sld [smem:[%s2]]
  %s4 = scalar_lea.smem %s0, 2
  %s5 = sld [smem:[%s4]]
  %s6 = scalar_lea.smem %s0, 3
  %s7 = sld [smem:[%s6]]
  %s8 = scalar_lea.smem %s0, 4
  %s9 = sld [smem:[%s8]]
  %s10 = scalar_lea.smem %s0, 5
  %s11 = sld [smem:[%s10]]
  %s12 = scalar_lea.smem %s0, 6
  %s13 = sld [smem:[%s12]]
  %s14 = scalar_lea.smem %s0, 7
  %s15 = sld [smem:[%s14]]
  %s16 = scalar_lea.smem %s0, 8
  %s17 = sld [smem:[%s16]]
  %s18 = scalar_lea.smem %s0, 9
  %s19 = sld [smem:[%s18]]
  %s20 = scalar_lea.smem %s0, 10
  %s21 = sld [smem:[%s20]]
  %s22 = scalar_lea.smem %s0, 11
  %s23 = sld [smem:[%s22]]
  %s24 = scalar_lea.smem %s0, 12
  %s25 = sld [smem:[%s24]]
  %s26 = scalar_lea.smem %s0, 13
  %s27 = sld [smem:[%s26]]
  %s28 = scalar_lea.smem %s0, 14
  %s29 = sld [smem:[%s28]]
  %s30 = scalar_lea.smem %s0, 15
  %s31 = sld [smem:[%s30]]
  %s32 = scalar_lea.smem %s0, 16
  %s33 = sld [smem:[%s32]]
  %s34 = scalar_lea.smem %s0, 17
  %s35 = sld [smem:[%s34]]
  %s36 = scalar_lea.smem %s0, 18
  %s37 = sld [smem:[%s36]]
  %s38 = scalar_lea.smem %s0, 19
  %s39 = sld [smem:[%s38]]
  %s40 = scalar_lea.smem %s0, 20
  %s41 = sld [smem:[%s40]]
  %s42 = scalar_lea.smem %s0, 21
  %s43 = sld [smem:[%s42]]
  %s44 = scalar_lea.smem %s0, 22
  %s45 = sld [smem:[%s44]]
  %s46 = scalar_lea.smem %s0, 23
  %s47 = sld [smem:[%s46]]
  %s48 = scalar_lea.smem %s0, 24
  %s49 = sld [smem:[%s48]]
  %s50 = scalar_lea.smem %s0, 25
  %s51 = sld [smem:[%s50]]
  %s52 = scalar_lea.smem %s0, 26
  %s53 = sld [smem:[%s52]]
  %s54 = scalar_lea.smem %s0, 27
  %s55 = sld [smem:[%s54]]
  %s56 = scalar_lea.smem %s0, 28
  %s57 = sld [smem:[%s56]]
  %s58 = scalar_lea.smem %s0, 29
  %s59 = sld [smem:[%s58]]
  %s60 = scalar_lea.smem %s0, 30
  %s61 = sld [smem:[%s60]]
  %s62 = scalar_lea.smem %s0, 31
  %s63 = sld [smem:[%s62]]
  %s64 = scalar_lea.smem %s0, 32
  %s65 = sld [smem:[%s64]]
  %s66 = scalar_lea.smem %s0, 33
  %s67 = sld [smem:[%s66]]
  %s68 = scalar_lea.smem %s0, 34
  %s69 = sld [smem:[%s68]]
  %70 = xla_tuple %s67, %s69
  %s71 = sld [smem:[#allocation0]]
  $region210: #{condlanenet_forward.1} parent=0
    _
  %s73 = ssub.s32 1, %s71
  %s74 = scalar_select 0, %s73, %s71
  // Predicated region
  $region2: #{condlanenet_forward.1} parent=0 // pred_check
    _
  $region3: #{condlanenet_forward.1} parent=0 // pred_check_branch
    %76 = sbr.rel (0) target = $region5
  $region4: #{condlanenet_forward.1} parent=0 // pred_region
    _
  $region5: #{condlanenet_forward.1} parent=0 // pred_fallthru
    _
  // Predicated region
  $region6: #{condlanenet_forward.1} parent=0 // pred_check
    _
  $region7: #{condlanenet_forward.1} parent=0 // pred_check_branch
    %78 = sbr.rel (0) target = $region9
  $region8: #{condlanenet_forward.1} parent=0 // pred_region
    _
  $region9: #{condlanenet_forward.1} parent=0 // pred_fallthru
    _
  // Predicated region
  $region10: #{condlanenet_forward.1} parent=0 // pred_check
    _
  $region11: #{condlanenet_forward.1} parent=0 // pred_check_branch
    %80 = sbr.rel (0) target = $region13
  $region12: #{condlanenet_forward.1} parent=0 // pred_region
    _
  $region13: #{condlanenet_forward.1} parent=0 // pred_fallthru
    _
  // Predicated region
  $region14: #{condlanenet_forward.1} parent=0 // pred_check
    _
  $region15: #{condlanenet_forward.1} parent=0 // pred_check_branch
    %82 = sbr.rel (0) target = $region17
  $region16: #{condlanenet_forward.1} parent=0 // pred_region
    _
  $region17: #{condlanenet_forward.1} parent=0 // pred_fallthru
    _
  // Predicated region
  $region18: #{condlanenet_forward.1} parent=0 // pred_check
    _
  $region19: #{condlanenet_forward.1} parent=0 // pred_check_branch
    %84 = sbr.rel (0) target = $region21
  $region20: #{condlanenet_forward.1} parent=0 // pred_region
    _
  $region21: #{condlanenet_forward.1} parent=0 // pred_fallthru
    _
  // Predicated region
  $region22: #{condlanenet_forward.1} parent=0 // pred_check
    _
  $region23: #{condlanenet_forward.1} parent=0 // pred_check_branch
    %86 = sbr.rel (0) target = $region25
  $region24: #{condlanenet_forward.1} parent=0 // pred_region
    _
  $region25: #{condlanenet_forward.1} parent=0 // pred_fallthru
    _
  // Predicated region
  $region26: #{condlanenet_forward.1} parent=0 // pred_check
    _
  $region27: #{condlanenet_forward.1} parent=0 // pred_check_branch
    %88 = sbr.rel (0) target = $region29
  $region28: #{condlanenet_forward.1} parent=0 // pred_region
    _
  $region29: #{condlanenet_forward.1} parent=0 // pred_fallthru
    _
  // Predicated region
  $region30: #{condlanenet_forward.1} parent=0 // pred_check
    _
  $region31: #{condlanenet_forward.1} parent=0 // pred_check_branch
    %90 = sbr.rel (0) target = $region33
  $region32: #{condlanenet_forward.1} parent=0 // pred_region
    _
  $region33: #{condlanenet_forward.1} parent=0 // pred_fallthru
    _
  // Predicated region
  $region34: #{condlanenet_forward.1} parent=0 // pred_check
    _
  $region35: #{condlanenet_forward.1} parent=0 // pred_check_branch
    %92 = sbr.rel (0) target = $region37
  $region36: #{condlanenet_forward.1} parent=0 // pred_region
    _
  $region37: #{condlanenet_forward.1} parent=0 // pred_fallthru
    _
  // Predicated region
  $region38: #{condlanenet_forward.1} parent=0 // pred_check
    _
  $region39: #{condlanenet_forward.1} parent=0 // pred_check_branch
    %94 = sbr.rel (0) target = $region41
  $region40: #{condlanenet_forward.1} parent=0 // pred_region
    _
  $region41: #{condlanenet_forward.1} parent=0 // pred_fallthru
    _
  // Predicated region
  $region42: #{condlanenet_forward.1} parent=0 // pred_check
    _
  $region43: #{condlanenet_forward.1} parent=0 // pred_check_branch
    %96 = sbr.rel (0) target = $region45
  $region44: #{condlanenet_forward.1} parent=0 // pred_region
    _
  $region45: #{condlanenet_forward.1} parent=0 // pred_fallthru
    _
  // Predicated region
  $region46: #{condlanenet_forward.1} parent=0 // pred_check
    _
  $region47: #{condlanenet_forward.1} parent=0 // pred_check_branch
    %98 = sbr.rel (0) target = $region49
  $region48: #{condlanenet_forward.1} parent=0 // pred_region
    _
  $region49: #{condlanenet_forward.1} parent=0 // pred_fallthru
    _
  // Predicated region
  $region50: #{condlanenet_forward.1} parent=0 // pred_check
    _
  $region51: #{condlanenet_forward.1} parent=0 // pred_check_branch
    %100 = sbr.rel (0) target = $region53
  $region52: #{condlanenet_forward.1} parent=0 // pred_region
    _
  $region53: #{condlanenet_forward.1} parent=0 // pred_fallthru
    _
  // Predicated region
  $region54: #{condlanenet_forward.1} parent=0 // pred_check
    _
  $region55: #{condlanenet_forward.1} parent=0 // pred_check_branch
    %102 = sbr.rel (0) target = $region57
  $region56: #{condlanenet_forward.1} parent=0 // pred_region
    _
  $region57: #{condlanenet_forward.1} parent=0 // pred_fallthru
    _
  // Predicated region
  $region58: #{condlanenet_forward.1} parent=0 // pred_check
    _
  $region59: #{condlanenet_forward.1} parent=0 // pred_check_branch
    %104 = sbr.rel (0) target = $region61
  $region60: #{condlanenet_forward.1} parent=0 // pred_region
    _
  $region61: #{condlanenet_forward.1} parent=0 // pred_fallthru
    _
  // Predicated region
  $region62: #{condlanenet_forward.1} parent=0 // pred_check
    _
  $region63: #{condlanenet_forward.1} parent=0 // pred_check_branch
    %106 = sbr.rel (0) target = $region65
  $region64: #{condlanenet_forward.1} parent=0 // pred_region
    _
  $region65: #{condlanenet_forward.1} parent=0 // pred_fallthru
    _
  // Predicated region
  $region66: #{condlanenet_forward.1} parent=0 // pred_check
    _
  $region67: #{condlanenet_forward.1} parent=0 // pred_check_branch
    %108 = sbr.rel (0) target = $region69
  $region68: #{condlanenet_forward.1} parent=0 // pred_region
    _
  $region69: #{condlanenet_forward.1} parent=0 // pred_fallthru
    _
  // Predicated region
  $region70: #{condlanenet_forward.1} parent=0 // pred_check
    _
  $region71: #{condlanenet_forward.1} parent=0 // pred_check_branch
    %110 = sbr.rel (0) target = $region73
  $region72: #{condlanenet_forward.1} parent=0 // pred_region
    _
  $region73: #{condlanenet_forward.1} parent=0 // pred_fallthru
    _
  // Predicated region
  $region74: #{condlanenet_forward.1} parent=0 // pred_check
    _
  $region75: #{condlanenet_forward.1} parent=0 // pred_check_branch
    %112 = sbr.rel (0) target = $region77
  $region76: #{condlanenet_forward.1} parent=0 // pred_region
    _
  $region77: #{condlanenet_forward.1} parent=0 // pred_fallthru
    _
  // Predicated region
  $region78: #{condlanenet_forward.1} parent=0 // pred_check
    _
  $region79: #{condlanenet_forward.1} parent=0 // pred_check_branch
    %114 = sbr.rel (0) target = $region81
  $region80: #{condlanenet_forward.1} parent=0 // pred_region
    _
  $region81: #{condlanenet_forward.1} parent=0 // pred_fallthru
    _
  // Predicated region
  $region82: #{condlanenet_forward.1} parent=0 // pred_check
    _
  $region83: #{condlanenet_forward.1} parent=0 // pred_check_branch
    %116 = sbr.rel (0) target = $region85
  $region84: #{condlanenet_forward.1} parent=0 // pred_region
    _
  $region85: #{condlanenet_forward.1} parent=0 // pred_fallthru
    _
  // Predicated region
  $region86: #{condlanenet_forward.1} parent=0 // pred_check
    _
  $region87: #{condlanenet_forward.1} parent=0 // pred_check_branch
    %118 = sbr.rel (0) target = $region89
  $region88: #{condlanenet_forward.1} parent=0 // pred_region
    _
  $region89: #{condlanenet_forward.1} parent=0 // pred_fallthru
    _
  // Predicated region
  $region90: #{condlanenet_forward.1} parent=0 // pred_check
    _
  $region91: #{condlanenet_forward.1} parent=0 // pred_check_branch
    %120 = sbr.rel (0) target = $region93
  $region92: #{condlanenet_forward.1} parent=0 // pred_region
    _
  $region93: #{condlanenet_forward.1} parent=0 // pred_fallthru
    _
  // Predicated region
  $region94: #{condlanenet_forward.1} parent=0 // pred_check
    _
  $region95: #{condlanenet_forward.1} parent=0 // pred_check_branch
    %122 = sbr.rel (0) target = $region97
  $region96: #{condlanenet_forward.1} parent=0 // pred_region
    _
  $region97: #{condlanenet_forward.1} parent=0 // pred_fallthru
    _
  // Predicated region
  $region98: #{condlanenet_forward.1} parent=0 // pred_check
    _
  $region99: #{condlanenet_forward.1} parent=0 // pred_check_branch
    %124 = sbr.rel (0) target = $region101
  $region100: #{condlanenet_forward.1} parent=0 // pred_region
    _
  $region101: #{condlanenet_forward.1} parent=0 // pred_fallthru
    _
  // Predicated region
  $region102: #{condlanenet_forward.1} parent=0 // pred_check
    _
  $region103: #{condlanenet_forward.1} parent=0 // pred_check_branch
    %126 = sbr.rel (0) target = $region105
  $region104: #{condlanenet_forward.1} parent=0 // pred_region
    _
  $region105: #{condlanenet_forward.1} parent=0 // pred_fallthru
    _
  // Predicated region
  $region106: #{condlanenet_forward.1} parent=0 // pred_check
    _
  $region107: #{condlanenet_forward.1} parent=0 // pred_check_branch
    %128 = sbr.rel (0) target = $region109
  $region108: #{condlanenet_forward.1} parent=0 // pred_region
    _
  $region109: #{condlanenet_forward.1} parent=0 // pred_fallthru
    _
  // Predicated region
  $region110: #{condlanenet_forward.1} parent=0 // pred_check
    _
  $region111: #{condlanenet_forward.1} parent=0 // pred_check_branch
    %130 = sbr.rel (0) target = $region113
  $region112: #{condlanenet_forward.1} parent=0 // pred_region
    _
  $region113: #{condlanenet_forward.1} parent=0 // pred_fallthru
    _
  // Predicated region
  $region114: #{condlanenet_forward.1} parent=0 // pred_check
    _
  $region115: #{condlanenet_forward.1} parent=0 // pred_check_branch
    %132 = sbr.rel (0) target = $region117
  $region116: #{condlanenet_forward.1} parent=0 // pred_region
    _
  $region117: #{condlanenet_forward.1} parent=0 // pred_fallthru
    _
  // Predicated region
  $region118: #{condlanenet_forward.1} parent=0 // pred_check
    _
  $region119: #{condlanenet_forward.1} parent=0 // pred_check_branch
    %134 = sbr.rel (0) target = $region121
  $region120: #{condlanenet_forward.1} parent=0 // pred_region
    _
  $region121: #{condlanenet_forward.1} parent=0 // pred_fallthru
    _
  // Predicated region
  $region122: #{condlanenet_forward.1} parent=0 // pred_check
    _
  $region123: #{condlanenet_forward.1} parent=0 // pred_check_branch
    %136 = sbr.rel (0) target = $region125
  $region124: #{condlanenet_forward.1} parent=0 // pred_region
    _
  $region125: #{condlanenet_forward.1} parent=0 // pred_fallthru
    _
  %p138 = scmp.lt.u32.totalorder 1024, 8
  %p139 = pneg %p138
  // Predicated region
  $region126: #{condlanenet_forward.1} parent=0 // pred_check
    _
  $region127: #{condlanenet_forward.1} parent=0 // pred_check_branch
    %141 = sbr.rel (%p138) target = $region129
  $region128: #{condlanenet_forward.1} parent=0 // pred_region
    %s156 = sand.u32 1024, 7
    %p157 = scmp.eq.s32.totalorder %s156, 0
    // Predicated region
    $region141: #{condlanenet_forward.1} parent=128 // pred_check
      %p158 = pneg %p157
    $region142: #{condlanenet_forward.1} parent=128 // pred_check_branch
      %160 = sbr.rel (%p158) target = $region144
    $region143: #{condlanenet_forward.1} parent=128 // pred_region
      loop: start=0, step=1, limit=1
      $region145: #{condlanenet_forward.1} parent=143 // loop_pre_header
        _
      $region146: #{condlanenet_forward.1} parent=143 // loop_header
        %s162 = sphi 0, %s166
        %p163 = scmp.ge.s32.totalorder %s162, 1
        %s167 = sphi %s63, %s63
        %s168 = sphi [#allocation2], [#allocation2]
      $region147: #{condlanenet_forward.1} parent=143 // loop_header_branch
        %165 = sbr.rel (%p163) target = $region151
      $region148: #{condlanenet_forward.1} parent=143 // loop_body
        %v169 = vld [vmem:[%s167] sm:$0xff]
        %170 = vst [vmem:[%s168] sm:$0xff] %v169
        %v171 = vld [vmem:[%s167 + $0x8] sm:$0xff]
        %172 = vst [vmem:[%s168 + $0x8] sm:$0xff] %v171
        %v173 = vld [vmem:[%s167 + $0x10] sm:$0xff]
        %174 = vst [vmem:[%s168 + $0x10] sm:$0xff] %v173
        %v175 = vld [vmem:[%s167 + $0x18] sm:$0xff]
        %176 = vst [vmem:[%s168 + $0x18] sm:$0xff] %v175
        %v177 = vld [vmem:[%s167 + $0x20] sm:$0xff]
        %178 = vst [vmem:[%s168 + $0x20] sm:$0xff] %v177
        %v179 = vld [vmem:[%s167 + $0x28] sm:$0xff]
        %180 = vst [vmem:[%s168 + $0x28] sm:$0xff] %v179
        %v181 = vld [vmem:[%s167 + $0x30] sm:$0xff]
        %182 = vst [vmem:[%s168 + $0x30] sm:$0xff] %v181
        %v183 = vld [vmem:[%s167 + $0x38] sm:$0xff]
        %184 = vst [vmem:[%s168 + $0x38] sm:$0xff] %v183
        %v185 = vld [vmem:[%s167 + $0x40] sm:$0xff]
        %186 = vst [vmem:[%s168 + $0x40] sm:$0xff] %v185
        %v187 = vld [vmem:[%s167 + $0x48] sm:$0xff]
        %188 = vst [vmem:[%s168 + $0x48] sm:$0xff] %v187
        %v189 = vld [vmem:[%s167 + $0x50] sm:$0xff]
        %190 = vst [vmem:[%s168 + $0x50] sm:$0xff] %v189
        %v191 = vld [vmem:[%s167 + $0x58] sm:$0xff]
        %192 = vst [vmem:[%s168 + $0x58] sm:$0xff] %v191
        %v193 = vld [vmem:[%s167 + $0x60] sm:$0xff]
        %194 = vst [vmem:[%s168 + $0x60] sm:$0xff] %v193
        %v195 = vld [vmem:[%s167 + $0x68] sm:$0xff]
        %196 = vst [vmem:[%s168 + $0x68] sm:$0xff] %v195
        %v197 = vld [vmem:[%s167 + $0x70] sm:$0xff]
        %198 = vst [vmem:[%s168 + $0x70] sm:$0xff] %v197
        %v199 = vld [vmem:[%s167 + $0x78] sm:$0xff]
        %200 = vst [vmem:[%s168 + $0x78] sm:$0xff] %v199
        %v201 = vld [vmem:[%s167 + $0x80] sm:$0xff]
        %202 = vst [vmem:[%s168 + $0x80] sm:$0xff] %v201
        %v203 = vld [vmem:[%s167 + $0x88] sm:$0xff]
        %204 = vst [vmem:[%s168 + $0x88] sm:$0xff] %v203
        %v205 = vld [vmem:[%s167 + $0x90] sm:$0xff]
        %206 = vst [vmem:[%s168 + $0x90] sm:$0xff] %v205
        %v207 = vld [vmem:[%s167 + $0x98] sm:$0xff]
        %208 = vst [vmem:[%s168 + $0x98] sm:$0xff] %v207
        %v209 = vld [vmem:[%s167 + $0xa0] sm:$0xff]
        %210 = vst [vmem:[%s168 + $0xa0] sm:$0xff] %v209
        %v211 = vld [vmem:[%s167 + $0xa8] sm:$0xff]
        %212 = vst [vmem:[%s168 + $0xa8] sm:$0xff] %v211
        %v213 = vld [vmem:[%s167 + $0xb0] sm:$0xff]
        %214 = vst [vmem:[%s168 + $0xb0] sm:$0xff] %v213
        %v215 = vld [vmem:[%s167 + $0xb8] sm:$0xff]
        %216 = vst [vmem:[%s168 + $0xb8] sm:$0xff] %v215
        %v217 = vld [vmem:[%s167 + $0xc0] sm:$0xff]
        %218 = vst [vmem:[%s168 + $0xc0] sm:$0xff] %v217
        %v219 = vld [vmem:[%s167 + $0xc8] sm:$0xff]
        %220 = vst [vmem:[%s168 + $0xc8] sm:$0xff] %v219
        %v221 = vld [vmem:[%s167 + $0xd0] sm:$0xff]
        %222 = vst [vmem:[%s168 + $0xd0] sm:$0xff] %v221
        %v223 = vld [vmem:[%s167 + $0xd8] sm:$0xff]
        %224 = vst [vmem:[%s168 + $0xd8] sm:$0xff] %v223
        %v225 = vld [vmem:[%s167 + $0xe0] sm:$0xff]
        %226 = vst [vmem:[%s168 + $0xe0] sm:$0xff] %v225
        %v227 = vld [vmem:[%s167 + $0xe8] sm:$0xff]
        %228 = vst [vmem:[%s168 + $0xe8] sm:$0xff] %v227
        %v229 = vld [vmem:[%s167 + $0xf0] sm:$0xff]
        %230 = vst [vmem:[%s168 + $0xf0] sm:$0xff] %v229
        %v231 = vld [vmem:[%s167 + $0xf8] sm:$0xff]
        %232 = vst [vmem:[%s168 + $0xf8] sm:$0xff] %v231
        %v233 = vld [vmem:[%s167 + $0x100] sm:$0xff]
        %234 = vst [vmem:[%s168 + $0x100] sm:$0xff] %v233
        %v235 = vld [vmem:[%s167 + $0x108] sm:$0xff]
        %236 = vst [vmem:[%s168 + $0x108] sm:$0xff] %v235
        %v237 = vld [vmem:[%s167 + $0x110] sm:$0xff]
        %238 = vst [vmem:[%s168 + $0x110] sm:$0xff] %v237
        %v239 = vld [vmem:[%s167 + $0x118] sm:$0xff]
        %240 = vst [vmem:[%s168 + $0x118] sm:$0xff] %v239
        %v241 = vld [vmem:[%s167 + $0x120] sm:$0xff]
        %242 = vst [vmem:[%s168 + $0x120] sm:$0xff] %v241
        %v243 = vld [vmem:[%s167 + $0x128] sm:$0xff]
        %244 = vst [vmem:[%s168 + $0x128] sm:$0xff] %v243
        %v245 = vld [vmem:[%s167 + $0x130] sm:$0xff]
        %246 = vst [vmem:[%s168 + $0x130] sm:$0xff] %v245
        %v247 = vld [vmem:[%s167 + $0x138] sm:$0xff]
        %248 = vst [vmem:[%s168 + $0x138] sm:$0xff] %v247
        %v249 = vld [vmem:[%s167 + $0x140] sm:$0xff]
        %250 = vst [vmem:[%s168 + $0x140] sm:$0xff] %v249
        %v251 = vld [vmem:[%s167 + $0x148] sm:$0xff]
        %252 = vst [vmem:[%s168 + $0x148] sm:$0xff] %v251
        %v253 = vld [vmem:[%s167 + $0x150] sm:$0xff]
        %254 = vst [vmem:[%s168 + $0x150] sm:$0xff] %v253
        %v255 = vld [vmem:[%s167 + $0x158] sm:$0xff]
        %256 = vst [vmem:[%s168 + $0x158] sm:$0xff] %v255
        %v257 = vld [vmem:[%s167 + $0x160] sm:$0xff]
        %258 = vst [vmem:[%s168 + $0x160] sm:$0xff] %v257
        %v259 = vld [vmem:[%s167 + $0x168] sm:$0xff]
        %260 = vst [vmem:[%s168 + $0x168] sm:$0xff] %v259
        %v261 = vld [vmem:[%s167 + $0x170] sm:$0xff]
        %262 = vst [vmem:[%s168 + $0x170] sm:$0xff] %v261
        %v263 = vld [vmem:[%s167 + $0x178] sm:$0xff]
        %264 = vst [vmem:[%s168 + $0x178] sm:$0xff] %v263
        %v265 = vld [vmem:[%s167 + $0x180] sm:$0xff]
        %266 = vst [vmem:[%s168 + $0x180] sm:$0xff] %v265
        %v267 = vld [vmem:[%s167 + $0x188] sm:$0xff]
        %268 = vst [vmem:[%s168 + $0x188] sm:$0xff] %v267
        %v269 = vld [vmem:[%s167 + $0x190] sm:$0xff]
        %270 = vst [vmem:[%s168 + $0x190] sm:$0xff] %v269
        %v271 = vld [vmem:[%s167 + $0x198] sm:$0xff]
        %272 = vst [vmem:[%s168 + $0x198] sm:$0xff] %v271
        %v273 = vld [vmem:[%s167 + $0x1a0] sm:$0xff]
        %274 = vst [vmem:[%s168 + $0x1a0] sm:$0xff] %v273
        %v275 = vld [vmem:[%s167 + $0x1a8] sm:$0xff]
        %276 = vst [vmem:[%s168 + $0x1a8] sm:$0xff] %v275
        %v277 = vld [vmem:[%s167 + $0x1b0] sm:$0xff]
        %278 = vst [vmem:[%s168 + $0x1b0] sm:$0xff] %v277
        %v279 = vld [vmem:[%s167 + $0x1b8] sm:$0xff]
        %280 = vst [vmem:[%s168 + $0x1b8] sm:$0xff] %v279
        %v281 = vld [vmem:[%s167 + $0x1c0] sm:$0xff]
        %282 = vst [vmem:[%s168 + $0x1c0] sm:$0xff] %v281
        %v283 = vld [vmem:[%s167 + $0x1c8] sm:$0xff]
        %284 = vst [vmem:[%s168 + $0x1c8] sm:$0xff] %v283
        %v285 = vld [vmem:[%s167 + $0x1d0] sm:$0xff]
        %286 = vst [vmem:[%s168 + $0x1d0] sm:$0xff] %v285
        %v287 = vld [vmem:[%s167 + $0x1d8] sm:$0xff]
        %288 = vst [vmem:[%s168 + $0x1d8] sm:$0xff] %v287
        %v289 = vld [vmem:[%s167 + $0x1e0] sm:$0xff]
        %290 = vst [vmem:[%s168 + $0x1e0] sm:$0xff] %v289
        %v291 = vld [vmem:[%s167 + $0x1e8] sm:$0xff]
        %292 = vst [vmem:[%s168 + $0x1e8] sm:$0xff] %v291
        %v293 = vld [vmem:[%s167 + $0x1f0] sm:$0xff]
        %294 = vst [vmem:[%s168 + $0x1f0] sm:$0xff] %v293
        %v295 = vld [vmem:[%s167 + $0x1f8] sm:$0xff]
        %296 = vst [vmem:[%s168 + $0x1f8] sm:$0xff] %v295
        %v297 = vld [vmem:[%s167 + $0x200] sm:$0xff]
        %298 = vst [vmem:[%s168 + $0x200] sm:$0xff] %v297
        %v299 = vld [vmem:[%s167 + $0x208] sm:$0xff]
        %300 = vst [vmem:[%s168 + $0x208] sm:$0xff] %v299
        %v301 = vld [vmem:[%s167 + $0x210] sm:$0xff]
        %302 = vst [vmem:[%s168 + $0x210] sm:$0xff] %v301
        %v303 = vld [vmem:[%s167 + $0x218] sm:$0xff]
        %304 = vst [vmem:[%s168 + $0x218] sm:$0xff] %v303
        %v305 = vld [vmem:[%s167 + $0x220] sm:$0xff]
        %306 = vst [vmem:[%s168 + $0x220] sm:$0xff] %v305
        %v307 = vld [vmem:[%s167 + $0x228] sm:$0xff]
        %308 = vst [vmem:[%s168 + $0x228] sm:$0xff] %v307
        %v309 = vld [vmem:[%s167 + $0x230] sm:$0xff]
        %310 = vst [vmem:[%s168 + $0x230] sm:$0xff] %v309
        %v311 = vld [vmem:[%s167 + $0x238] sm:$0xff]
        %312 = vst [vmem:[%s168 + $0x238] sm:$0xff] %v311
        %v313 = vld [vmem:[%s167 + $0x240] sm:$0xff]
        %314 = vst [vmem:[%s168 + $0x240] sm:$0xff] %v313
        %v315 = vld [vmem:[%s167 + $0x248] sm:$0xff]
        %316 = vst [vmem:[%s168 + $0x248] sm:$0xff] %v315
        %v317 = vld [vmem:[%s167 + $0x250] sm:$0xff]
        %318 = vst [vmem:[%s168 + $0x250] sm:$0xff] %v317
        %v319 = vld [vmem:[%s167 + $0x258] sm:$0xff]
        %320 = vst [vmem:[%s168 + $0x258] sm:$0xff] %v319
        %v321 = vld [vmem:[%s167 + $0x260] sm:$0xff]
        %322 = vst [vmem:[%s168 + $0x260] sm:$0xff] %v321
        %v323 = vld [vmem:[%s167 + $0x268] sm:$0xff]
        %324 = vst [vmem:[%s168 + $0x268] sm:$0xff] %v323
        %v325 = vld [vmem:[%s167 + $0x270] sm:$0xff]
        %326 = vst [vmem:[%s168 + $0x270] sm:$0xff] %v325
        %v327 = vld [vmem:[%s167 + $0x278] sm:$0xff]
        %328 = vst [vmem:[%s168 + $0x278] sm:$0xff] %v327
        %v329 = vld [vmem:[%s167 + $0x280] sm:$0xff]
        %330 = vst [vmem:[%s168 + $0x280] sm:$0xff] %v329
        %v331 = vld [vmem:[%s167 + $0x288] sm:$0xff]
        %332 = vst [vmem:[%s168 + $0x288] sm:$0xff] %v331
        %v333 = vld [vmem:[%s167 + $0x290] sm:$0xff]
        %334 = vst [vmem:[%s168 + $0x290] sm:$0xff] %v333
        %v335 = vld [vmem:[%s167 + $0x298] sm:$0xff]
        %336 = vst [vmem:[%s168 + $0x298] sm:$0xff] %v335
        %v337 = vld [vmem:[%s167 + $0x2a0] sm:$0xff]
        %338 = vst [vmem:[%s168 + $0x2a0] sm:$0xff] %v337
        %v339 = vld [vmem:[%s167 + $0x2a8] sm:$0xff]
        %340 = vst [vmem:[%s168 + $0x2a8] sm:$0xff] %v339
        %v341 = vld [vmem:[%s167 + $0x2b0] sm:$0xff]
        %342 = vst [vmem:[%s168 + $0x2b0] sm:$0xff] %v341
        %v343 = vld [vmem:[%s167 + $0x2b8] sm:$0xff]
        %344 = vst [vmem:[%s168 + $0x2b8] sm:$0xff] %v343
        %v345 = vld [vmem:[%s167 + $0x2c0] sm:$0xff]
        %346 = vst [vmem:[%s168 + $0x2c0] sm:$0xff] %v345
        %v347 = vld [vmem:[%s167 + $0x2c8] sm:$0xff]
        %348 = vst [vmem:[%s168 + $0x2c8] sm:$0xff] %v347
        %v349 = vld [vmem:[%s167 + $0x2d0] sm:$0xff]
        %350 = vst [vmem:[%s168 + $0x2d0] sm:$0xff] %v349
        %v351 = vld [vmem:[%s167 + $0x2d8] sm:$0xff]
        %352 = vst [vmem:[%s168 + $0x2d8] sm:$0xff] %v351
        %v353 = vld [vmem:[%s167 + $0x2e0] sm:$0xff]
        %354 = vst [vmem:[%s168 + $0x2e0] sm:$0xff] %v353
        %v355 = vld [vmem:[%s167 + $0x2e8] sm:$0xff]
        %356 = vst [vmem:[%s168 + $0x2e8] sm:$0xff] %v355
        %v357 = vld [vmem:[%s167 + $0x2f0] sm:$0xff]
        %358 = vst [vmem:[%s168 + $0x2f0] sm:$0xff] %v357
        %v359 = vld [vmem:[%s167 + $0x2f8] sm:$0xff]
        %360 = vst [vmem:[%s168 + $0x2f8] sm:$0xff] %v359
        %v361 = vld [vmem:[%s167 + $0x300] sm:$0xff]
        %362 = vst [vmem:[%s168 + $0x300] sm:$0xff] %v361
        %v363 = vld [vmem:[%s167 + $0x308] sm:$0xff]
        %364 = vst [vmem:[%s168 + $0x308] sm:$0xff] %v363
        %v365 = vld [vmem:[%s167 + $0x310] sm:$0xff]
        %366 = vst [vmem:[%s168 + $0x310] sm:$0xff] %v365
        %v367 = vld [vmem:[%s167 + $0x318] sm:$0xff]
        %368 = vst [vmem:[%s168 + $0x318] sm:$0xff] %v367
        %v369 = vld [vmem:[%s167 + $0x320] sm:$0xff]
        %370 = vst [vmem:[%s168 + $0x320] sm:$0xff] %v369
        %v371 = vld [vmem:[%s167 + $0x328] sm:$0xff]
        %372 = vst [vmem:[%s168 + $0x328] sm:$0xff] %v371
        %v373 = vld [vmem:[%s167 + $0x330] sm:$0xff]
        %374 = vst [vmem:[%s168 + $0x330] sm:$0xff] %v373
        %v375 = vld [vmem:[%s167 + $0x338] sm:$0xff]
        %376 = vst [vmem:[%s168 + $0x338] sm:$0xff] %v375
        %v377 = vld [vmem:[%s167 + $0x340] sm:$0xff]
        %378 = vst [vmem:[%s168 + $0x340] sm:$0xff] %v377
        %v379 = vld [vmem:[%s167 + $0x348] sm:$0xff]
        %380 = vst [vmem:[%s168 + $0x348] sm:$0xff] %v379
        %v381 = vld [vmem:[%s167 + $0x350] sm:$0xff]
        %382 = vst [vmem:[%s168 + $0x350] sm:$0xff] %v381
        %v383 = vld [vmem:[%s167 + $0x358] sm:$0xff]
        %384 = vst [vmem:[%s168 + $0x358] sm:$0xff] %v383
        %v385 = vld [vmem:[%s167 + $0x360] sm:$0xff]
        %386 = vst [vmem:[%s168 + $0x360] sm:$0xff] %v385
        %v387 = vld [vmem:[%s167 + $0x368] sm:$0xff]
        %388 = vst [vmem:[%s168 + $0x368] sm:$0xff] %v387
        %v389 = vld [vmem:[%s167 + $0x370] sm:$0xff]
        %390 = vst [vmem:[%s168 + $0x370] sm:$0xff] %v389
        %v391 = vld [vmem:[%s167 + $0x378] sm:$0xff]
        %392 = vst [vmem:[%s168 + $0x378] sm:$0xff] %v391
        %v393 = vld [vmem:[%s167 + $0x380] sm:$0xff]
        %394 = vst [vmem:[%s168 + $0x380] sm:$0xff] %v393
        %v395 = vld [vmem:[%s167 + $0x388] sm:$0xff]
        %396 = vst [vmem:[%s168 + $0x388] sm:$0xff] %v395
        %v397 = vld [vmem:[%s167 + $0x390] sm:$0xff]
        %398 = vst [vmem:[%s168 + $0x390] sm:$0xff] %v397
        %v399 = vld [vmem:[%s167 + $0x398] sm:$0xff]
        %400 = vst [vmem:[%s168 + $0x398] sm:$0xff] %v399
        %v401 = vld [vmem:[%s167 + $0x3a0] sm:$0xff]
        %402 = vst [vmem:[%s168 + $0x3a0] sm:$0xff] %v401
        %v403 = vld [vmem:[%s167 + $0x3a8] sm:$0xff]
        %404 = vst [vmem:[%s168 + $0x3a8] sm:$0xff] %v403
        %v405 = vld [vmem:[%s167 + $0x3b0] sm:$0xff]
        %406 = vst [vmem:[%s168 + $0x3b0] sm:$0xff] %v405
        %v407 = vld [vmem:[%s167 + $0x3b8] sm:$0xff]
        %408 = vst [vmem:[%s168 + $0x3b8] sm:$0xff] %v407
        %v409 = vld [vmem:[%s167 + $0x3c0] sm:$0xff]
        %410 = vst [vmem:[%s168 + $0x3c0] sm:$0xff] %v409
        %v411 = vld [vmem:[%s167 + $0x3c8] sm:$0xff]
        %412 = vst [vmem:[%s168 + $0x3c8] sm:$0xff] %v411
        %v413 = vld [vmem:[%s167 + $0x3d0] sm:$0xff]
        %414 = vst [vmem:[%s168 + $0x3d0] sm:$0xff] %v413
        %v415 = vld [vmem:[%s167 + $0x3d8] sm:$0xff]
        %416 = vst [vmem:[%s168 + $0x3d8] sm:$0xff] %v415
        %v417 = vld [vmem:[%s167 + $0x3e0] sm:$0xff]
        %418 = vst [vmem:[%s168 + $0x3e0] sm:$0xff] %v417
        %v419 = vld [vmem:[%s167 + $0x3e8] sm:$0xff]
        %420 = vst [vmem:[%s168 + $0x3e8] sm:$0xff] %v419
        %v421 = vld [vmem:[%s167 + $0x3f0] sm:$0xff]
        %422 = vst [vmem:[%s168 + $0x3f0] sm:$0xff] %v421
        %v423 = vld [vmem:[%s167 + $0x3f8] sm:$0xff]
        %424 = vst [vmem:[%s168 + $0x3f8] sm:$0xff] %v423
      $region149: #{condlanenet_forward.1} parent=143 // loop_footer
        %s166 = sadd.s32 1, %s162
      $region150: #{condlanenet_forward.1} parent=143 // loop_footer_branch
        %161 = sbr.rel target = $region146
      $region151: #{condlanenet_forward.1} parent=143 // loop_exit
        _
    $region144: #{condlanenet_forward.1} parent=128 // pred_fallthru
      _
    %p425 = pneg %p157
    // Predicated region
    $region152: #{condlanenet_forward.1} parent=128 // pred_check
      _
    $region153: #{condlanenet_forward.1} parent=128 // pred_check_branch
      %427 = sbr.rel (%p157) target = $region155
    $region154: #{condlanenet_forward.1} parent=128 // pred_region
      %s428 = sand.u32 1024, 7
    $region155: #{condlanenet_forward.1} parent=128 // pred_fallthru
      _
  $region129: #{condlanenet_forward.1} parent=0 // pred_fallthru
    _
  // Predicated region
  $region130: #{condlanenet_forward.1} parent=0 // pred_check
    %p142 = pneg %p138
  $region131: #{condlanenet_forward.1} parent=0 // pred_check_branch
    %144 = sbr.rel (%p142) target = $region133
  $region132: #{condlanenet_forward.1} parent=0 // pred_region
    %s145 = sshllo.u32 0, 1024
    loop: start=0, step=1, limit=1
    $region134: #{condlanenet_forward.1} parent=132 // loop_pre_header
      _
    $region135: #{condlanenet_forward.1} parent=132 // loop_header
      %s147 = sphi 0, %s151
      %p148 = scmp.ge.s32.totalorder %s147, 1
      %s152 = sphi %s63, %s63
      %s153 = sphi [#allocation2], [#allocation2]
    $region136: #{condlanenet_forward.1} parent=132 // loop_header_branch
      %150 = sbr.rel (%p148) target = $region140
    $region137: #{condlanenet_forward.1} parent=132 // loop_body
      %v154 = vld [vmem:[%s152] sm:%s145]
      %155 = vst [vmem:[%s153] sm:%s145] %v154
    $region138: #{condlanenet_forward.1} parent=132 // loop_footer
      %s151 = sadd.s32 1, %s147
    $region139: #{condlanenet_forward.1} parent=132 // loop_footer_branch
      %146 = sbr.rel target = $region135
    $region140: #{condlanenet_forward.1} parent=132 // loop_exit
      _
  $region133: #{condlanenet_forward.1} parent=0 // pred_fallthru
    _
  // Predicated region
  $region156: #{condlanenet_forward.1} parent=0 // pred_check
    _
  $region157: #{condlanenet_forward.1} parent=0 // pred_check_branch
    %431 = sbr.rel (0) target = $region159
  $region158: #{condlanenet_forward.1} parent=0 // pred_region
    %432 = vsyncadd [#allocation4], 16384
  $region159: #{condlanenet_forward.1} parent=0 // pred_fallthru
    _
  %s433 = scalar_lea.sflag [#allocation4], 1
  %p435 = scmp.lt.u32.totalorder 512, 8
  %p436 = pneg %p435
  // Predicated region
  $region160: #{condlanenet_forward.1} parent=0 // pred_check
    _
  $region161: #{condlanenet_forward.1} parent=0 // pred_check_branch
    %438 = sbr.rel (%p435) target = $region163
  $region162: #{condlanenet_forward.1} parent=0 // pred_region
    %s453 = sand.u32 512, 7
    %p454 = scmp.eq.s32.totalorder %s453, 0
    // Predicated region
    $region175: #{condlanenet_forward.1} parent=162 // pred_check
      %p455 = pneg %p454
    $region176: #{condlanenet_forward.1} parent=162 // pred_check_branch
      %457 = sbr.rel (%p455) target = $region178
    $region177: #{condlanenet_forward.1} parent=162 // pred_region
      loop: start=0, step=1, limit=1
      $region179: #{condlanenet_forward.1} parent=177 // loop_pre_header
        _
      $region180: #{condlanenet_forward.1} parent=177 // loop_header
        %s459 = sphi 0, %s463
        %p460 = scmp.ge.s32.totalorder %s459, 1
        %s464 = sphi %s65, %s65
        %s465 = sphi [#allocation3], [#allocation3]
      $region181: #{condlanenet_forward.1} parent=177 // loop_header_branch
        %462 = sbr.rel (%p460) target = $region185
      $region182: #{condlanenet_forward.1} parent=177 // loop_body
        %v466 = vld [vmem:[%s464] sm:$0xff]
        %467 = vst [vmem:[%s465] sm:$0xff] %v466
        %v468 = vld [vmem:[%s464 + $0x8] sm:$0xff]
        %469 = vst [vmem:[%s465 + $0x8] sm:$0xff] %v468
        %v470 = vld [vmem:[%s464 + $0x10] sm:$0xff]
        %471 = vst [vmem:[%s465 + $0x10] sm:$0xff] %v470
        %v472 = vld [vmem:[%s464 + $0x18] sm:$0xff]
        %473 = vst [vmem:[%s465 + $0x18] sm:$0xff] %v472
        %v474 = vld [vmem:[%s464 + $0x20] sm:$0xff]
        %475 = vst [vmem:[%s465 + $0x20] sm:$0xff] %v474
        %v476 = vld [vmem:[%s464 + $0x28] sm:$0xff]
        %477 = vst [vmem:[%s465 + $0x28] sm:$0xff] %v476
        %v478 = vld [vmem:[%s464 + $0x30] sm:$0xff]
        %479 = vst [vmem:[%s465 + $0x30] sm:$0xff] %v478
        %v480 = vld [vmem:[%s464 + $0x38] sm:$0xff]
        %481 = vst [vmem:[%s465 + $0x38] sm:$0xff] %v480
        %v482 = vld [vmem:[%s464 + $0x40] sm:$0xff]
        %483 = vst [vmem:[%s465 + $0x40] sm:$0xff] %v482
        %v484 = vld [vmem:[%s464 + $0x48] sm:$0xff]
        %485 = vst [vmem:[%s465 + $0x48] sm:$0xff] %v484
        %v486 = vld [vmem:[%s464 + $0x50] sm:$0xff]
        %487 = vst [vmem:[%s465 + $0x50] sm:$0xff] %v486
        %v488 = vld [vmem:[%s464 + $0x58] sm:$0xff]
        %489 = vst [vmem:[%s465 + $0x58] sm:$0xff] %v488
        %v490 = vld [vmem:[%s464 + $0x60] sm:$0xff]
        %491 = vst [vmem:[%s465 + $0x60] sm:$0xff] %v490
        %v492 = vld [vmem:[%s464 + $0x68] sm:$0xff]
        %493 = vst [vmem:[%s465 + $0x68] sm:$0xff] %v492
        %v494 = vld [vmem:[%s464 + $0x70] sm:$0xff]
        %495 = vst [vmem:[%s465 + $0x70] sm:$0xff] %v494
        %v496 = vld [vmem:[%s464 + $0x78] sm:$0xff]
        %497 = vst [vmem:[%s465 + $0x78] sm:$0xff] %v496
        %v498 = vld [vmem:[%s464 + $0x80] sm:$0xff]
        %499 = vst [vmem:[%s465 + $0x80] sm:$0xff] %v498
        %v500 = vld [vmem:[%s464 + $0x88] sm:$0xff]
        %501 = vst [vmem:[%s465 + $0x88] sm:$0xff] %v500
        %v502 = vld [vmem:[%s464 + $0x90] sm:$0xff]
        %503 = vst [vmem:[%s465 + $0x90] sm:$0xff] %v502
        %v504 = vld [vmem:[%s464 + $0x98] sm:$0xff]
        %505 = vst [vmem:[%s465 + $0x98] sm:$0xff] %v504
        %v506 = vld [vmem:[%s464 + $0xa0] sm:$0xff]
        %507 = vst [vmem:[%s465 + $0xa0] sm:$0xff] %v506
        %v508 = vld [vmem:[%s464 + $0xa8] sm:$0xff]
        %509 = vst [vmem:[%s465 + $0xa8] sm:$0xff] %v508
        %v510 = vld [vmem:[%s464 + $0xb0] sm:$0xff]
        %511 = vst [vmem:[%s465 + $0xb0] sm:$0xff] %v510
        %v512 = vld [vmem:[%s464 + $0xb8] sm:$0xff]
        %513 = vst [vmem:[%s465 + $0xb8] sm:$0xff] %v512
        %v514 = vld [vmem:[%s464 + $0xc0] sm:$0xff]
        %515 = vst [vmem:[%s465 + $0xc0] sm:$0xff] %v514
        %v516 = vld [vmem:[%s464 + $0xc8] sm:$0xff]
        %517 = vst [vmem:[%s465 + $0xc8] sm:$0xff] %v516
        %v518 = vld [vmem:[%s464 + $0xd0] sm:$0xff]
        %519 = vst [vmem:[%s465 + $0xd0] sm:$0xff] %v518
        %v520 = vld [vmem:[%s464 + $0xd8] sm:$0xff]
        %521 = vst [vmem:[%s465 + $0xd8] sm:$0xff] %v520
        %v522 = vld [vmem:[%s464 + $0xe0] sm:$0xff]
        %523 = vst [vmem:[%s465 + $0xe0] sm:$0xff] %v522
        %v524 = vld [vmem:[%s464 + $0xe8] sm:$0xff]
        %525 = vst [vmem:[%s465 + $0xe8] sm:$0xff] %v524
        %v526 = vld [vmem:[%s464 + $0xf0] sm:$0xff]
        %527 = vst [vmem:[%s465 + $0xf0] sm:$0xff] %v526
        %v528 = vld [vmem:[%s464 + $0xf8] sm:$0xff]
        %529 = vst [vmem:[%s465 + $0xf8] sm:$0xff] %v528
        %v530 = vld [vmem:[%s464 + $0x100] sm:$0xff]
        %531 = vst [vmem:[%s465 + $0x100] sm:$0xff] %v530
        %v532 = vld [vmem:[%s464 + $0x108] sm:$0xff]
        %533 = vst [vmem:[%s465 + $0x108] sm:$0xff] %v532
        %v534 = vld [vmem:[%s464 + $0x110] sm:$0xff]
        %535 = vst [vmem:[%s465 + $0x110] sm:$0xff] %v534
        %v536 = vld [vmem:[%s464 + $0x118] sm:$0xff]
        %537 = vst [vmem:[%s465 + $0x118] sm:$0xff] %v536
        %v538 = vld [vmem:[%s464 + $0x120] sm:$0xff]
        %539 = vst [vmem:[%s465 + $0x120] sm:$0xff] %v538
        %v540 = vld [vmem:[%s464 + $0x128] sm:$0xff]
        %541 = vst [vmem:[%s465 + $0x128] sm:$0xff] %v540
        %v542 = vld [vmem:[%s464 + $0x130] sm:$0xff]
        %543 = vst [vmem:[%s465 + $0x130] sm:$0xff] %v542
        %v544 = vld [vmem:[%s464 + $0x138] sm:$0xff]
        %545 = vst [vmem:[%s465 + $0x138] sm:$0xff] %v544
        %v546 = vld [vmem:[%s464 + $0x140] sm:$0xff]
        %547 = vst [vmem:[%s465 + $0x140] sm:$0xff] %v546
        %v548 = vld [vmem:[%s464 + $0x148] sm:$0xff]
        %549 = vst [vmem:[%s465 + $0x148] sm:$0xff] %v548
        %v550 = vld [vmem:[%s464 + $0x150] sm:$0xff]
        %551 = vst [vmem:[%s465 + $0x150] sm:$0xff] %v550
        %v552 = vld [vmem:[%s464 + $0x158] sm:$0xff]
        %553 = vst [vmem:[%s465 + $0x158] sm:$0xff] %v552
        %v554 = vld [vmem:[%s464 + $0x160] sm:$0xff]
        %555 = vst [vmem:[%s465 + $0x160] sm:$0xff] %v554
        %v556 = vld [vmem:[%s464 + $0x168] sm:$0xff]
        %557 = vst [vmem:[%s465 + $0x168] sm:$0xff] %v556
        %v558 = vld [vmem:[%s464 + $0x170] sm:$0xff]
        %559 = vst [vmem:[%s465 + $0x170] sm:$0xff] %v558
        %v560 = vld [vmem:[%s464 + $0x178] sm:$0xff]
        %561 = vst [vmem:[%s465 + $0x178] sm:$0xff] %v560
        %v562 = vld [vmem:[%s464 + $0x180] sm:$0xff]
        %563 = vst [vmem:[%s465 + $0x180] sm:$0xff] %v562
        %v564 = vld [vmem:[%s464 + $0x188] sm:$0xff]
        %565 = vst [vmem:[%s465 + $0x188] sm:$0xff] %v564
        %v566 = vld [vmem:[%s464 + $0x190] sm:$0xff]
        %567 = vst [vmem:[%s465 + $0x190] sm:$0xff] %v566
        %v568 = vld [vmem:[%s464 + $0x198] sm:$0xff]
        %569 = vst [vmem:[%s465 + $0x198] sm:$0xff] %v568
        %v570 = vld [vmem:[%s464 + $0x1a0] sm:$0xff]
        %571 = vst [vmem:[%s465 + $0x1a0] sm:$0xff] %v570
        %v572 = vld [vmem:[%s464 + $0x1a8] sm:$0xff]
        %573 = vst [vmem:[%s465 + $0x1a8] sm:$0xff] %v572
        %v574 = vld [vmem:[%s464 + $0x1b0] sm:$0xff]
        %575 = vst [vmem:[%s465 + $0x1b0] sm:$0xff] %v574
        %v576 = vld [vmem:[%s464 + $0x1b8] sm:$0xff]
        %577 = vst [vmem:[%s465 + $0x1b8] sm:$0xff] %v576
        %v578 = vld [vmem:[%s464 + $0x1c0] sm:$0xff]
        %579 = vst [vmem:[%s465 + $0x1c0] sm:$0xff] %v578
        %v580 = vld [vmem:[%s464 + $0x1c8] sm:$0xff]
        %581 = vst [vmem:[%s465 + $0x1c8] sm:$0xff] %v580
        %v582 = vld [vmem:[%s464 + $0x1d0] sm:$0xff]
        %583 = vst [vmem:[%s465 + $0x1d0] sm:$0xff] %v582
        %v584 = vld [vmem:[%s464 + $0x1d8] sm:$0xff]
        %585 = vst [vmem:[%s465 + $0x1d8] sm:$0xff] %v584
        %v586 = vld [vmem:[%s464 + $0x1e0] sm:$0xff]
        %587 = vst [vmem:[%s465 + $0x1e0] sm:$0xff] %v586
        %v588 = vld [vmem:[%s464 + $0x1e8] sm:$0xff]
        %589 = vst [vmem:[%s465 + $0x1e8] sm:$0xff] %v588
        %v590 = vld [vmem:[%s464 + $0x1f0] sm:$0xff]
        %591 = vst [vmem:[%s465 + $0x1f0] sm:$0xff] %v590
        %v592 = vld [vmem:[%s464 + $0x1f8] sm:$0xff]
        %593 = vst [vmem:[%s465 + $0x1f8] sm:$0xff] %v592
      $region183: #{condlanenet_forward.1} parent=177 // loop_footer
        %s463 = sadd.s32 1, %s459
      $region184: #{condlanenet_forward.1} parent=177 // loop_footer_branch
        %458 = sbr.rel target = $region180
      $region185: #{condlanenet_forward.1} parent=177 // loop_exit
        _
    $region178: #{condlanenet_forward.1} parent=162 // pred_fallthru
      _
    %p594 = pneg %p454
    // Predicated region
    $region186: #{condlanenet_forward.1} parent=162 // pred_check
      _
    $region187: #{condlanenet_forward.1} parent=162 // pred_check_branch
      %596 = sbr.rel (%p454) target = $region189
    $region188: #{condlanenet_forward.1} parent=162 // pred_region
      %s597 = sand.u32 512, 7
    $region189: #{condlanenet_forward.1} parent=162 // pred_fallthru
      _
  $region163: #{condlanenet_forward.1} parent=0 // pred_fallthru
    _
  // Predicated region
  $region164: #{condlanenet_forward.1} parent=0 // pred_check
    %p439 = pneg %p435
  $region165: #{condlanenet_forward.1} parent=0 // pred_check_branch
    %441 = sbr.rel (%p439) target = $region167
  $region166: #{condlanenet_forward.1} parent=0 // pred_region
    %s442 = sshllo.u32 0, 512
    loop: start=0, step=1, limit=1
    $region168: #{condlanenet_forward.1} parent=166 // loop_pre_header
      _
    $region169: #{condlanenet_forward.1} parent=166 // loop_header
      %s444 = sphi 0, %s448
      %p445 = scmp.ge.s32.totalorder %s444, 1
      %s449 = sphi %s65, %s65
      %s450 = sphi [#allocation3], [#allocation3]
    $region170: #{condlanenet_forward.1} parent=166 // loop_header_branch
      %447 = sbr.rel (%p445) target = $region174
    $region171: #{condlanenet_forward.1} parent=166 // loop_body
      %v451 = vld [vmem:[%s449] sm:%s442]
      %452 = vst [vmem:[%s450] sm:%s442] %v451
    $region172: #{condlanenet_forward.1} parent=166 // loop_footer
      %s448 = sadd.s32 1, %s444
    $region173: #{condlanenet_forward.1} parent=166 // loop_footer_branch
      %443 = sbr.rel target = $region169
    $region174: #{condlanenet_forward.1} parent=166 // loop_exit
      _
  $region167: #{condlanenet_forward.1} parent=0 // pred_fallthru
    _
  // Predicated region
  $region190: #{condlanenet_forward.1} parent=0 // pred_check
    _
  $region191: #{condlanenet_forward.1} parent=0 // pred_check_branch
    %600 = sbr.rel (0) target = $region193
  $region192: #{condlanenet_forward.1} parent=0 // pred_region
    %601 = vsyncadd %s433, 8192
  $region193: #{condlanenet_forward.1} parent=0 // pred_fallthru
    _
  %v602 = vld [vmem:[%s1] sm:$0x77]
  %v603 = vld [vmem:[%s3] sm:$0xff]
  %v604 = vld [vmem:[%s5] sm:$0xff]
  %606 = vset.pattern.permute.xlu0 0
  %607 = vperm.xlu0 %606, %v604
  %v608 = vpop.permute.xlu0 %607
  %v611 = vcombine.high %v602, %v602
  %vm612 = vcmask 23552
  %v614 = vsel %vm612, %v603, 0
  %vm616 = vcmask 1042432
  %v617 = vsel %vm616, %v602, 0
  %v619 = vsel %vm616, %v611, 0
  %621 = vmatprep.subr.mxu0 %v619
  %622 = vmatpush1.msra.mxu0 %v617
  %623 = vmatprep.subr.mxu0 0.0
  %624 = vmatpush1.msra.mxu0 0.0
  %625 = vmatprep.subr.mxu0 0.0
  %626 = vmatpush1.msra.mxu0 0.0
  %627 = vmatprep.subr.mxu0 0.0
  %628 = vmatpush1.msra.mxu0 0.0
  %629 = vmatprep.subr.mxu0 0.0
  %630 = vmatpush1.msra.mxu0 0.0
  %631 = vmatprep.subr.mxu0 0.0
  %632 = vmatpush1.msra.mxu0 0.0
  %633 = vmatprep.subr.mxu0 0.0
  %634 = vmatpush1.msra.mxu0 0.0
  %635 = vmatprep.subr.mxu0 0.0
  %636 = vmatpush1.msra.mxu0 0.0
  %637 = vmatprep.subr.mxu0 0.0
  %638 = vmatpush1.msra.mxu0 0.0
  %639 = vmatprep.subr.mxu0 0.0
  %640 = vmatpush1.msra.mxu0 0.0
  %641 = vmatprep.subr.mxu0 0.0
  %642 = vmatpush1.msra.mxu0 0.0
  %643 = vmatprep.subr.mxu0 0.0
  %644 = vmatpush1.msra.mxu0 0.0
  %645 = vmatprep.subr.mxu0 0.0
  %646 = vmatpush1.msra.mxu0 0.0
  %647 = vmatprep.subr.mxu0 0.0
  %648 = vmatpush1.msra.mxu0 0.0
  %649 = vmatprep.subr.mxu0 0.0
  %650 = vmatpush1.msra.mxu0 0.0
  %651 = vmatprep.subr.mxu0 0.0
  %652 = vmatpush1.msra.mxu0 0.0
  %653 = vmatprep.subr.mxu0 0.0
  %654 = vmatpush1.msra.mxu0 0.0
  %655 = vmatprep.subr.mxu0 0.0
  %656 = vmatpush1.msra.mxu0 0.0
  %657 = vmatprep.subr.mxu0 0.0
  %658 = vmatpush1.msra.mxu0 0.0
  %659 = vmatprep.subr.mxu0 0.0
  %660 = vmatpush1.msra.mxu0 0.0
  %661 = vmatprep.subr.mxu0 0.0
  %662 = vmatpush1.msra.mxu0 0.0
  %663 = vmatprep.subr.mxu0 0.0
  %664 = vmatpush1.msra.mxu0 0.0
  %665 = vmatprep.subr.mxu0 0.0
  %666 = vmatpush1.msra.mxu0 0.0
  %667 = vmatprep.subr.mxu0 0.0
  %668 = vmatpush1.msra.mxu0 0.0
  %669 = vmatprep.subr.mxu0 0.0
  %670 = vmatpush1.msra.mxu0 0.0
  %671 = vmatprep.subr.mxu0 0.0
  %672 = vmatpush1.msra.mxu0 0.0
  %673 = vmatprep.subr.mxu0 0.0
  %674 = vmatpush1.msra.mxu0 0.0
  %675 = vmatprep.subr.mxu0 0.0
  %676 = vmatpush1.msra.mxu0 0.0
  %677 = vmatprep.subr.mxu0 0.0
  %678 = vmatpush1.msra.mxu0 0.0
  %679 = vmatprep.subr.mxu0 0.0
  %680 = vmatpush1.msra.mxu0 0.0
  %681 = vmatprep.subr.mxu0 0.0
  %682 = vmatpush1.msra.mxu0 0.0
  %683 = vmatprep.subr.mxu0 0.0
  %684 = vmatpush1.msra.mxu0 0.0
  %685 = vmatprep.mubr.f32.mxu0 0.0
  %686 = vmatmul.mubr.f32.gmra.mrb[0].mxu0 %v614
  %v687 = vpop.f32.mrb[0].mxu0
  %v688 = vadd.f32 %v608, %v687
  %v689 = vpop.f32.mrb[0].mxu0
  %v690 = vadd.f32 %v608, %v689
  %691 = vdwg.mxu0
  %v692 = vmax.f32 %v688, 0.0
  %v693 = vmax.f32 %v690, 0.0
  %v694 = vld [vmem:[%s39] sm:$0xf]
  %v695 = vld [vmem:[%s39 + $0x4] sm:$0xf]
  %v696 = vld [vmem:[%s39 + $0x8] sm:$0xf]
  %v697 = vld [vmem:[%s39 + $0xc] sm:$0xf]
  %v698 = vld [vmem:[%s39 + $0x10] sm:$0xf]
  %v699 = vld [vmem:[%s39 + $0x14] sm:$0xf]
  %v700 = vld [vmem:[%s39 + $0x18] sm:$0xf]
  %v701 = vld [vmem:[%s39 + $0x1c] sm:$0xf]
  %v702 = vld [vmem:[%s39 + $0x20] sm:$0xf]
  %v703 = vld [vmem:[%s39 + $0x24] sm:$0xf]
  %v704 = vld [vmem:[%s39 + $0x28] sm:$0xf]
  %v705 = vld [vmem:[%s39 + $0x2c] sm:$0xf]
  %v706 = vld [vmem:[%s39 + $0x30] sm:$0xf]
  %v707 = vld [vmem:[%s39 + $0x34] sm:$0xf]
  %v708 = vld [vmem:[%s39 + $0x38] sm:$0xf]
  %v709 = vld [vmem:[%s39 + $0x3c] sm:$0xf]
  %v710 = vld [vmem:[%s39 + $0x40] sm:$0xf]
  %v711 = vld [vmem:[%s39 + $0x44] sm:$0xf]
  %v712 = vld [vmem:[%s39 + $0x48] sm:$0xf]
  %v713 = vld [vmem:[%s39 + $0x4c] sm:$0xf]
  %v714 = vld [vmem:[%s39 + $0x50] sm:$0xf]
  %v715 = vld [vmem:[%s39 + $0x54] sm:$0xf]
  %v716 = vld [vmem:[%s39 + $0x58] sm:$0xf]
  %v717 = vld [vmem:[%s39 + $0x5c] sm:$0xf]
  %v718 = vld [vmem:[%s39 + $0x60] sm:$0xf]
  %v719 = vld [vmem:[%s39 + $0x64] sm:$0xf]
  %v720 = vld [vmem:[%s39 + $0x68] sm:$0xf]
  %v721 = vld [vmem:[%s39 + $0x6c] sm:$0xf]
  %v722 = vld [vmem:[%s39 + $0x70] sm:$0xf]
  %v723 = vld [vmem:[%s39 + $0x74] sm:$0xf]
  %v724 = vld [vmem:[%s39 + $0x78] sm:$0xf]
  %v725 = vld [vmem:[%s39 + $0x7c] sm:$0xf]
  %v726 = vunpack.c.l.bf16 %v694
  %v727 = vunpack.c.l.bf16 %v695
  %v728 = vunpack.c.l.bf16 %v696
  %v729 = vunpack.c.l.bf16 %v697
  %v730 = vunpack.c.l.bf16 %v698
  %v731 = vunpack.c.l.bf16 %v699
  %v732 = vunpack.c.l.bf16 %v700
  %v733 = vunpack.c.l.bf16 %v701
  %v734 = vunpack.c.l.bf16 %v702
  %v735 = vunpack.c.l.bf16 %v703
  %v736 = vunpack.c.l.bf16 %v704
  %v737 = vunpack.c.l.bf16 %v705
  %v738 = vunpack.c.l.bf16 %v706
  %v739 = vunpack.c.l.bf16 %v707
  %v740 = vunpack.c.l.bf16 %v708
  %v741 = vunpack.c.l.bf16 %v709
  %v742 = vunpack.c.l.bf16 %v710
  %v743 = vunpack.c.l.bf16 %v711
  %v744 = vunpack.c.l.bf16 %v712
  %v745 = vunpack.c.l.bf16 %v713
  %v746 = vunpack.c.l.bf16 %v714
  %v747 = vunpack.c.l.bf16 %v715
  %v748 = vunpack.c.l.bf16 %v716
  %v749 = vunpack.c.l.bf16 %v717
  %v750 = vunpack.c.l.bf16 %v718
  %v751 = vunpack.c.l.bf16 %v719
  %v752 = vunpack.c.l.bf16 %v720
  %v753 = vunpack.c.l.bf16 %v721
  %v754 = vunpack.c.l.bf16 %v722
  %v755 = vunpack.c.l.bf16 %v723
  %v756 = vunpack.c.l.bf16 %v724
  %v757 = vunpack.c.l.bf16 %v725
  %758 = vmatprep.subr.mxu0 0.0
  %759 = vmatpush1.msra.mxu0 %v726
  %760 = vmatprep.subr.mxu0 0.0
  %761 = vmatpush1.msra.mxu0 %v727
  %762 = vmatprep.subr.mxu0 0.0
  %763 = vmatpush1.msra.mxu0 %v728
  %764 = vmatprep.subr.mxu0 0.0
  %765 = vmatpush1.msra.mxu0 %v729
  %766 = vmatprep.subr.mxu0 0.0
  %767 = vmatpush1.msra.mxu0 %v730
  %768 = vmatprep.subr.mxu0 0.0
  %769 = vmatpush1.msra.mxu0 %v731
  %770 = vmatprep.subr.mxu0 0.0
  %771 = vmatpush1.msra.mxu0 %v732
  %772 = vmatprep.subr.mxu0 0.0
  %773 = vmatpush1.msra.mxu0 %v733
  %774 = vmatprep.subr.mxu0 0.0
  %775 = vmatpush1.msra.mxu0 %v734
  %776 = vmatprep.subr.mxu0 0.0
  %777 = vmatpush1.msra.mxu0 %v735
  %778 = vmatprep.subr.mxu0 0.0
  %779 = vmatpush1.msra.mxu0 %v736
  %780 = vmatprep.subr.mxu0 0.0
  %781 = vmatpush1.msra.mxu0 %v737
  %782 = vmatprep.subr.mxu0 0.0
  %783 = vmatpush1.msra.mxu0 %v738
  %784 = vmatprep.subr.mxu0 0.0
  %785 = vmatpush1.msra.mxu0 %v739
  %786 = vmatprep.subr.mxu0 0.0
  %787 = vmatpush1.msra.mxu0 %v740
  %788 = vmatprep.subr.mxu0 0.0
  %789 = vmatpush1.msra.mxu0 %v741
  %790 = vmatprep.subr.mxu0 0.0
  %791 = vmatpush1.msra.mxu0 %v742
  %792 = vmatprep.subr.mxu0 0.0
  %793 = vmatpush1.msra.mxu0 %v743
  %794 = vmatprep.subr.mxu0 0.0
  %795 = vmatpush1.msra.mxu0 %v744
  %796 = vmatprep.subr.mxu0 0.0
  %797 = vmatpush1.msra.mxu0 %v745
  %798 = vmatprep.subr.mxu0 0.0
  %799 = vmatpush1.msra.mxu0 %v746
  %800 = vmatprep.subr.mxu0 0.0
  %801 = vmatpush1.msra.mxu0 %v747
  %802 = vmatprep.subr.mxu0 0.0
  %803 = vmatpush1.msra.mxu0 %v748
  %804 = vmatprep.subr.mxu0 0.0
  %805 = vmatpush1.msra.mxu0 %v749
  %806 = vmatprep.subr.mxu0 0.0
  %807 = vmatpush1.msra.mxu0 %v750
  %808 = vmatprep.subr.mxu0 0.0
  %809 = vmatpush1.msra.mxu0 %v751
  %810 = vmatprep.subr.mxu0 0.0
  %811 = vmatpush1.msra.mxu0 %v752
  %812 = vmatprep.subr.mxu0 0.0
  %813 = vmatpush1.msra.mxu0 %v753
  %814 = vmatprep.subr.mxu0 0.0
  %815 = vmatpush1.msra.mxu0 %v754
  %816 = vmatprep.subr.mxu0 0.0
  %817 = vmatpush1.msra.mxu0 %v755
  %818 = vmatprep.subr.mxu0 0.0
  %819 = vmatpush1.msra.mxu0 %v756
  %820 = vmatprep.subr.mxu0 0.0
  %821 = vmatpush1.msra.mxu0 %v757
  %822 = vmatprep.mubr.f32.mxu0 %v693
  %823 = vmatmul.mubr.f32.gmra.mrb[0].mxu0 %v692
  %v824 = vpop.f32.mrb[0].mxu0
  %v825 = vadd.f32 0.0, %v824
  %v826 = vpop.f32.mrb[0].mxu0
  %827 = vdwg.mxu0
  %v828 = vld [vmem:[%s7] sm:$0xff]
  %v829 = vld [vmem:[%s7 + $0x8] sm:$0xff]
  %v830 = vld [vmem:[%s9] sm:$0xff]
  %v831 = vld [vmem:[%s9 + $0x8] sm:$0xff]
  %833 = vset.pattern.permute.xlu0 0
  %834 = vperm.xlu0 %833, %v830
  %v835 = vpop.permute.xlu0 %834
  %838 = vset.pattern.permute.xlu0 0
  %839 = vperm.xlu0 %838, %v831
  %v840 = vpop.permute.xlu0 %839
  %vm842 = vcmask 64512
  %v844 = vsel %vm842, %v828, 0
  %v847 = vsel %vm842, %v829, 0
  %849 = vmatprep.subr.mxu0 0.0
  %850 = vmatpush1.msra.mxu0 %v825
  %851 = vmatprep.subr.mxu0 0.0
  %852 = vmatpush1.msra.mxu0 0.0
  %853 = vmatprep.subr.mxu0 0.0
  %854 = vmatpush1.msra.mxu0 0.0
  %855 = vmatprep.subr.mxu0 0.0
  %856 = vmatpush1.msra.mxu0 0.0
  %857 = vmatprep.subr.mxu0 0.0
  %858 = vmatpush1.msra.mxu0 0.0
  %859 = vmatprep.subr.mxu0 0.0
  %860 = vmatpush1.msra.mxu0 0.0
  %861 = vmatprep.subr.mxu0 0.0
  %862 = vmatpush1.msra.mxu0 0.0
  %863 = vmatprep.subr.mxu0 0.0
  %864 = vmatpush1.msra.mxu0 0.0
  %865 = vmatprep.subr.mxu0 0.0
  %866 = vmatpush1.msra.mxu0 0.0
  %867 = vmatprep.subr.mxu0 0.0
  %868 = vmatpush1.msra.mxu0 0.0
  %869 = vmatprep.subr.mxu0 0.0
  %870 = vmatpush1.msra.mxu0 0.0
  %871 = vmatprep.subr.mxu0 0.0
  %872 = vmatpush1.msra.mxu0 0.0
  %873 = vmatprep.subr.mxu0 0.0
  %874 = vmatpush1.msra.mxu0 0.0
  %875 = vmatprep.subr.mxu0 0.0
  %876 = vmatpush1.msra.mxu0 0.0
  %877 = vmatprep.subr.mxu0 0.0
  %878 = vmatpush1.msra.mxu0 0.0
  %879 = vmatprep.subr.mxu0 0.0
  %880 = vmatpush1.msra.mxu0 0.0
  %881 = vmatprep.subr.mxu0 0.0
  %882 = vmatpush1.msra.mxu0 0.0
  %883 = vmatprep.subr.mxu0 0.0
  %884 = vmatpush1.msra.mxu0 0.0
  %885 = vmatprep.subr.mxu0 0.0
  %886 = vmatpush1.msra.mxu0 0.0
  %887 = vmatprep.subr.mxu0 0.0
  %888 = vmatpush1.msra.mxu0 0.0
  %889 = vmatprep.subr.mxu0 0.0
  %890 = vmatpush1.msra.mxu0 0.0
  %891 = vmatprep.subr.mxu0 0.0
  %892 = vmatpush1.msra.mxu0 0.0
  %893 = vmatprep.subr.mxu0 0.0
  %894 = vmatpush1.msra.mxu0 0.0
  %895 = vmatprep.subr.mxu0 0.0
  %896 = vmatpush1.msra.mxu0 0.0
  %897 = vmatprep.subr.mxu0 0.0
  %898 = vmatpush1.msra.mxu0 0.0
  %899 = vmatprep.subr.mxu0 0.0
  %900 = vmatpush1.msra.mxu0 0.0
  %901 = vmatprep.subr.mxu0 0.0
  %902 = vmatpush1.msra.mxu0 0.0
  %903 = vmatprep.subr.mxu0 0.0
  %904 = vmatpush1.msra.mxu0 0.0
  %905 = vmatprep.subr.mxu0 0.0
  %906 = vmatpush1.msra.mxu0 0.0
  %907 = vmatprep.subr.mxu0 0.0
  %908 = vmatpush1.msra.mxu0 0.0
  %909 = vmatprep.subr.mxu0 0.0
  %910 = vmatpush1.msra.mxu0 0.0
  %911 = vmatprep.subr.mxu0 0.0
  %912 = vmatpush1.msra.mxu0 0.0
  %913 = vmatprep.mubr.f32.mxu0 0.0
  %914 = vmatmul.mubr.f32.gmra.mrb[0].mxu0 %v844
  %v915 = vpop.f32.mrb[0].mxu0
  %v916 = vadd.f32 %v835, %v915
  %v917 = vpop.f32.mrb[0].mxu0
  %918 = vmatprep.mubr.f32.mxu0 0.0
  %919 = vmatmul.mubr.f32.gmra.mrb[0].mxu0 %v847
  %v920 = vpop.f32.mrb[0].mxu0
  %v921 = vadd.f32 %v840, %v920
  %v922 = vpop.f32.mrb[0].mxu0
  %923 = vdwg.mxu0
  %v924 = vmax.f32 %v916, 0.0
  %v925 = vmax.f32 %v921, 0.0
  %v926 = vld [vmem:[%s41] sm:$0xf]
  %v927 = vld [vmem:[%s41 + $0x4] sm:$0xf]
  %v928 = vld [vmem:[%s41 + $0x8] sm:$0xf]
  %v929 = vld [vmem:[%s41 + $0xc] sm:$0xf]
  %v930 = vld [vmem:[%s41 + $0x10] sm:$0xf]
  %v931 = vld [vmem:[%s41 + $0x14] sm:$0xf]
  %v932 = vld [vmem:[%s41 + $0x18] sm:$0xf]
  %v933 = vld [vmem:[%s41 + $0x1c] sm:$0xf]
  %v934 = vunpack.c.l.bf16 %v926
  %v935 = vunpack.c.l.bf16 %v927
  %v936 = vunpack.c.l.bf16 %v928
  %v937 = vunpack.c.l.bf16 %v929
  %v938 = vunpack.c.l.bf16 %v930
  %v939 = vunpack.c.l.bf16 %v931
  %v940 = vunpack.c.l.bf16 %v932
  %v941 = vunpack.c.l.bf16 %v933
  %vm942 = vcmask 523264
  %v944 = vsel %vm942, %v924, 0
  %v947 = vsel %vm942, %v925, 0
  %949 = vmatprep.subr.mxu0 0.0
  %950 = vmatpush1.msra.mxu0 %v934
  %951 = vmatprep.subr.mxu0 0.0
  %952 = vmatpush1.msra.mxu0 %v935
  %953 = vmatprep.subr.mxu0 0.0
  %954 = vmatpush1.msra.mxu0 %v936
  %955 = vmatprep.subr.mxu0 0.0
  %956 = vmatpush1.msra.mxu0 %v937
  %957 = vmatprep.subr.mxu0 0.0
  %958 = vmatpush1.msra.mxu0 %v938
  %959 = vmatprep.subr.mxu0 0.0
  %960 = vmatpush1.msra.mxu0 %v939
  %961 = vmatprep.subr.mxu0 0.0
  %962 = vmatpush1.msra.mxu0 %v940
  %963 = vmatprep.subr.mxu0 0.0
  %964 = vmatpush1.msra.mxu0 %v941
  %965 = vmatprep.subr.mxu0 0.0
  %966 = vmatpush1.msra.mxu0 0.0
  %967 = vmatprep.subr.mxu0 0.0
  %968 = vmatpush1.msra.mxu0 0.0
  %969 = vmatprep.subr.mxu0 0.0
  %970 = vmatpush1.msra.mxu0 0.0
  %971 = vmatprep.subr.mxu0 0.0
  %972 = vmatpush1.msra.mxu0 0.0
  %973 = vmatprep.subr.mxu0 0.0
  %974 = vmatpush1.msra.mxu0 0.0
  %975 = vmatprep.subr.mxu0 0.0
  %976 = vmatpush1.msra.mxu0 0.0
  %977 = vmatprep.subr.mxu0 0.0
  %978 = vmatpush1.msra.mxu0 0.0
  %979 = vmatprep.subr.mxu0 0.0
  %980 = vmatpush1.msra.mxu0 0.0
  %981 = vmatprep.subr.mxu0 0.0
  %982 = vmatpush1.msra.mxu0 0.0
  %983 = vmatprep.subr.mxu0 0.0
  %984 = vmatpush1.msra.mxu0 0.0
  %985 = vmatprep.subr.mxu0 0.0
  %986 = vmatpush1.msra.mxu0 0.0
  %987 = vmatprep.subr.mxu0 0.0
  %988 = vmatpush1.msra.mxu0 0.0
  %989 = vmatprep.subr.mxu0 0.0
  %990 = vmatpush1.msra.mxu0 0.0
  %991 = vmatprep.subr.mxu0 0.0
  %992 = vmatpush1.msra.mxu0 0.0
  %993 = vmatprep.subr.mxu0 0.0
  %994 = vmatpush1.msra.mxu0 0.0
  %995 = vmatprep.subr.mxu0 0.0
  %996 = vmatpush1.msra.mxu0 0.0
  %997 = vmatprep.subr.mxu0 0.0
  %998 = vmatpush1.msra.mxu0 0.0
  %999 = vmatprep.subr.mxu0 0.0
  %1000 = vmatpush1.msra.mxu0 0.0
  %1001 = vmatprep.subr.mxu0 0.0
  %1002 = vmatpush1.msra.mxu0 0.0
  %1003 = vmatprep.subr.mxu0 0.0
  %1004 = vmatpush1.msra.mxu0 0.0
  %1005 = vmatprep.subr.mxu0 0.0
  %1006 = vmatpush1.msra.mxu0 0.0
  %1007 = vmatprep.subr.mxu0 0.0
  %1008 = vmatpush1.msra.mxu0 0.0
  %1009 = vmatprep.subr.mxu0 0.0
  %1010 = vmatpush1.msra.mxu0 0.0
  %1011 = vmatprep.subr.mxu0 0.0
  %1012 = vmatpush1.msra.mxu0 0.0
  %1013 = vmatprep.mubr.f32.mxu0 0.0
  %1014 = vmatmul.mubr.f32.gmra.mrb[0].mxu0 %v944
  %v1015 = vpop.f32.mrb[0].mxu0
  %v1016 = vadd.f32 0.0, %v1015
  %v1017 = vpop.f32.mrb[0].mxu0
  %1018 = vmatprep.mubr.f32.mxu0 0.0
  %1019 = vmatmul.mubr.f32.gmra.mrb[0].mxu0 %v947
  %v1020 = vpop.f32.mrb[0].mxu0
  %v1021 = vadd.f32 0.0, %v1020
  %v1022 = vpop.f32.mrb[0].mxu0
  %1023 = vdwg.mxu0
  %v1024 = vld [vmem:[%s11] sm:$0xff]
  %v1025 = vld [vmem:[%s11 + $0x8] sm:$0xff]
  %v1026 = vld [vmem:[%s11 + $0x10] sm:$0xff]
  %v1027 = vld [vmem:[%s11 + $0x18] sm:$0xff]
  %v1028 = vld [vmem:[%s13] sm:$0xff]
  %v1029 = vld [vmem:[%s13 + $0x8] sm:$0xff]
  %v1030 = vld [vmem:[%s13 + $0x10] sm:$0xff]
  %v1031 = vld [vmem:[%s13 + $0x18] sm:$0xff]
  %1033 = vset.pattern.permute.xlu0 0
  %1034 = vperm.xlu0 %1033, %v1028
  %v1035 = vpop.permute.xlu0 %1034
  %1038 = vset.pattern.permute.xlu0 0
  %1039 = vperm.xlu0 %1038, %v1029
  %v1040 = vpop.permute.xlu0 %1039
  %1043 = vset.pattern.permute.xlu0 0
  %1044 = vperm.xlu0 %1043, %v1030
  %v1045 = vpop.permute.xlu0 %1044
  %1048 = vset.pattern.permute.xlu0 0
  %1049 = vperm.xlu0 %1048, %v1031
  %v1050 = vpop.permute.xlu0 %1049
  %vm1052 = vcmask 130048
  %v1054 = vsel %vm1052, %v1024, 0
  %v1057 = vsel %vm1052, %v1025, 0
  %v1060 = vsel %vm1052, %v1026, 0
  %v1063 = vsel %vm1052, %v1027, 0
  %1065 = vmatprep.subr.mxu0 0.0
  %1066 = vmatpush1.msra.mxu0 %v1016
  %1067 = vmatprep.subr.mxu0 0.0
  %1068 = vmatpush1.msra.mxu0 %v1021
  %1069 = vmatprep.subr.mxu0 0.0
  %1070 = vmatpush1.msra.mxu0 0.0
  %1071 = vmatprep.subr.mxu0 0.0
  %1072 = vmatpush1.msra.mxu0 0.0
  %1073 = vmatprep.subr.mxu0 0.0
  %1074 = vmatpush1.msra.mxu0 0.0
  %1075 = vmatprep.subr.mxu0 0.0
  %1076 = vmatpush1.msra.mxu0 0.0
  %1077 = vmatprep.subr.mxu0 0.0
  %1078 = vmatpush1.msra.mxu0 0.0
  %1079 = vmatprep.subr.mxu0 0.0
  %1080 = vmatpush1.msra.mxu0 0.0
  %1081 = vmatprep.subr.mxu0 0.0
  %1082 = vmatpush1.msra.mxu0 0.0
  %1083 = vmatprep.subr.mxu0 0.0
  %1084 = vmatpush1.msra.mxu0 0.0
  %1085 = vmatprep.subr.mxu0 0.0
  %1086 = vmatpush1.msra.mxu0 0.0
  %1087 = vmatprep.subr.mxu0 0.0
  %1088 = vmatpush1.msra.mxu0 0.0
  %1089 = vmatprep.subr.mxu0 0.0
  %1090 = vmatpush1.msra.mxu0 0.0
  %1091 = vmatprep.subr.mxu0 0.0
  %1092 = vmatpush1.msra.mxu0 0.0
  %1093 = vmatprep.subr.mxu0 0.0
  %1094 = vmatpush1.msra.mxu0 0.0
  %1095 = vmatprep.subr.mxu0 0.0
  %1096 = vmatpush1.msra.mxu0 0.0
  %1097 = vmatprep.subr.mxu0 0.0
  %1098 = vmatpush1.msra.mxu0 0.0
  %1099 = vmatprep.subr.mxu0 0.0
  %1100 = vmatpush1.msra.mxu0 0.0
  %1101 = vmatprep.subr.mxu0 0.0
  %1102 = vmatpush1.msra.mxu0 0.0
  %1103 = vmatprep.subr.mxu0 0.0
  %1104 = vmatpush1.msra.mxu0 0.0
  %1105 = vmatprep.subr.mxu0 0.0
  %1106 = vmatpush1.msra.mxu0 0.0
  %1107 = vmatprep.subr.mxu0 0.0
  %1108 = vmatpush1.msra.mxu0 0.0
  %1109 = vmatprep.subr.mxu0 0.0
  %1110 = vmatpush1.msra.mxu0 0.0
  %1111 = vmatprep.subr.mxu0 0.0
  %1112 = vmatpush1.msra.mxu0 0.0
  %1113 = vmatprep.subr.mxu0 0.0
  %1114 = vmatpush1.msra.mxu0 0.0
  %1115 = vmatprep.subr.mxu0 0.0
  %1116 = vmatpush1.msra.mxu0 0.0
  %1117 = vmatprep.subr.mxu0 0.0
  %1118 = vmatpush1.msra.mxu0 0.0
  %1119 = vmatprep.subr.mxu0 0.0
  %1120 = vmatpush1.msra.mxu0 0.0
  %1121 = vmatprep.subr.mxu0 0.0
  %1122 = vmatpush1.msra.mxu0 0.0
  %1123 = vmatprep.subr.mxu0 0.0
  %1124 = vmatpush1.msra.mxu0 0.0
  %1125 = vmatprep.subr.mxu0 0.0
  %1126 = vmatpush1.msra.mxu0 0.0
  %1127 = vmatprep.subr.mxu0 0.0
  %1128 = vmatpush1.msra.mxu0 0.0
  %1129 = vmatprep.mubr.f32.mxu0 0.0
  %1130 = vmatmul.mubr.f32.gmra.mrb[0].mxu0 %v1054
  %v1131 = vpop.f32.mrb[0].mxu0
  %v1132 = vadd.f32 %v1035, %v1131
  %v1133 = vpop.f32.mrb[0].mxu0
  %1134 = vmatprep.mubr.f32.mxu0 0.0
  %1135 = vmatmul.mubr.f32.gmra.mrb[0].mxu0 %v1057
  %v1136 = vpop.f32.mrb[0].mxu0
  %v1137 = vadd.f32 %v1040, %v1136
  %v1138 = vpop.f32.mrb[0].mxu0
  %1139 = vmatprep.mubr.f32.mxu0 0.0
  %1140 = vmatmul.mubr.f32.gmra.mrb[0].mxu0 %v1060
  %v1141 = vpop.f32.mrb[0].mxu0
  %v1142 = vadd.f32 %v1045, %v1141
  %v1143 = vpop.f32.mrb[0].mxu0
  %1144 = vmatprep.mubr.f32.mxu0 0.0
  %1145 = vmatmul.mubr.f32.gmra.mrb[0].mxu0 %v1063
  %v1146 = vpop.f32.mrb[0].mxu0
  %v1147 = vadd.f32 %v1050, %v1146
  %v1148 = vpop.f32.mrb[0].mxu0
  %1149 = vdwg.mxu0
  %v1150 = vmax.f32 %v1132, 0.0
  %v1151 = vmax.f32 %v1137, 0.0
  %v1152 = vmax.f32 %v1142, 0.0
  %v1153 = vmax.f32 %v1147, 0.0
  %v1154 = vld [vmem:[%s23] sm:$0xff]
  %v1155 = vld [vmem:[%s23 + $0x8] sm:$0xff]
  %v1156 = vld [vmem:[%s25] sm:$0xff]
  %v1157 = vld [vmem:[%s25 + $0x8] sm:$0xff]
  %1159 = vset.pattern.permute.xlu0 0
  %1160 = vperm.xlu0 %1159, %v1156
  %v1161 = vpop.permute.xlu0 %1160
  %1164 = vset.pattern.permute.xlu0 0
  %1165 = vperm.xlu0 %1164, %v1157
  %v1166 = vpop.permute.xlu0 %1165
  %vm1168 = vcmask 261120
  %v1170 = vsel %vm1168, %v1154, 0
  %v1173 = vsel %vm1168, %v1155, 0
  %1175 = vmatprep.subr.mxu0 0.0
  %1176 = vmatpush1.msra.mxu0 %v1150
  %1177 = vmatprep.subr.mxu0 0.0
  %1178 = vmatpush1.msra.mxu0 %v1151
  %1179 = vmatprep.subr.mxu0 0.0
  %1180 = vmatpush1.msra.mxu0 %v1152
  %1181 = vmatprep.subr.mxu0 0.0
  %1182 = vmatpush1.msra.mxu0 %v1153
  %1183 = vmatprep.subr.mxu0 0.0
  %1184 = vmatpush1.msra.mxu0 0.0
  %1185 = vmatprep.subr.mxu0 0.0
  %1186 = vmatpush1.msra.mxu0 0.0
  %1187 = vmatprep.subr.mxu0 0.0
  %1188 = vmatpush1.msra.mxu0 0.0
  %1189 = vmatprep.subr.mxu0 0.0
  %1190 = vmatpush1.msra.mxu0 0.0
  %1191 = vmatprep.subr.mxu0 0.0
  %1192 = vmatpush1.msra.mxu0 0.0
  %1193 = vmatprep.subr.mxu0 0.0
  %1194 = vmatpush1.msra.mxu0 0.0
  %1195 = vmatprep.subr.mxu0 0.0
  %1196 = vmatpush1.msra.mxu0 0.0
  %1197 = vmatprep.subr.mxu0 0.0
  %1198 = vmatpush1.msra.mxu0 0.0
  %1199 = vmatprep.subr.mxu0 0.0
  %1200 = vmatpush1.msra.mxu0 0.0
  %1201 = vmatprep.subr.mxu0 0.0
  %1202 = vmatpush1.msra.mxu0 0.0
  %1203 = vmatprep.subr.mxu0 0.0
  %1204 = vmatpush1.msra.mxu0 0.0
  %1205 = vmatprep.subr.mxu0 0.0
  %1206 = vmatpush1.msra.mxu0 0.0
  %1207 = vmatprep.subr.mxu0 0.0
  %1208 = vmatpush1.msra.mxu0 0.0
  %1209 = vmatprep.subr.mxu0 0.0
  %1210 = vmatpush1.msra.mxu0 0.0
  %1211 = vmatprep.subr.mxu0 0.0
  %1212 = vmatpush1.msra.mxu0 0.0
  %1213 = vmatprep.subr.mxu0 0.0
  %1214 = vmatpush1.msra.mxu0 0.0
  %1215 = vmatprep.subr.mxu0 0.0
  %1216 = vmatpush1.msra.mxu0 0.0
  %1217 = vmatprep.subr.mxu0 0.0
  %1218 = vmatpush1.msra.mxu0 0.0
  %1219 = vmatprep.subr.mxu0 0.0
  %1220 = vmatpush1.msra.mxu0 0.0
  %1221 = vmatprep.subr.mxu0 0.0
  %1222 = vmatpush1.msra.mxu0 0.0
  %1223 = vmatprep.subr.mxu0 0.0
  %1224 = vmatpush1.msra.mxu0 0.0
  %1225 = vmatprep.subr.mxu0 0.0
  %1226 = vmatpush1.msra.mxu0 0.0
  %1227 = vmatprep.subr.mxu0 0.0
  %1228 = vmatpush1.msra.mxu0 0.0
  %1229 = vmatprep.subr.mxu0 0.0
  %1230 = vmatpush1.msra.mxu0 0.0
  %1231 = vmatprep.subr.mxu0 0.0
  %1232 = vmatpush1.msra.mxu0 0.0
  %1233 = vmatprep.subr.mxu0 0.0
  %1234 = vmatpush1.msra.mxu0 0.0
  %1235 = vmatprep.subr.mxu0 0.0
  %1236 = vmatpush1.msra.mxu0 0.0
  %1237 = vmatprep.subr.mxu0 0.0
  %1238 = vmatpush1.msra.mxu0 0.0
  %1239 = vmatprep.mubr.f32.mxu0 0.0
  %1240 = vmatmul.mubr.f32.gmra.mrb[0].mxu0 %v1170
  %v1241 = vpop.f32.mrb[0].mxu0
  %v1242 = vadd.f32 %v1161, %v1241
  %v1243 = vpop.f32.mrb[0].mxu0
  %1244 = vmatprep.mubr.f32.mxu0 0.0
  %1245 = vmatmul.mubr.f32.gmra.mrb[0].mxu0 %v1173
  %v1246 = vpop.f32.mrb[0].mxu0
  %v1247 = vadd.f32 %v1166, %v1246
  %v1248 = vpop.f32.mrb[0].mxu0
  %1249 = vdwg.mxu0
  %v1250 = vld [vmem:[%s19] sm:$0xff]
  %v1251 = vld [vmem:[%s19 + $0x8] sm:$0xff]
  %v1252 = vld [vmem:[%s21] sm:$0xff]
  %v1253 = vld [vmem:[%s21 + $0x8] sm:$0xff]
  %1255 = vset.pattern.permute.xlu0 0
  %1256 = vperm.xlu0 %1255, %v1252
  %v1257 = vpop.permute.xlu0 %1256
  %1260 = vset.pattern.permute.xlu0 0
  %1261 = vperm.xlu0 %1260, %v1253
  %v1262 = vpop.permute.xlu0 %1261
  %v1265 = vsel %vm1052, %v1250, 0
  %v1268 = vsel %vm1052, %v1251, 0
  %1270 = vmatprep.subr.mxu0 0.0
  %1271 = vmatpush1.msra.mxu0 %v924
  %1272 = vmatprep.subr.mxu0 0.0
  %1273 = vmatpush1.msra.mxu0 %v925
  %1274 = vmatprep.subr.mxu0 0.0
  %1275 = vmatpush1.msra.mxu0 0.0
  %1276 = vmatprep.subr.mxu0 0.0
  %1277 = vmatpush1.msra.mxu0 0.0
  %1278 = vmatprep.subr.mxu0 0.0
  %1279 = vmatpush1.msra.mxu0 0.0
  %1280 = vmatprep.subr.mxu0 0.0
  %1281 = vmatpush1.msra.mxu0 0.0
  %1282 = vmatprep.subr.mxu0 0.0
  %1283 = vmatpush1.msra.mxu0 0.0
  %1284 = vmatprep.subr.mxu0 0.0
  %1285 = vmatpush1.msra.mxu0 0.0
  %1286 = vmatprep.subr.mxu0 0.0
  %1287 = vmatpush1.msra.mxu0 0.0
  %1288 = vmatprep.subr.mxu0 0.0
  %1289 = vmatpush1.msra.mxu0 0.0
  %1290 = vmatprep.subr.mxu0 0.0
  %1291 = vmatpush1.msra.mxu0 0.0
  %1292 = vmatprep.subr.mxu0 0.0
  %1293 = vmatpush1.msra.mxu0 0.0
  %1294 = vmatprep.subr.mxu0 0.0
  %1295 = vmatpush1.msra.mxu0 0.0
  %1296 = vmatprep.subr.mxu0 0.0
  %1297 = vmatpush1.msra.mxu0 0.0
  %1298 = vmatprep.subr.mxu0 0.0
  %1299 = vmatpush1.msra.mxu0 0.0
  %1300 = vmatprep.subr.mxu0 0.0
  %1301 = vmatpush1.msra.mxu0 0.0
  %1302 = vmatprep.subr.mxu0 0.0
  %1303 = vmatpush1.msra.mxu0 0.0
  %1304 = vmatprep.subr.mxu0 0.0
  %1305 = vmatpush1.msra.mxu0 0.0
  %1306 = vmatprep.subr.mxu0 0.0
  %1307 = vmatpush1.msra.mxu0 0.0
  %1308 = vmatprep.subr.mxu0 0.0
  %1309 = vmatpush1.msra.mxu0 0.0
  %1310 = vmatprep.subr.mxu0 0.0
  %1311 = vmatpush1.msra.mxu0 0.0
  %1312 = vmatprep.subr.mxu0 0.0
  %1313 = vmatpush1.msra.mxu0 0.0
  %1314 = vmatprep.subr.mxu0 0.0
  %1315 = vmatpush1.msra.mxu0 0.0
  %1316 = vmatprep.subr.mxu0 0.0
  %1317 = vmatpush1.msra.mxu0 0.0
  %1318 = vmatprep.subr.mxu0 0.0
  %1319 = vmatpush1.msra.mxu0 0.0
  %1320 = vmatprep.subr.mxu0 0.0
  %1321 = vmatpush1.msra.mxu0 0.0
  %1322 = vmatprep.subr.mxu0 0.0
  %1323 = vmatpush1.msra.mxu0 0.0
  %1324 = vmatprep.subr.mxu0 0.0
  %1325 = vmatpush1.msra.mxu0 0.0
  %1326 = vmatprep.subr.mxu0 0.0
  %1327 = vmatpush1.msra.mxu0 0.0
  %1328 = vmatprep.subr.mxu0 0.0
  %1329 = vmatpush1.msra.mxu0 0.0
  %1330 = vmatprep.subr.mxu0 0.0
  %1331 = vmatpush1.msra.mxu0 0.0
  %1332 = vmatprep.subr.mxu0 0.0
  %1333 = vmatpush1.msra.mxu0 0.0
  %1334 = vmatprep.mubr.f32.mxu0 0.0
  %1335 = vmatmul.mubr.f32.gmra.mrb[0].mxu0 %v1265
  %v1336 = vpop.f32.mrb[0].mxu0
  %v1337 = vadd.f32 %v1257, %v1336
  %v1338 = vpop.f32.mrb[0].mxu0
  %1339 = vmatprep.mubr.f32.mxu0 0.0
  %1340 = vmatmul.mubr.f32.gmra.mrb[0].mxu0 %v1268
  %v1341 = vpop.f32.mrb[0].mxu0
  %v1342 = vadd.f32 %v1262, %v1341
  %v1343 = vpop.f32.mrb[0].mxu0
  %1344 = vdwg.mxu0
  %v1345 = vld [vmem:[%s43] sm:$0xf]
  %v1346 = vld [vmem:[%s43 + $0x4] sm:$0xf]
  %v1347 = vunpack.c.l.bf16 %v1345
  %v1348 = vunpack.c.l.bf16 %v1346
  %v1350 = vsel %vm1052, %v1242, 0
  %v1353 = vsel %vm1052, %v1247, 0
  %1355 = vmatprep.subr.mxu0 0.0
  %1356 = vmatpush1.msra.mxu0 %v1347
  %1357 = vmatprep.subr.mxu0 0.0
  %1358 = vmatpush1.msra.mxu0 %v1348
  %1359 = vmatprep.subr.mxu0 0.0
  %1360 = vmatpush1.msra.mxu0 0.0
  %1361 = vmatprep.subr.mxu0 0.0
  %1362 = vmatpush1.msra.mxu0 0.0
  %1363 = vmatprep.subr.mxu0 0.0
  %1364 = vmatpush1.msra.mxu0 0.0
  %1365 = vmatprep.subr.mxu0 0.0
  %1366 = vmatpush1.msra.mxu0 0.0
  %1367 = vmatprep.subr.mxu0 0.0
  %1368 = vmatpush1.msra.mxu0 0.0
  %1369 = vmatprep.subr.mxu0 0.0
  %1370 = vmatpush1.msra.mxu0 0.0
  %1371 = vmatprep.subr.mxu0 0.0
  %1372 = vmatpush1.msra.mxu0 0.0
  %1373 = vmatprep.subr.mxu0 0.0
  %1374 = vmatpush1.msra.mxu0 0.0
  %1375 = vmatprep.subr.mxu0 0.0
  %1376 = vmatpush1.msra.mxu0 0.0
  %1377 = vmatprep.subr.mxu0 0.0
  %1378 = vmatpush1.msra.mxu0 0.0
  %1379 = vmatprep.subr.mxu0 0.0
  %1380 = vmatpush1.msra.mxu0 0.0
  %1381 = vmatprep.subr.mxu0 0.0
  %1382 = vmatpush1.msra.mxu0 0.0
  %1383 = vmatprep.subr.mxu0 0.0
  %1384 = vmatpush1.msra.mxu0 0.0
  %1385 = vmatprep.subr.mxu0 0.0
  %1386 = vmatpush1.msra.mxu0 0.0
  %1387 = vmatprep.subr.mxu0 0.0
  %1388 = vmatpush1.msra.mxu0 0.0
  %1389 = vmatprep.subr.mxu0 0.0
  %1390 = vmatpush1.msra.mxu0 0.0
  %1391 = vmatprep.subr.mxu0 0.0
  %1392 = vmatpush1.msra.mxu0 0.0
  %1393 = vmatprep.subr.mxu0 0.0
  %1394 = vmatpush1.msra.mxu0 0.0
  %1395 = vmatprep.subr.mxu0 0.0
  %1396 = vmatpush1.msra.mxu0 0.0
  %1397 = vmatprep.subr.mxu0 0.0
  %1398 = vmatpush1.msra.mxu0 0.0
  %1399 = vmatprep.subr.mxu0 0.0
  %1400 = vmatpush1.msra.mxu0 0.0
  %1401 = vmatprep.subr.mxu0 0.0
  %1402 = vmatpush1.msra.mxu0 0.0
  %1403 = vmatprep.subr.mxu0 0.0
  %1404 = vmatpush1.msra.mxu0 0.0
  %1405 = vmatprep.subr.mxu0 0.0
  %1406 = vmatpush1.msra.mxu0 0.0
  %1407 = vmatprep.subr.mxu0 0.0
  %1408 = vmatpush1.msra.mxu0 0.0
  %1409 = vmatprep.subr.mxu0 0.0
  %1410 = vmatpush1.msra.mxu0 0.0
  %1411 = vmatprep.subr.mxu0 0.0
  %1412 = vmatpush1.msra.mxu0 0.0
  %1413 = vmatprep.subr.mxu0 0.0
  %1414 = vmatpush1.msra.mxu0 0.0
  %1415 = vmatprep.subr.mxu0 0.0
  %1416 = vmatpush1.msra.mxu0 0.0
  %1417 = vmatprep.subr.mxu0 0.0
  %1418 = vmatpush1.msra.mxu0 0.0
  %1419 = vmatprep.mubr.f32.mxu0 0.0
  %1420 = vmatmul.mubr.f32.gmra.mrb[0].mxu0 %v1350
  %v1421 = vpop.f32.mrb[0].mxu0
  %v1422 = vadd.f32 0.0, %v1421
  %v1423 = vpop.f32.mrb[0].mxu0
  %1424 = vmatprep.mubr.f32.mxu0 0.0
  %1425 = vmatmul.mubr.f32.gmra.mrb[0].mxu0 %v1353
  %v1426 = vpop.f32.mrb[0].mxu0
  %v1427 = vadd.f32 0.0, %v1426
  %v1428 = vpop.f32.mrb[0].mxu0
  %1429 = vdwg.mxu0
  %v1430 = vadd.f32 %v1337, %v1422
  %v1431 = vadd.f32 %v1342, %v1427
  %v1432 = vld [vmem:[%s15] sm:$0xff]
  %v1433 = vld [vmem:[%s15 + $0x8] sm:$0xff]
  %v1434 = vld [vmem:[%s17] sm:$0xff]
  %v1435 = vld [vmem:[%s17 + $0x8] sm:$0xff]
  %1437 = vset.pattern.permute.xlu0 0
  %1438 = vperm.xlu0 %1437, %v1434
  %v1439 = vpop.permute.xlu0 %1438
  %1442 = vset.pattern.permute.xlu0 0
  %1443 = vperm.xlu0 %1442, %v1435
  %v1444 = vpop.permute.xlu0 %1443
  %v1447 = vsel %vm842, %v1432, 0
  %v1450 = vsel %vm842, %v1433, 0
  %1452 = vmatprep.subr.mxu0 %v693
  %1453 = vmatpush1.msra.mxu0 %v692
  %1454 = vmatprep.subr.mxu0 0.0
  %1455 = vmatpush1.msra.mxu0 0.0
  %1456 = vmatprep.subr.mxu0 0.0
  %1457 = vmatpush1.msra.mxu0 0.0
  %1458 = vmatprep.subr.mxu0 0.0
  %1459 = vmatpush1.msra.mxu0 0.0
  %1460 = vmatprep.subr.mxu0 0.0
  %1461 = vmatpush1.msra.mxu0 0.0
  %1462 = vmatprep.subr.mxu0 0.0
  %1463 = vmatpush1.msra.mxu0 0.0
  %1464 = vmatprep.subr.mxu0 0.0
  %1465 = vmatpush1.msra.mxu0 0.0
  %1466 = vmatprep.subr.mxu0 0.0
  %1467 = vmatpush1.msra.mxu0 0.0
  %1468 = vmatprep.subr.mxu0 0.0
  %1469 = vmatpush1.msra.mxu0 0.0
  %1470 = vmatprep.subr.mxu0 0.0
  %1471 = vmatpush1.msra.mxu0 0.0
  %1472 = vmatprep.subr.mxu0 0.0
  %1473 = vmatpush1.msra.mxu0 0.0
  %1474 = vmatprep.subr.mxu0 0.0
  %1475 = vmatpush1.msra.mxu0 0.0
  %1476 = vmatprep.subr.mxu0 0.0
  %1477 = vmatpush1.msra.mxu0 0.0
  %1478 = vmatprep.subr.mxu0 0.0
  %1479 = vmatpush1.msra.mxu0 0.0
  %1480 = vmatprep.subr.mxu0 0.0
  %1481 = vmatpush1.msra.mxu0 0.0
  %1482 = vmatprep.subr.mxu0 0.0
  %1483 = vmatpush1.msra.mxu0 0.0
  %1484 = vmatprep.subr.mxu0 0.0
  %1485 = vmatpush1.msra.mxu0 0.0
  %1486 = vmatprep.subr.mxu0 0.0
  %1487 = vmatpush1.msra.mxu0 0.0
  %1488 = vmatprep.subr.mxu0 0.0
  %1489 = vmatpush1.msra.mxu0 0.0
  %1490 = vmatprep.subr.mxu0 0.0
  %1491 = vmatpush1.msra.mxu0 0.0
  %1492 = vmatprep.subr.mxu0 0.0
  %1493 = vmatpush1.msra.mxu0 0.0
  %1494 = vmatprep.subr.mxu0 0.0
  %1495 = vmatpush1.msra.mxu0 0.0
  %1496 = vmatprep.subr.mxu0 0.0
  %1497 = vmatpush1.msra.mxu0 0.0
  %1498 = vmatprep.subr.mxu0 0.0
  %1499 = vmatpush1.msra.mxu0 0.0
  %1500 = vmatprep.subr.mxu0 0.0
  %1501 = vmatpush1.msra.mxu0 0.0
  %1502 = vmatprep.subr.mxu0 0.0
  %1503 = vmatpush1.msra.mxu0 0.0
  %1504 = vmatprep.subr.mxu0 0.0
  %1505 = vmatpush1.msra.mxu0 0.0
  %1506 = vmatprep.subr.mxu0 0.0
  %1507 = vmatpush1.msra.mxu0 0.0
  %1508 = vmatprep.subr.mxu0 0.0
  %1509 = vmatpush1.msra.mxu0 0.0
  %1510 = vmatprep.subr.mxu0 0.0
  %1511 = vmatpush1.msra.mxu0 0.0
  %1512 = vmatprep.subr.mxu0 0.0
  %1513 = vmatpush1.msra.mxu0 0.0
  %1514 = vmatprep.subr.mxu0 0.0
  %1515 = vmatpush1.msra.mxu0 0.0
  %1516 = vmatprep.mubr.f32.mxu0 0.0
  %1517 = vmatmul.mubr.f32.gmra.mrb[0].mxu0 %v1447
  %v1518 = vpop.f32.mrb[0].mxu0
  %v1519 = vadd.f32 %v1439, %v1518
  %v1520 = vpop.f32.mrb[0].mxu0
  %v1521 = vadd.f32 %v1439, %v1520
  %1522 = vmatprep.mubr.f32.mxu0 0.0
  %1523 = vmatmul.mubr.f32.gmra.mrb[0].mxu0 %v1450
  %v1524 = vpop.f32.mrb[0].mxu0
  %v1525 = vadd.f32 %v1444, %v1524
  %v1526 = vpop.f32.mrb[0].mxu0
  %v1527 = vadd.f32 %v1444, %v1526
  %1528 = vdwg.mxu0
  %v1529 = vld [vmem:[%s45] sm:$0xff]
  %v1530 = vld [vmem:[%s45 + $0x8] sm:$0xff]
  %v1531 = vld [vmem:[%s45 + $0x10] sm:$0xff]
  %v1532 = vld [vmem:[%s45 + $0x18] sm:$0xff]
  %v1533 = vld [vmem:[%s45 + $0x20] sm:$0xff]
  %v1534 = vld [vmem:[%s45 + $0x28] sm:$0xff]
  %v1535 = vld [vmem:[%s45 + $0x30] sm:$0xff]
  %v1536 = vld [vmem:[%s45 + $0x38] sm:$0xff]
  %v1537 = vunpack.c.l.bf16 %v1529
  %v1538 = vunpack.c.h.bf16 %v1529
  %v1539 = vunpack.c.l.bf16 %v1530
  %v1540 = vunpack.c.h.bf16 %v1530
  %v1541 = vunpack.c.l.bf16 %v1531
  %v1542 = vunpack.c.h.bf16 %v1531
  %v1543 = vunpack.c.l.bf16 %v1532
  %v1544 = vunpack.c.h.bf16 %v1532
  %v1545 = vunpack.c.l.bf16 %v1533
  %v1546 = vunpack.c.h.bf16 %v1533
  %v1547 = vunpack.c.l.bf16 %v1534
  %v1548 = vunpack.c.h.bf16 %v1534
  %v1549 = vunpack.c.l.bf16 %v1535
  %v1550 = vunpack.c.h.bf16 %v1535
  %v1551 = vunpack.c.l.bf16 %v1536
  %v1552 = vunpack.c.h.bf16 %v1536
  %v1554 = vsel %vm942, %v1430, 0
  %v1557 = vsel %vm942, %v1431, 0
  %1559 = vmatprep.subr.mxu0 %v1538
  %1560 = vmatpush1.msra.mxu0 %v1537
  %1561 = vmatprep.subr.mxu0 %v1540
  %1562 = vmatpush1.msra.mxu0 %v1539
  %1563 = vmatprep.subr.mxu0 %v1542
  %1564 = vmatpush1.msra.mxu0 %v1541
  %1565 = vmatprep.subr.mxu0 %v1544
  %1566 = vmatpush1.msra.mxu0 %v1543
  %1567 = vmatprep.subr.mxu0 %v1546
  %1568 = vmatpush1.msra.mxu0 %v1545
  %1569 = vmatprep.subr.mxu0 %v1548
  %1570 = vmatpush1.msra.mxu0 %v1547
  %1571 = vmatprep.subr.mxu0 %v1550
  %1572 = vmatpush1.msra.mxu0 %v1549
  %1573 = vmatprep.subr.mxu0 %v1552
  %1574 = vmatpush1.msra.mxu0 %v1551
  %1575 = vmatprep.subr.mxu0 0.0
  %1576 = vmatpush1.msra.mxu0 0.0
  %1577 = vmatprep.subr.mxu0 0.0
  %1578 = vmatpush1.msra.mxu0 0.0
  %1579 = vmatprep.subr.mxu0 0.0
  %1580 = vmatpush1.msra.mxu0 0.0
  %1581 = vmatprep.subr.mxu0 0.0
  %1582 = vmatpush1.msra.mxu0 0.0
  %1583 = vmatprep.subr.mxu0 0.0
  %1584 = vmatpush1.msra.mxu0 0.0
  %1585 = vmatprep.subr.mxu0 0.0
  %1586 = vmatpush1.msra.mxu0 0.0
  %1587 = vmatprep.subr.mxu0 0.0
  %1588 = vmatpush1.msra.mxu0 0.0
  %1589 = vmatprep.subr.mxu0 0.0
  %1590 = vmatpush1.msra.mxu0 0.0
  %1591 = vmatprep.subr.mxu0 0.0
  %1592 = vmatpush1.msra.mxu0 0.0
  %1593 = vmatprep.subr.mxu0 0.0
  %1594 = vmatpush1.msra.mxu0 0.0
  %1595 = vmatprep.subr.mxu0 0.0
  %1596 = vmatpush1.msra.mxu0 0.0
  %1597 = vmatprep.subr.mxu0 0.0
  %1598 = vmatpush1.msra.mxu0 0.0
  %1599 = vmatprep.subr.mxu0 0.0
  %1600 = vmatpush1.msra.mxu0 0.0
  %1601 = vmatprep.subr.mxu0 0.0
  %1602 = vmatpush1.msra.mxu0 0.0
  %1603 = vmatprep.subr.mxu0 0.0
  %1604 = vmatpush1.msra.mxu0 0.0
  %1605 = vmatprep.subr.mxu0 0.0
  %1606 = vmatpush1.msra.mxu0 0.0
  %1607 = vmatprep.subr.mxu0 0.0
  %1608 = vmatpush1.msra.mxu0 0.0
  %1609 = vmatprep.subr.mxu0 0.0
  %1610 = vmatpush1.msra.mxu0 0.0
  %1611 = vmatprep.subr.mxu0 0.0
  %1612 = vmatpush1.msra.mxu0 0.0
  %1613 = vmatprep.subr.mxu0 0.0
  %1614 = vmatpush1.msra.mxu0 0.0
  %1615 = vmatprep.subr.mxu0 0.0
  %1616 = vmatpush1.msra.mxu0 0.0
  %1617 = vmatprep.subr.mxu0 0.0
  %1618 = vmatpush1.msra.mxu0 0.0
  %1619 = vmatprep.subr.mxu0 0.0
  %1620 = vmatpush1.msra.mxu0 0.0
  %1621 = vmatprep.subr.mxu0 0.0
  %1622 = vmatpush1.msra.mxu0 0.0
  %1623 = vmatprep.mubr.f32.mxu0 0.0
  %1624 = vmatmul.mubr.f32.gmra.mrb[0].mxu0 %v1554
  %v1625 = vpop.f32.mrb[0].mxu0
  %v1626 = vadd.f32 0.0, %v1625
  %v1627 = vpop.f32.mrb[0].mxu0
  %v1628 = vadd.f32 0.0, %v1627
  %1629 = vmatprep.mubr.f32.mxu0 0.0
  %1630 = vmatmul.mubr.f32.gmra.mrb[0].mxu0 %v1557
  %v1631 = vpop.f32.mrb[0].mxu0
  %v1632 = vadd.f32 0.0, %v1631
  %v1633 = vpop.f32.mrb[0].mxu0
  %v1634 = vadd.f32 0.0, %v1633
  %1635 = vdwg.mxu0
  %v1636 = vadd.f32 %v1519, %v1626
  %v1637 = vadd.f32 %v1521, %v1628
  %v1638 = vadd.f32 %v1525, %v1632
  %v1639 = vadd.f32 %v1527, %v1634
  %v1640 = vld [vmem:[%s27] sm:$0xff]
  %v1641 = vld [vmem:[%s27 + $0x8] sm:$0xff]
  %v1642 = vld [vmem:[%s27 + $0x10] sm:$0xff]
  %v1643 = vld [vmem:[%s27 + $0x18] sm:$0xff]
  %v1644 = vld [vmem:[%s29] sm:$0xff]
  %v1645 = vld [vmem:[%s29 + $0x8] sm:$0xff]
  %v1646 = vld [vmem:[%s29 + $0x10] sm:$0xff]
  %v1647 = vld [vmem:[%s29 + $0x18] sm:$0xff]
  %1649 = vset.pattern.permute.xlu0 0
  %1650 = vperm.xlu0 %1649, %v1644
  %v1651 = vpop.permute.xlu0 %1650
  %1654 = vset.pattern.permute.xlu0 0
  %1655 = vperm.xlu0 %1654, %v1645
  %v1656 = vpop.permute.xlu0 %1655
  %1659 = vset.pattern.permute.xlu0 0
  %1660 = vperm.xlu0 %1659, %v1646
  %v1661 = vpop.permute.xlu0 %1660
  %1664 = vset.pattern.permute.xlu0 0
  %1665 = vperm.xlu0 %1664, %v1647
  %v1666 = vpop.permute.xlu0 %1665
  %v1669 = vsel %vm1052, %v1640, 0
  %v1672 = vsel %vm1052, %v1641, 0
  %v1675 = vsel %vm1052, %v1642, 0
  %v1678 = vsel %vm1052, %v1643, 0
  %1680 = vmatprep.subr.mxu0 0.0
  %1681 = vmatpush1.msra.mxu0 %v1242
  %1682 = vmatprep.subr.mxu0 0.0
  %1683 = vmatpush1.msra.mxu0 %v1247
  %1684 = vmatprep.subr.mxu0 0.0
  %1685 = vmatpush1.msra.mxu0 0.0
  %1686 = vmatprep.subr.mxu0 0.0
  %1687 = vmatpush1.msra.mxu0 0.0
  %1688 = vmatprep.subr.mxu0 0.0
  %1689 = vmatpush1.msra.mxu0 0.0
  %1690 = vmatprep.subr.mxu0 0.0
  %1691 = vmatpush1.msra.mxu0 0.0
  %1692 = vmatprep.subr.mxu0 0.0
  %1693 = vmatpush1.msra.mxu0 0.0
  %1694 = vmatprep.subr.mxu0 0.0
  %1695 = vmatpush1.msra.mxu0 0.0
  %1696 = vmatprep.subr.mxu0 0.0
  %1697 = vmatpush1.msra.mxu0 0.0
  %1698 = vmatprep.subr.mxu0 0.0
  %1699 = vmatpush1.msra.mxu0 0.0
  %1700 = vmatprep.subr.mxu0 0.0
  %1701 = vmatpush1.msra.mxu0 0.0
  %1702 = vmatprep.subr.mxu0 0.0
  %1703 = vmatpush1.msra.mxu0 0.0
  %1704 = vmatprep.subr.mxu0 0.0
  %1705 = vmatpush1.msra.mxu0 0.0
  %1706 = vmatprep.subr.mxu0 0.0
  %1707 = vmatpush1.msra.mxu0 0.0
  %1708 = vmatprep.subr.mxu0 0.0
  %1709 = vmatpush1.msra.mxu0 0.0
  %1710 = vmatprep.subr.mxu0 0.0
  %1711 = vmatpush1.msra.mxu0 0.0
  %1712 = vmatprep.subr.mxu0 0.0
  %1713 = vmatpush1.msra.mxu0 0.0
  %1714 = vmatprep.subr.mxu0 0.0
  %1715 = vmatpush1.msra.mxu0 0.0
  %1716 = vmatprep.subr.mxu0 0.0
  %1717 = vmatpush1.msra.mxu0 0.0
  %1718 = vmatprep.subr.mxu0 0.0
  %1719 = vmatpush1.msra.mxu0 0.0
  %1720 = vmatprep.subr.mxu0 0.0
  %1721 = vmatpush1.msra.mxu0 0.0
  %1722 = vmatprep.subr.mxu0 0.0
  %1723 = vmatpush1.msra.mxu0 0.0
  %1724 = vmatprep.subr.mxu0 0.0
  %1725 = vmatpush1.msra.mxu0 0.0
  %1726 = vmatprep.subr.mxu0 0.0
  %1727 = vmatpush1.msra.mxu0 0.0
  %1728 = vmatprep.subr.mxu0 0.0
  %1729 = vmatpush1.msra.mxu0 0.0
  %1730 = vmatprep.subr.mxu0 0.0
  %1731 = vmatpush1.msra.mxu0 0.0
  %1732 = vmatprep.subr.mxu0 0.0
  %1733 = vmatpush1.msra.mxu0 0.0
  %1734 = vmatprep.subr.mxu0 0.0
  %1735 = vmatpush1.msra.mxu0 0.0
  %1736 = vmatprep.subr.mxu0 0.0
  %1737 = vmatpush1.msra.mxu0 0.0
  %1738 = vmatprep.subr.mxu0 0.0
  %1739 = vmatpush1.msra.mxu0 0.0
  %1740 = vmatprep.subr.mxu0 0.0
  %1741 = vmatpush1.msra.mxu0 0.0
  %1742 = vmatprep.subr.mxu0 0.0
  %1743 = vmatpush1.msra.mxu0 0.0
  %1744 = vmatprep.mubr.f32.mxu0 0.0
  %1745 = vmatmul.mubr.f32.gmra.mrb[0].mxu0 %v1669
  %v1746 = vpop.f32.mrb[0].mxu0
  %v1747 = vadd.f32 %v1651, %v1746
  %v1748 = vpop.f32.mrb[0].mxu0
  %1749 = vmatprep.mubr.f32.mxu0 0.0
  %1750 = vmatmul.mubr.f32.gmra.mrb[0].mxu0 %v1672
  %v1751 = vpop.f32.mrb[0].mxu0
  %v1752 = vadd.f32 %v1656, %v1751
  %v1753 = vpop.f32.mrb[0].mxu0
  %1754 = vmatprep.mubr.f32.mxu0 0.0
  %1755 = vmatmul.mubr.f32.gmra.mrb[0].mxu0 %v1675
  %v1756 = vpop.f32.mrb[0].mxu0
  %v1757 = vadd.f32 %v1661, %v1756
  %v1758 = vpop.f32.mrb[0].mxu0
  %1759 = vmatprep.mubr.f32.mxu0 0.0
  %1760 = vmatmul.mubr.f32.gmra.mrb[0].mxu0 %v1678
  %v1761 = vpop.f32.mrb[0].mxu0
  %v1762 = vadd.f32 %v1666, %v1761
  %v1763 = vpop.f32.mrb[0].mxu0
  %1764 = vdwg.mxu0
  %v1765 = vmax.f32 %v1747, 0.0
  %v1766 = vmax.f32 %v1752, 0.0
  %v1767 = vmax.f32 %v1757, 0.0
  %v1768 = vmax.f32 %v1762, 0.0
  %v1769 = vld [vmem:[%s31] sm:$0xff]
  %v1770 = vld [vmem:[%s31 + $0x8] sm:$0xff]
  %v1771 = vld [vmem:[%s31 + $0x10] sm:$0xff]
  %v1772 = vld [vmem:[%s31 + $0x18] sm:$0xff]
  %v1773 = vld [vmem:[%s31 + $0x20] sm:$0xff]
  %v1774 = vld [vmem:[%s31 + $0x28] sm:$0xff]
  %v1775 = vld [vmem:[%s31 + $0x30] sm:$0xff]
  %v1776 = vld [vmem:[%s31 + $0x38] sm:$0xff]
  %v1777 = vld [vmem:[%s31 + $0x40] sm:$0xff]
  %v1778 = vld [vmem:[%s31 + $0x48] sm:$0xff]
  %v1779 = vld [vmem:[%s31 + $0x50] sm:$0xff]
  %v1780 = vld [vmem:[%s31 + $0x58] sm:$0xff]
  %v1781 = vld [vmem:[%s31 + $0x60] sm:$0xff]
  %v1782 = vld [vmem:[%s31 + $0x68] sm:$0xff]
  %v1783 = vld [vmem:[%s31 + $0x70] sm:$0xff]
  %v1784 = vld [vmem:[%s31 + $0x78] sm:$0xff]
  %v1785 = vld [vmem:[%s31 + $0x80] sm:$0xff]
  %v1786 = vld [vmem:[%s31 + $0x88] sm:$0xff]
  %v1787 = vld [vmem:[%s31 + $0x90] sm:$0xff]
  %v1788 = vld [vmem:[%s31 + $0x98] sm:$0xff]
  %v1789 = vld [vmem:[%s31 + $0xa0] sm:$0xff]
  %v1790 = vld [vmem:[%s31 + $0xa8] sm:$0xff]
  %v1791 = vld [vmem:[%s31 + $0xb0] sm:$0xff]
  %v1792 = vld [vmem:[%s31 + $0xb8] sm:$0xff]
  %v1793 = vld [vmem:[%s31 + $0xc0] sm:$0xff]
  %v1794 = vld [vmem:[%s31 + $0xc8] sm:$0xff]
  %v1795 = vld [vmem:[%s31 + $0xd0] sm:$0xff]
  %v1796 = vld [vmem:[%s31 + $0xd8] sm:$0xff]
  %v1797 = vld [vmem:[%s31 + $0xe0] sm:$0xff]
  %v1798 = vld [vmem:[%s31 + $0xe8] sm:$0xff]
  %v1799 = vld [vmem:[%s31 + $0xf0] sm:$0xff]
  %v1800 = vld [vmem:[%s31 + $0xf8] sm:$0xff]
  %v1801 = vld [vmem:[%s31 + $0x100] sm:$0x1]
  %v1802 = vld [vmem:[%s33] sm:$0xff]
  %v1803 = vld [vmem:[%s33 + $0x8] sm:$0xff]
  %v1804 = vld [vmem:[%s33 + $0x10] sm:$0xff]
  %v1805 = vld [vmem:[%s33 + $0x18] sm:$0xff]
  %v1806 = vld [vmem:[%s33 + $0x20] sm:$0xff]
  %v1807 = vld [vmem:[%s33 + $0x28] sm:$0xff]
  %v1808 = vld [vmem:[%s33 + $0x30] sm:$0xff]
  %v1809 = vld [vmem:[%s33 + $0x38] sm:$0xff]
  %v1810 = vld [vmem:[%s33 + $0x40] sm:$0xff]
  %v1811 = vld [vmem:[%s33 + $0x48] sm:$0xff]
  %v1812 = vld [vmem:[%s33 + $0x50] sm:$0xff]
  %v1813 = vld [vmem:[%s33 + $0x58] sm:$0xff]
  %v1814 = vld [vmem:[%s33 + $0x60] sm:$0xff]
  %v1815 = vld [vmem:[%s33 + $0x68] sm:$0xff]
  %v1816 = vld [vmem:[%s33 + $0x70] sm:$0xff]
  %v1817 = vld [vmem:[%s33 + $0x78] sm:$0xff]
  %v1818 = vld [vmem:[%s33 + $0x80] sm:$0xff]
  %v1819 = vld [vmem:[%s33 + $0x88] sm:$0xff]
  %v1820 = vld [vmem:[%s33 + $0x90] sm:$0xff]
  %v1821 = vld [vmem:[%s33 + $0x98] sm:$0xff]
  %v1822 = vld [vmem:[%s33 + $0xa0] sm:$0xff]
  %v1823 = vld [vmem:[%s33 + $0xa8] sm:$0xff]
  %v1824 = vld [vmem:[%s33 + $0xb0] sm:$0xff]
  %v1825 = vld [vmem:[%s33 + $0xb8] sm:$0xff]
  %v1826 = vld [vmem:[%s33 + $0xc0] sm:$0xff]
  %v1827 = vld [vmem:[%s33 + $0xc8] sm:$0xff]
  %v1828 = vld [vmem:[%s33 + $0xd0] sm:$0xff]
  %v1829 = vld [vmem:[%s33 + $0xd8] sm:$0xff]
  %v1830 = vld [vmem:[%s33 + $0xe0] sm:$0xff]
  %v1831 = vld [vmem:[%s33 + $0xe8] sm:$0xff]
  %v1832 = vld [vmem:[%s33 + $0xf0] sm:$0xff]
  %v1833 = vld [vmem:[%s33 + $0xf8] sm:$0xff]
  %v1834 = vld [vmem:[%s33 + $0x100] sm:$0x1]
  %1836 = vset.pattern.permute.xlu0 0
  %1837 = vperm.xlu0 %1836, %v1802
  %v1838 = vpop.permute.xlu0 %1837
  %1841 = vset.pattern.permute.xlu0 0
  %1842 = vperm.xlu0 %1841, %v1803
  %v1843 = vpop.permute.xlu0 %1842
  %1846 = vset.pattern.permute.xlu0 0
  %1847 = vperm.xlu0 %1846, %v1804
  %v1848 = vpop.permute.xlu0 %1847
  %1851 = vset.pattern.permute.xlu0 0
  %1852 = vperm.xlu0 %1851, %v1805
  %v1853 = vpop.permute.xlu0 %1852
  %1856 = vset.pattern.permute.xlu0 0
  %1857 = vperm.xlu0 %1856, %v1806
  %v1858 = vpop.permute.xlu0 %1857
  %1861 = vset.pattern.permute.xlu0 0
  %1862 = vperm.xlu0 %1861, %v1807
  %v1863 = vpop.permute.xlu0 %1862
  %1866 = vset.pattern.permute.xlu0 0
  %1867 = vperm.xlu0 %1866, %v1808
  %v1868 = vpop.permute.xlu0 %1867
  %1871 = vset.pattern.permute.xlu0 0
  %1872 = vperm.xlu0 %1871, %v1809
  %v1873 = vpop.permute.xlu0 %1872
  %1876 = vset.pattern.permute.xlu0 0
  %1877 = vperm.xlu0 %1876, %v1810
  %v1878 = vpop.permute.xlu0 %1877
  %1881 = vset.pattern.permute.xlu0 0
  %1882 = vperm.xlu0 %1881, %v1811
  %v1883 = vpop.permute.xlu0 %1882
  %1886 = vset.pattern.permute.xlu0 0
  %1887 = vperm.xlu0 %1886, %v1812
  %v1888 = vpop.permute.xlu0 %1887
  %1891 = vset.pattern.permute.xlu0 0
  %1892 = vperm.xlu0 %1891, %v1813
  %v1893 = vpop.permute.xlu0 %1892
  %1896 = vset.pattern.permute.xlu0 0
  %1897 = vperm.xlu0 %1896, %v1814
  %v1898 = vpop.permute.xlu0 %1897
  %1901 = vset.pattern.permute.xlu0 0
  %1902 = vperm.xlu0 %1901, %v1815
  %v1903 = vpop.permute.xlu0 %1902
  %1906 = vset.pattern.permute.xlu0 0
  %1907 = vperm.xlu0 %1906, %v1816
  %v1908 = vpop.permute.xlu0 %1907
  %1911 = vset.pattern.permute.xlu0 0
  %1912 = vperm.xlu0 %1911, %v1817
  %v1913 = vpop.permute.xlu0 %1912
  %1916 = vset.pattern.permute.xlu0 0
  %1917 = vperm.xlu0 %1916, %v1818
  %v1918 = vpop.permute.xlu0 %1917
  %1921 = vset.pattern.permute.xlu0 0
  %1922 = vperm.xlu0 %1921, %v1819
  %v1923 = vpop.permute.xlu0 %1922
  %1926 = vset.pattern.permute.xlu0 0
  %1927 = vperm.xlu0 %1926, %v1820
  %v1928 = vpop.permute.xlu0 %1927
  %1931 = vset.pattern.permute.xlu0 0
  %1932 = vperm.xlu0 %1931, %v1821
  %v1933 = vpop.permute.xlu0 %1932
  %1936 = vset.pattern.permute.xlu0 0
  %1937 = vperm.xlu0 %1936, %v1822
  %v1938 = vpop.permute.xlu0 %1937
  %1941 = vset.pattern.permute.xlu0 0
  %1942 = vperm.xlu0 %1941, %v1823
  %v1943 = vpop.permute.xlu0 %1942
  %1946 = vset.pattern.permute.xlu0 0
  %1947 = vperm.xlu0 %1946, %v1824
  %v1948 = vpop.permute.xlu0 %1947
  %1951 = vset.pattern.permute.xlu0 0
  %1952 = vperm.xlu0 %1951, %v1825
  %v1953 = vpop.permute.xlu0 %1952
  %1956 = vset.pattern.permute.xlu0 0
  %1957 = vperm.xlu0 %1956, %v1826
  %v1958 = vpop.permute.xlu0 %1957
  %1961 = vset.pattern.permute.xlu0 0
  %1962 = vperm.xlu0 %1961, %v1827
  %v1963 = vpop.permute.xlu0 %1962
  %1966 = vset.pattern.permute.xlu0 0
  %1967 = vperm.xlu0 %1966, %v1828
  %v1968 = vpop.permute.xlu0 %1967
  %1971 = vset.pattern.permute.xlu0 0
  %1972 = vperm.xlu0 %1971, %v1829
  %v1973 = vpop.permute.xlu0 %1972
  %1976 = vset.pattern.permute.xlu0 0
  %1977 = vperm.xlu0 %1976, %v1830
  %v1978 = vpop.permute.xlu0 %1977
  %1981 = vset.pattern.permute.xlu0 0
  %1982 = vperm.xlu0 %1981, %v1831
  %v1983 = vpop.permute.xlu0 %1982
  %1986 = vset.pattern.permute.xlu0 0
  %1987 = vperm.xlu0 %1986, %v1832
  %v1988 = vpop.permute.xlu0 %1987
  %1991 = vset.pattern.permute.xlu0 0
  %1992 = vperm.xlu0 %1991, %v1833
  %v1993 = vpop.permute.xlu0 %1992
  %1996 = vset.pattern.permute.xlu0 0
  %1997 = vperm.xlu0 %1996, %v1834
  %v1998 = vpop.permute.xlu0 %1997
  %v2001 = vsel %vm1168, %v1769, 0
  %v2004 = vsel %vm1168, %v1770, 0
  %v2007 = vsel %vm1168, %v1771, 0
  %v2010 = vsel %vm1168, %v1772, 0
  %v2013 = vsel %vm1168, %v1773, 0
  %v2016 = vsel %vm1168, %v1774, 0
  %v2019 = vsel %vm1168, %v1775, 0
  %v2022 = vsel %vm1168, %v1776, 0
  %v2025 = vsel %vm1168, %v1777, 0
  %v2028 = vsel %vm1168, %v1778, 0
  %v2031 = vsel %vm1168, %v1779, 0
  %v2034 = vsel %vm1168, %v1780, 0
  %v2037 = vsel %vm1168, %v1781, 0
  %v2040 = vsel %vm1168, %v1782, 0
  %v2043 = vsel %vm1168, %v1783, 0
  %v2046 = vsel %vm1168, %v1784, 0
  %v2049 = vsel %vm1168, %v1785, 0
  %v2052 = vsel %vm1168, %v1786, 0
  %v2055 = vsel %vm1168, %v1787, 0
  %v2058 = vsel %vm1168, %v1788, 0
  %v2061 = vsel %vm1168, %v1789, 0
  %v2064 = vsel %vm1168, %v1790, 0
  %v2067 = vsel %vm1168, %v1791, 0
  %v2070 = vsel %vm1168, %v1792, 0
  %v2073 = vsel %vm1168, %v1793, 0
  %v2076 = vsel %vm1168, %v1794, 0
  %v2079 = vsel %vm1168, %v1795, 0
  %v2082 = vsel %vm1168, %v1796, 0
  %v2085 = vsel %vm1168, %v1797, 0
  %v2088 = vsel %vm1168, %v1798, 0
  %v2091 = vsel %vm1168, %v1799, 0
  %v2094 = vsel %vm1168, %v1800, 0
  %v2097 = vsel %vm1168, %v1801, 0
  %2099 = vmatprep.subr.mxu0 0.0
  %2100 = vmatpush1.msra.mxu0 %v1765
  %2101 = vmatprep.subr.mxu0 0.0
  %2102 = vmatpush1.msra.mxu0 %v1766
  %2103 = vmatprep.subr.mxu0 0.0
  %2104 = vmatpush1.msra.mxu0 %v1767
  %2105 = vmatprep.subr.mxu0 0.0
  %2106 = vmatpush1.msra.mxu0 %v1768
  %2107 = vmatprep.subr.mxu0 0.0
  %2108 = vmatpush1.msra.mxu0 0.0
  %2109 = vmatprep.subr.mxu0 0.0
  %2110 = vmatpush1.msra.mxu0 0.0
  %2111 = vmatprep.subr.mxu0 0.0
  %2112 = vmatpush1.msra.mxu0 0.0
  %2113 = vmatprep.subr.mxu0 0.0
  %2114 = vmatpush1.msra.mxu0 0.0
  %2115 = vmatprep.subr.mxu0 0.0
  %2116 = vmatpush1.msra.mxu0 0.0
  %2117 = vmatprep.subr.mxu0 0.0
  %2118 = vmatpush1.msra.mxu0 0.0
  %2119 = vmatprep.subr.mxu0 0.0
  %2120 = vmatpush1.msra.mxu0 0.0
  %2121 = vmatprep.subr.mxu0 0.0
  %2122 = vmatpush1.msra.mxu0 0.0
  %2123 = vmatprep.subr.mxu0 0.0
  %2124 = vmatpush1.msra.mxu0 0.0
  %2125 = vmatprep.subr.mxu0 0.0
  %2126 = vmatpush1.msra.mxu0 0.0
  %2127 = vmatprep.subr.mxu0 0.0
  %2128 = vmatpush1.msra.mxu0 0.0
  %2129 = vmatprep.subr.mxu0 0.0
  %2130 = vmatpush1.msra.mxu0 0.0
  %2131 = vmatprep.subr.mxu0 0.0
  %2132 = vmatpush1.msra.mxu0 0.0
  %2133 = vmatprep.subr.mxu0 0.0
  %2134 = vmatpush1.msra.mxu0 0.0
  %2135 = vmatprep.subr.mxu0 0.0
  %2136 = vmatpush1.msra.mxu0 0.0
  %2137 = vmatprep.subr.mxu0 0.0
  %2138 = vmatpush1.msra.mxu0 0.0
  %2139 = vmatprep.subr.mxu0 0.0
  %2140 = vmatpush1.msra.mxu0 0.0
  %2141 = vmatprep.subr.mxu0 0.0
  %2142 = vmatpush1.msra.mxu0 0.0
  %2143 = vmatprep.subr.mxu0 0.0
  %2144 = vmatpush1.msra.mxu0 0.0
  %2145 = vmatprep.subr.mxu0 0.0
  %2146 = vmatpush1.msra.mxu0 0.0
  %2147 = vmatprep.subr.mxu0 0.0
  %2148 = vmatpush1.msra.mxu0 0.0
  %2149 = vmatprep.subr.mxu0 0.0
  %2150 = vmatpush1.msra.mxu0 0.0
  %2151 = vmatprep.subr.mxu0 0.0
  %2152 = vmatpush1.msra.mxu0 0.0
  %2153 = vmatprep.subr.mxu0 0.0
  %2154 = vmatpush1.msra.mxu0 0.0
  %2155 = vmatprep.subr.mxu0 0.0
  %2156 = vmatpush1.msra.mxu0 0.0
  %2157 = vmatprep.subr.mxu0 0.0
  %2158 = vmatpush1.msra.mxu0 0.0
  %2159 = vmatprep.subr.mxu0 0.0
  %2160 = vmatpush1.msra.mxu0 0.0
  %2161 = vmatprep.subr.mxu0 0.0
  %2162 = vmatpush1.msra.mxu0 0.0
  %2163 = vmatprep.mubr.f32.mxu0 0.0
  %2164 = vmatmul.mubr.f32.gmra.mrb[0].mxu0 %v2001
  %v2165 = vpop.f32.mrb[0].mxu0
  %v2166 = vadd.f32 %v1838, %v2165
  %v2167 = vpop.f32.mrb[0].mxu0
  %2168 = vmatprep.mubr.f32.mxu0 0.0
  %2169 = vmatmul.mubr.f32.gmra.mrb[0].mxu0 %v2004
  %v2170 = vpop.f32.mrb[0].mxu0
  %v2171 = vadd.f32 %v1843, %v2170
  %v2172 = vpop.f32.mrb[0].mxu0
  %2173 = vmatprep.mubr.f32.mxu0 0.0
  %2174 = vmatmul.mubr.f32.gmra.mrb[0].mxu0 %v2007
  %v2175 = vpop.f32.mrb[0].mxu0
  %v2176 = vadd.f32 %v1848, %v2175
  %v2177 = vpop.f32.mrb[0].mxu0
  %2178 = vmatprep.mubr.f32.mxu0 0.0
  %2179 = vmatmul.mubr.f32.gmra.mrb[0].mxu0 %v2010
  %v2180 = vpop.f32.mrb[0].mxu0
  %v2181 = vadd.f32 %v1853, %v2180
  %v2182 = vpop.f32.mrb[0].mxu0
  %2183 = vmatprep.mubr.f32.mxu0 0.0
  %2184 = vmatmul.mubr.f32.gmra.mrb[0].mxu0 %v2013
  %v2185 = vpop.f32.mrb[0].mxu0
  %v2186 = vadd.f32 %v1858, %v2185
  %v2187 = vpop.f32.mrb[0].mxu0
  %2188 = vmatprep.mubr.f32.mxu0 0.0
  %2189 = vmatmul.mubr.f32.gmra.mrb[0].mxu0 %v2016
  %v2190 = vpop.f32.mrb[0].mxu0
  %v2191 = vadd.f32 %v1863, %v2190
  %v2192 = vpop.f32.mrb[0].mxu0
  %2193 = vmatprep.mubr.f32.mxu0 0.0
  %2194 = vmatmul.mubr.f32.gmra.mrb[0].mxu0 %v2019
  %v2195 = vpop.f32.mrb[0].mxu0
  %v2196 = vadd.f32 %v1868, %v2195
  %v2197 = vpop.f32.mrb[0].mxu0
  %2198 = vmatprep.mubr.f32.mxu0 0.0
  %2199 = vmatmul.mubr.f32.gmra.mrb[0].mxu0 %v2022
  %v2200 = vpop.f32.mrb[0].mxu0
  %v2201 = vadd.f32 %v1873, %v2200
  %v2202 = vpop.f32.mrb[0].mxu0
  %2203 = vmatprep.mubr.f32.mxu0 0.0
  %2204 = vmatmul.mubr.f32.gmra.mrb[0].mxu0 %v2025
  %v2205 = vpop.f32.mrb[0].mxu0
  %v2206 = vadd.f32 %v1878, %v2205
  %v2207 = vpop.f32.mrb[0].mxu0
  %2208 = vmatprep.mubr.f32.mxu0 0.0
  %2209 = vmatmul.mubr.f32.gmra.mrb[0].mxu0 %v2028
  %v2210 = vpop.f32.mrb[0].mxu0
  %v2211 = vadd.f32 %v1883, %v2210
  %v2212 = vpop.f32.mrb[0].mxu0
  %2213 = vmatprep.mubr.f32.mxu0 0.0
  %2214 = vmatmul.mubr.f32.gmra.mrb[0].mxu0 %v2031
  %v2215 = vpop.f32.mrb[0].mxu0
  %v2216 = vadd.f32 %v1888, %v2215
  %v2217 = vpop.f32.mrb[0].mxu0
  %2218 = vmatprep.mubr.f32.mxu0 0.0
  %2219 = vmatmul.mubr.f32.gmra.mrb[0].mxu0 %v2034
  %v2220 = vpop.f32.mrb[0].mxu0
  %v2221 = vadd.f32 %v1893, %v2220
  %v2222 = vpop.f32.mrb[0].mxu0
  %2223 = vmatprep.mubr.f32.mxu0 0.0
  %2224 = vmatmul.mubr.f32.gmra.mrb[0].mxu0 %v2037
  %v2225 = vpop.f32.mrb[0].mxu0
  %v2226 = vadd.f32 %v1898, %v2225
  %v2227 = vpop.f32.mrb[0].mxu0
  %2228 = vmatprep.mubr.f32.mxu0 0.0
  %2229 = vmatmul.mubr.f32.gmra.mrb[0].mxu0 %v2040
  %v2230 = vpop.f32.mrb[0].mxu0
  %v2231 = vadd.f32 %v1903, %v2230
  %v2232 = vpop.f32.mrb[0].mxu0
  %2233 = vmatprep.mubr.f32.mxu0 0.0
  %2234 = vmatmul.mubr.f32.gmra.mrb[0].mxu0 %v2043
  %v2235 = vpop.f32.mrb[0].mxu0
  %v2236 = vadd.f32 %v1908, %v2235
  %v2237 = vpop.f32.mrb[0].mxu0
  %2238 = vmatprep.mubr.f32.mxu0 0.0
  %2239 = vmatmul.mubr.f32.gmra.mrb[0].mxu0 %v2046
  %v2240 = vpop.f32.mrb[0].mxu0
  %v2241 = vadd.f32 %v1913, %v2240
  %v2242 = vpop.f32.mrb[0].mxu0
  %2243 = vmatprep.mubr.f32.mxu0 0.0
  %2244 = vmatmul.mubr.f32.gmra.mrb[0].mxu0 %v2049
  %v2245 = vpop.f32.mrb[0].mxu0
  %v2246 = vadd.f32 %v1918, %v2245
  %v2247 = vpop.f32.mrb[0].mxu0
  %2248 = vmatprep.mubr.f32.mxu0 0.0
  %2249 = vmatmul.mubr.f32.gmra.mrb[0].mxu0 %v2052
  %v2250 = vpop.f32.mrb[0].mxu0
  %v2251 = vadd.f32 %v1923, %v2250
  %v2252 = vpop.f32.mrb[0].mxu0
  %2253 = vmatprep.mubr.f32.mxu0 0.0
  %2254 = vmatmul.mubr.f32.gmra.mrb[0].mxu0 %v2055
  %v2255 = vpop.f32.mrb[0].mxu0
  %v2256 = vadd.f32 %v1928, %v2255
  %v2257 = vpop.f32.mrb[0].mxu0
  %2258 = vmatprep.mubr.f32.mxu0 0.0
  %2259 = vmatmul.mubr.f32.gmra.mrb[0].mxu0 %v2058
  %v2260 = vpop.f32.mrb[0].mxu0
  %v2261 = vadd.f32 %v1933, %v2260
  %v2262 = vpop.f32.mrb[0].mxu0
  %2263 = vmatprep.mubr.f32.mxu0 0.0
  %2264 = vmatmul.mubr.f32.gmra.mrb[0].mxu0 %v2061
  %v2265 = vpop.f32.mrb[0].mxu0
  %v2266 = vadd.f32 %v1938, %v2265
  %v2267 = vpop.f32.mrb[0].mxu0
  %2268 = vmatprep.mubr.f32.mxu0 0.0
  %2269 = vmatmul.mubr.f32.gmra.mrb[0].mxu0 %v2064
  %v2270 = vpop.f32.mrb[0].mxu0
  %v2271 = vadd.f32 %v1943, %v2270
  %v2272 = vpop.f32.mrb[0].mxu0
  %2273 = vmatprep.mubr.f32.mxu0 0.0
  %2274 = vmatmul.mubr.f32.gmra.mrb[0].mxu0 %v2067
  %v2275 = vpop.f32.mrb[0].mxu0
  %v2276 = vadd.f32 %v1948, %v2275
  %v2277 = vpop.f32.mrb[0].mxu0
  %2278 = vmatprep.mubr.f32.mxu0 0.0
  %2279 = vmatmul.mubr.f32.gmra.mrb[0].mxu0 %v2070
  %v2280 = vpop.f32.mrb[0].mxu0
  %v2281 = vadd.f32 %v1953, %v2280
  %v2282 = vpop.f32.mrb[0].mxu0
  %2283 = vmatprep.mubr.f32.mxu0 0.0
  %2284 = vmatmul.mubr.f32.gmra.mrb[0].mxu0 %v2073
  %v2285 = vpop.f32.mrb[0].mxu0
  %v2286 = vadd.f32 %v1958, %v2285
  %v2287 = vpop.f32.mrb[0].mxu0
  %2288 = vmatprep.mubr.f32.mxu0 0.0
  %2289 = vmatmul.mubr.f32.gmra.mrb[0].mxu0 %v2076
  %v2290 = vpop.f32.mrb[0].mxu0
  %v2291 = vadd.f32 %v1963, %v2290
  %v2292 = vpop.f32.mrb[0].mxu0
  %2293 = vmatprep.mubr.f32.mxu0 0.0
  %2294 = vmatmul.mubr.f32.gmra.mrb[0].mxu0 %v2079
  %v2295 = vpop.f32.mrb[0].mxu0
  %v2296 = vadd.f32 %v1968, %v2295
  %v2297 = vpop.f32.mrb[0].mxu0
  %2298 = vmatprep.mubr.f32.mxu0 0.0
  %2299 = vmatmul.mubr.f32.gmra.mrb[0].mxu0 %v2082
  %v2300 = vpop.f32.mrb[0].mxu0
  %v2301 = vadd.f32 %v1973, %v2300
  %v2302 = vpop.f32.mrb[0].mxu0
  %2303 = vmatprep.mubr.f32.mxu0 0.0
  %2304 = vmatmul.mubr.f32.gmra.mrb[0].mxu0 %v2085
  %v2305 = vpop.f32.mrb[0].mxu0
  %v2306 = vadd.f32 %v1978, %v2305
  %v2307 = vpop.f32.mrb[0].mxu0
  %2308 = vmatprep.mubr.f32.mxu0 0.0
  %2309 = vmatmul.mubr.f32.gmra.mrb[0].mxu0 %v2088
  %v2310 = vpop.f32.mrb[0].mxu0
  %v2311 = vadd.f32 %v1983, %v2310
  %v2312 = vpop.f32.mrb[0].mxu0
  %2313 = vmatprep.mubr.f32.mxu0 0.0
  %2314 = vmatmul.mubr.f32.gmra.mrb[0].mxu0 %v2091
  %v2315 = vpop.f32.mrb[0].mxu0
  %v2316 = vadd.f32 %v1988, %v2315
  %v2317 = vpop.f32.mrb[0].mxu0
  %2318 = vmatprep.mubr.f32.mxu0 0.0
  %2319 = vmatmul.mubr.f32.gmra.mrb[0].mxu0 %v2094
  %v2320 = vpop.f32.mrb[0].mxu0
  %v2321 = vadd.f32 %v1993, %v2320
  %v2322 = vpop.f32.mrb[0].mxu0
  %2323 = vmatprep.mubr.f32.mxu0 0.0
  %2324 = vmatmul.mubr.f32.gmra.mrb[0].mxu0 %v2097
  %v2325 = vpop.f32.mrb[0].mxu0
  %v2326 = vadd.f32 %v1998, %v2325
  %v2327 = vpop.f32.mrb[0].mxu0
  %2328 = vdwg.mxu0
  %v2329 = vxor.u32 %v2326, 2147483648
  %v2330 = vmul.f32 %v2329, 1.442695
  %v2331 = vpow.pop %v2330
  %v2332 = vadd.f32 %v2331, 1.0
  %v2333 = vrcp.pop %v2332
  %v2334 = vmul.f32 1.0, %v2333
  %v2335 = vmax.f32 %v2334, 0.0001
  %v2336 = vmin.f32 %v2335, 0.9999
  %v2337 = vld [vmem:[%s49] sm:$0xff]
  %v2338 = vld [vmem:[%s49 + $0x8] sm:$0xff]
  %vm2339 = vcmp.ne.f32.partialorder %v2337, 0.0
  %vm2340 = vcmp.ne.f32.partialorder %v2338, 0.0
  %v2341 = vld [vmem:[%s51] sm:$0xff]
  %v2342 = vld [vmem:[%s51 + $0x8] sm:$0xff]
  %vm2343 = vcmp.ne.f32.partialorder %v2341, 0.0
  %vm2344 = vcmp.ne.f32.partialorder %v2342, 0.0
  %v2345 = vld [vmem:[%s53] sm:$0xff]
  %v2346 = vld [vmem:[%s53 + $0x8] sm:$0xff]
  %vm2347 = vcmp.ne.f32.partialorder %v2345, 0.0
  %vm2348 = vcmp.ne.f32.partialorder %v2346, 0.0
  %v2349 = vlaneseq
  %v2350 = vshrl.u32 %v2349, 7
  %v2351 = vsub.s32 0, %v2350
  %v2352 = vrot.slane %v2336, %v2351
  %v2353 = vsel %vm2339, %v2352, -1.0
  %v2354 = vsel %vm2340, %v2352, -1.0
  %v2355 = vsel %vm1052, %v2353, -inf
  %2356 = vmax.xlane.f32.xlu0 %v2355
  %v2357 = vpop.xlane.xlu0 %2356
  %v2358 = vsel %vm1052, %v2354, -inf
  %2359 = vmax.xlane.f32.xlu0 %v2358
  %v2360 = vpop.xlane.xlu0 %2359
  %v2361 = vsel %vm2343, %v2352, -1.0
  %v2362 = vsel %vm2344, %v2352, -1.0
  %v2363 = vsel %vm1052, %v2361, -inf
  %2364 = vmax.xlane.f32.xlu0 %v2363
  %v2365 = vpop.xlane.xlu0 %2364
  %v2366 = vsel %vm1052, %v2362, -inf
  %2367 = vmax.xlane.f32.xlu0 %v2366
  %v2368 = vpop.xlane.xlu0 %2367
  %vm2369 = vcmp.eq.f32.partialorder %v2365, %v2357
  %vm2370 = vcmp.eq.f32.partialorder %v2368, %v2360
  %v2371 = vsel %vm2369, 1, 0
  %v2372 = vsel %vm2370, 1, 0
  %v2373 = vcvt.s32.f32 %v2371
  %v2374 = vcvt.s32.f32 %v2372
  %v2375 = vmul.f32 %v2357, %v2373
  %v2376 = vmul.f32 %v2360, %v2374
  %v2377 = vsel %vm2339, %v2375, -1.0
  %v2378 = vsel %vm2340, %v2376, -1.0
  %v2379 = vsel %vm1052, %v2377, -inf
  %v2380 = vsel %vm1052, %v2378, -inf
  %v2381 = vmax.f32 %v2379, %v2380
  %v2382 = vrot.slane %v2381, 4
  %v2383 = vmax.f32 %v2381, %v2382
  %v2384 = vrot.slane %v2383, 2
  %v2385 = vmax.f32 %v2383, %v2384
  %v2386 = vrot.slane %v2385, 1
  %v2387 = vmax.f32 %v2385, %v2386
  %vm2388 = vcmp.gt.f32.partialorder %v2375, %v2387
  %vm2389 = vcmp.gt.f32.partialorder %v2376, %v2387
  %vm2390 = vcmp.eq.f32.partialorder %v2375, %v2387
  %vm2391 = vcmp.eq.f32.partialorder %v2376, %v2387
  %vm2392 = vmand %vm2390, %vm2347
  %vm2393 = vmand %vm2391, %vm2348
  %vm2394 = vmor %vm2388, %vm2392
  %vm2395 = vmor %vm2389, %vm2393
  %v2396 = vsel %vm2394, 1.0, 0.0
  %v2397 = vsel %vm2395, 1.0, 0.0
  %v2398 = vsel %vm1052, %v2396, 0.0
  %v2399 = vsel %vm1052, %v2397, 0.0
  %v2400 = vadd.f32 %v2398, %v2399
  %v2401 = vrot.slane %v2400, 4
  %v2402 = vadd.f32 %v2400, %v2401
  %v2403 = vrot.slane %v2402, 2
  %v2404 = vadd.f32 %v2402, %v2403
  %v2405 = vrot.slane %v2404, 1
  %v2406 = vadd.f32 %v2404, %v2405
  %v2407 = vld [vmem:[%s55] sm:$0xf]
  %vm2408 = vcmp.eq.f32.partialorder %v2406, %v2407
  %v2409 = vsel %vm2408, 1, 0
  %v2410 = vcvt.s32.f32 %v2409
  %v2411 = vsel %vm2408, %v2387, 0.0
  %vm2412 = vcmask 125952
  %v2413 = vsel %vm2412, %v2411, 0.0
  %2414 = vadd.xlane.f32.xlu0 %v2413
  %v2415 = vpop.xlane.xlu0 %2414
  %v2416 = vld [vmem:[%s57] sm:$0xf]
  %v2417 = vsel %vm2408, %v2416, 0.0
  %v2418 = vsel %vm2412, %v2417, 0.0
  %2419 = vadd.xlane.f32.xlu0 %v2418
  %v2420 = vpop.xlane.xlu0 %2419
  %v2422 = vsel %vm1052, %v2410, 0
  %v2425 = vsel %vm1052, %v2166, 0
  %v2428 = vsel %vm1052, %v2171, 0
  %v2431 = vsel %vm1052, %v2176, 0
  %v2434 = vsel %vm1052, %v2181, 0
  %v2437 = vsel %vm1052, %v2186, 0
  %v2440 = vsel %vm1052, %v2191, 0
  %v2443 = vsel %vm1052, %v2196, 0
  %v2446 = vsel %vm1052, %v2201, 0
  %v2449 = vsel %vm1052, %v2206, 0
  %v2452 = vsel %vm1052, %v2211, 0
  %v2455 = vsel %vm1052, %v2216, 0
  %v2458 = vsel %vm1052, %v2221, 0
  %v2461 = vsel %vm1052, %v2226, 0
  %v2464 = vsel %vm1052, %v2231, 0
  %v2467 = vsel %vm1052, %v2236, 0
  %v2470 = vsel %vm1052, %v2241, 0
  %v2473 = vsel %vm1052, %v2246, 0
  %v2476 = vsel %vm1052, %v2251, 0
  %v2479 = vsel %vm1052, %v2256, 0
  %v2482 = vsel %vm1052, %v2261, 0
  %v2485 = vsel %vm1052, %v2266, 0
  %v2488 = vsel %vm1052, %v2271, 0
  %v2491 = vsel %vm1052, %v2276, 0
  %v2494 = vsel %vm1052, %v2281, 0
  %v2497 = vsel %vm1052, %v2286, 0
  %v2500 = vsel %vm1052, %v2291, 0
  %v2503 = vsel %vm1052, %v2296, 0
  %v2506 = vsel %vm1052, %v2301, 0
  %v2509 = vsel %vm1052, %v2306, 0
  %v2512 = vsel %vm1052, %v2311, 0
  %v2515 = vsel %vm1052, %v2316, 0
  %v2518 = vsel %vm1052, %v2321, 0
  %2520 = vmatprep.subr.mxu0 0.0
  %2521 = vmatpush1.xpose.msra.mxu0 %v2425
  %2522 = vmatprep.subr.mxu0 0.0
  %2523 = vmatpush1.xpose.msra.mxu0 %v2428
  %2524 = vmatprep.subr.mxu0 0.0
  %2525 = vmatpush1.xpose.msra.mxu0 %v2431
  %2526 = vmatprep.subr.mxu0 0.0
  %2527 = vmatpush1.xpose.msra.mxu0 %v2434
  %2528 = vmatprep.subr.mxu0 0.0
  %2529 = vmatpush1.xpose.msra.mxu0 %v2437
  %2530 = vmatprep.subr.mxu0 0.0
  %2531 = vmatpush1.xpose.msra.mxu0 %v2440
  %2532 = vmatprep.subr.mxu0 0.0
  %2533 = vmatpush1.xpose.msra.mxu0 %v2443
  %2534 = vmatprep.subr.mxu0 0.0
  %2535 = vmatpush1.xpose.msra.mxu0 %v2446
  %2536 = vmatprep.subr.mxu0 0.0
  %2537 = vmatpush1.xpose.msra.mxu0 %v2449
  %2538 = vmatprep.subr.mxu0 0.0
  %2539 = vmatpush1.xpose.msra.mxu0 %v2452
  %2540 = vmatprep.subr.mxu0 0.0
  %2541 = vmatpush1.xpose.msra.mxu0 %v2455
  %2542 = vmatprep.subr.mxu0 0.0
  %2543 = vmatpush1.xpose.msra.mxu0 %v2458
  %2544 = vmatprep.subr.mxu0 0.0
  %2545 = vmatpush1.xpose.msra.mxu0 %v2461
  %2546 = vmatprep.subr.mxu0 0.0
  %2547 = vmatpush1.xpose.msra.mxu0 %v2464
  %2548 = vmatprep.subr.mxu0 0.0
  %2549 = vmatpush1.xpose.msra.mxu0 %v2467
  %2550 = vmatprep.subr.mxu0 0.0
  %2551 = vmatpush1.xpose.msra.mxu0 %v2470
  %2552 = vmatprep.subr.mxu0 0.0
  %2553 = vmatpush1.xpose.msra.mxu0 %v2473
  %2554 = vmatprep.subr.mxu0 0.0
  %2555 = vmatpush1.xpose.msra.mxu0 %v2476
  %2556 = vmatprep.subr.mxu0 0.0
  %2557 = vmatpush1.xpose.msra.mxu0 %v2479
  %2558 = vmatprep.subr.mxu0 0.0
  %2559 = vmatpush1.xpose.msra.mxu0 %v2482
  %2560 = vmatprep.subr.mxu0 0.0
  %2561 = vmatpush1.xpose.msra.mxu0 %v2485
  %2562 = vmatprep.subr.mxu0 0.0
  %2563 = vmatpush1.xpose.msra.mxu0 %v2488
  %2564 = vmatprep.subr.mxu0 0.0
  %2565 = vmatpush1.xpose.msra.mxu0 %v2491
  %2566 = vmatprep.subr.mxu0 0.0
  %2567 = vmatpush1.xpose.msra.mxu0 %v2494
  %2568 = vmatprep.subr.mxu0 0.0
  %2569 = vmatpush1.xpose.msra.mxu0 %v2497
  %2570 = vmatprep.subr.mxu0 0.0
  %2571 = vmatpush1.xpose.msra.mxu0 %v2500
  %2572 = vmatprep.subr.mxu0 0.0
  %2573 = vmatpush1.xpose.msra.mxu0 %v2503
  %2574 = vmatprep.subr.mxu0 0.0
  %2575 = vmatpush1.xpose.msra.mxu0 %v2506
  %2576 = vmatprep.subr.mxu0 0.0
  %2577 = vmatpush1.xpose.msra.mxu0 %v2509
  %2578 = vmatprep.subr.mxu0 0.0
  %2579 = vmatpush1.xpose.msra.mxu0 %v2512
  %2580 = vmatprep.subr.mxu0 0.0
  %2581 = vmatpush1.xpose.msra.mxu0 %v2515
  %2582 = vmatprep.subr.mxu0 0.0
  %2583 = vmatpush1.xpose.msra.mxu0 %v2518
  %2584 = vmatprep.mubr.f32.mxu0 0.0
  %2585 = vmatmul.mubr.f32.gmra.mrb[0].mxu0 %v2422
  %v2586 = vpop.f32.mrb[0].mxu0
  %v2587 = vadd.f32 0.0, %v2586
  %v2588 = vpop.f32.mrb[0].mxu0
  %v2589 = vadd.f32 0.0, %v2588
  %2590 = vdwg.mxu0
  %v2592 = vrot.slane %v2589, 4
  %vm2594 = vcmask 1043456
  %v2595 = vsel %vm2594, %v2587, %v2592
  %v2596 = vld [vmem:[%s35] sm:$0xff]
  %v2597 = vld [vmem:[%s35 + $0x8] sm:$0xff]
  %v2598 = vld [vmem:[%s35 + $0x10] sm:$0xff]
  %v2599 = vld [vmem:[%s35 + $0x18] sm:$0xff]
  %v2600 = vld [vmem:[%s35 + $0x20] sm:$0xff]
  %v2601 = vld [vmem:[%s35 + $0x28] sm:$0xff]
  %v2602 = vld [vmem:[%s35 + $0x30] sm:$0xff]
  %v2603 = vld [vmem:[%s35 + $0x38] sm:$0xff]
  %v2604 = vld [vmem:[%s37] sm:$0xff]
  %v2605 = vld [vmem:[%s37 + $0x8] sm:$0xff]
  %v2606 = vld [vmem:[%s37 + $0x10] sm:$0xff]
  %v2607 = vld [vmem:[%s37 + $0x18] sm:$0xff]
  %v2608 = vld [vmem:[%s37 + $0x20] sm:$0xff]
  %v2609 = vld [vmem:[%s37 + $0x28] sm:$0xff]
  %v2610 = vld [vmem:[%s37 + $0x30] sm:$0xff]
  %v2611 = vld [vmem:[%s37 + $0x38] sm:$0xff]
  %2613 = vset.pattern.permute.xlu0 0
  %2614 = vperm.xlu0 %2613, %v2604
  %v2615 = vpop.permute.xlu0 %2614
  %2618 = vset.pattern.permute.xlu0 0
  %2619 = vperm.xlu0 %2618, %v2605
  %v2620 = vpop.permute.xlu0 %2619
  %2623 = vset.pattern.permute.xlu0 0
  %2624 = vperm.xlu0 %2623, %v2606
  %v2625 = vpop.permute.xlu0 %2624
  %2628 = vset.pattern.permute.xlu0 0
  %2629 = vperm.xlu0 %2628, %v2607
  %v2630 = vpop.permute.xlu0 %2629
  %2633 = vset.pattern.permute.xlu0 0
  %2634 = vperm.xlu0 %2633, %v2608
  %v2635 = vpop.permute.xlu0 %2634
  %2638 = vset.pattern.permute.xlu0 0
  %2639 = vperm.xlu0 %2638, %v2609
  %v2640 = vpop.permute.xlu0 %2639
  %2643 = vset.pattern.permute.xlu0 0
  %2644 = vperm.xlu0 %2643, %v2610
  %v2645 = vpop.permute.xlu0 %2644
  %2648 = vset.pattern.permute.xlu0 0
  %2649 = vperm.xlu0 %2648, %v2611
  %v2650 = vpop.permute.xlu0 %2649
  %v2653 = vsel %vm1052, %v2596, 0
  %v2656 = vsel %vm1052, %v2597, 0
  %v2659 = vsel %vm1052, %v2598, 0
  %v2662 = vsel %vm1052, %v2599, 0
  %v2665 = vsel %vm1052, %v2600, 0
  %v2668 = vsel %vm1052, %v2601, 0
  %v2671 = vsel %vm1052, %v2602, 0
  %v2674 = vsel %vm1052, %v2603, 0
  %2676 = vmatprep.subr.mxu0 %v1637
  %2677 = vmatpush1.msra.mxu0 %v1636
  %2678 = vmatprep.subr.mxu0 %v1639
  %2679 = vmatpush1.msra.mxu0 %v1638
  %2680 = vmatprep.subr.mxu0 0.0
  %2681 = vmatpush1.msra.mxu0 0.0
  %2682 = vmatprep.subr.mxu0 0.0
  %2683 = vmatpush1.msra.mxu0 0.0
  %2684 = vmatprep.subr.mxu0 0.0
  %2685 = vmatpush1.msra.mxu0 0.0
  %2686 = vmatprep.subr.mxu0 0.0
  %2687 = vmatpush1.msra.mxu0 0.0
  %2688 = vmatprep.subr.mxu0 0.0
  %2689 = vmatpush1.msra.mxu0 0.0
  %2690 = vmatprep.subr.mxu0 0.0
  %2691 = vmatpush1.msra.mxu0 0.0
  %2692 = vmatprep.subr.mxu0 0.0
  %2693 = vmatpush1.msra.mxu0 0.0
  %2694 = vmatprep.subr.mxu0 0.0
  %2695 = vmatpush1.msra.mxu0 0.0
  %2696 = vmatprep.subr.mxu0 0.0
  %2697 = vmatpush1.msra.mxu0 0.0
  %2698 = vmatprep.subr.mxu0 0.0
  %2699 = vmatpush1.msra.mxu0 0.0
  %2700 = vmatprep.subr.mxu0 0.0
  %2701 = vmatpush1.msra.mxu0 0.0
  %2702 = vmatprep.subr.mxu0 0.0
  %2703 = vmatpush1.msra.mxu0 0.0
  %2704 = vmatprep.subr.mxu0 0.0
  %2705 = vmatpush1.msra.mxu0 0.0
  %2706 = vmatprep.subr.mxu0 0.0
  %2707 = vmatpush1.msra.mxu0 0.0
  %2708 = vmatprep.subr.mxu0 0.0
  %2709 = vmatpush1.msra.mxu0 0.0
  %2710 = vmatprep.subr.mxu0 0.0
  %2711 = vmatpush1.msra.mxu0 0.0
  %2712 = vmatprep.subr.mxu0 0.0
  %2713 = vmatpush1.msra.mxu0 0.0
  %2714 = vmatprep.subr.mxu0 0.0
  %2715 = vmatpush1.msra.mxu0 0.0
  %2716 = vmatprep.subr.mxu0 0.0
  %2717 = vmatpush1.msra.mxu0 0.0
  %2718 = vmatprep.subr.mxu0 0.0
  %2719 = vmatpush1.msra.mxu0 0.0
  %2720 = vmatprep.subr.mxu0 0.0
  %2721 = vmatpush1.msra.mxu0 0.0
  %2722 = vmatprep.subr.mxu0 0.0
  %2723 = vmatpush1.msra.mxu0 0.0
  %2724 = vmatprep.subr.mxu0 0.0
  %2725 = vmatpush1.msra.mxu0 0.0
  %2726 = vmatprep.subr.mxu0 0.0
  %2727 = vmatpush1.msra.mxu0 0.0
  %2728 = vmatprep.subr.mxu0 0.0
  %2729 = vmatpush1.msra.mxu0 0.0
  %2730 = vmatprep.subr.mxu0 0.0
  %2731 = vmatpush1.msra.mxu0 0.0
  %2732 = vmatprep.subr.mxu0 0.0
  %2733 = vmatpush1.msra.mxu0 0.0
  %2734 = vmatprep.subr.mxu0 0.0
  %2735 = vmatpush1.msra.mxu0 0.0
  %2736 = vmatprep.subr.mxu0 0.0
  %2737 = vmatpush1.msra.mxu0 0.0
  %2738 = vmatprep.subr.mxu0 0.0
  %2739 = vmatpush1.msra.mxu0 0.0
  %2740 = vmatprep.mubr.f32.mxu0 0.0
  %2741 = vmatmul.mubr.f32.gmra.mrb[0].mxu0 %v2653
  %v2742 = vpop.f32.mrb[0].mxu0
  %v2743 = vadd.f32 %v2615, %v2742
  %v2744 = vpop.f32.mrb[0].mxu0
  %v2745 = vadd.f32 %v2615, %v2744
  %2746 = vmatprep.mubr.f32.mxu0 0.0
  %2747 = vmatmul.mubr.f32.gmra.mrb[0].mxu0 %v2656
  %v2748 = vpop.f32.mrb[0].mxu0
  %v2749 = vadd.f32 %v2620, %v2748
  %v2750 = vpop.f32.mrb[0].mxu0
  %v2751 = vadd.f32 %v2620, %v2750
  %2752 = vmatprep.mubr.f32.mxu0 0.0
  %2753 = vmatmul.mubr.f32.gmra.mrb[0].mxu0 %v2659
  %v2754 = vpop.f32.mrb[0].mxu0
  %v2755 = vadd.f32 %v2625, %v2754
  %v2756 = vpop.f32.mrb[0].mxu0
  %v2757 = vadd.f32 %v2625, %v2756
  %2758 = vmatprep.mubr.f32.mxu0 0.0
  %2759 = vmatmul.mubr.f32.gmra.mrb[0].mxu0 %v2662
  %v2760 = vpop.f32.mrb[0].mxu0
  %v2761 = vadd.f32 %v2630, %v2760
  %v2762 = vpop.f32.mrb[0].mxu0
  %v2763 = vadd.f32 %v2630, %v2762
  %2764 = vmatprep.mubr.f32.mxu0 0.0
  %2765 = vmatmul.mubr.f32.gmra.mrb[0].mxu0 %v2665
  %v2766 = vpop.f32.mrb[0].mxu0
  %v2767 = vadd.f32 %v2635, %v2766
  %v2768 = vpop.f32.mrb[0].mxu0
  %v2769 = vadd.f32 %v2635, %v2768
  %2770 = vmatprep.mubr.f32.mxu0 0.0
  %2771 = vmatmul.mubr.f32.gmra.mrb[0].mxu0 %v2668
  %v2772 = vpop.f32.mrb[0].mxu0
  %v2773 = vadd.f32 %v2640, %v2772
  %v2774 = vpop.f32.mrb[0].mxu0
  %v2775 = vadd.f32 %v2640, %v2774
  %2776 = vmatprep.mubr.f32.mxu0 0.0
  %2777 = vmatmul.mubr.f32.gmra.mrb[0].mxu0 %v2671
  %v2778 = vpop.f32.mrb[0].mxu0
  %v2779 = vadd.f32 %v2645, %v2778
  %v2780 = vpop.f32.mrb[0].mxu0
  %v2781 = vadd.f32 %v2645, %v2780
  %2782 = vmatprep.mubr.f32.mxu0 0.0
  %2783 = vmatmul.mubr.f32.gmra.mrb[0].mxu0 %v2674
  %v2784 = vpop.f32.mrb[0].mxu0
  %v2785 = vadd.f32 %v2650, %v2784
  %v2786 = vpop.f32.mrb[0].mxu0
  %v2787 = vadd.f32 %v2650, %v2786
  %2788 = vdwg.mxu0
  %v2789 = vmax.f32 %v2743, 0.0
  %v2790 = vmax.f32 %v2745, 0.0
  %v2791 = vmax.f32 %v2749, 0.0
  %v2792 = vmax.f32 %v2751, 0.0
  %v2793 = vmax.f32 %v2755, 0.0
  %v2794 = vmax.f32 %v2757, 0.0
  %v2795 = vmax.f32 %v2761, 0.0
  %v2796 = vmax.f32 %v2763, 0.0
  %v2797 = vmax.f32 %v2767, 0.0
  %v2798 = vmax.f32 %v2769, 0.0
  %v2799 = vmax.f32 %v2773, 0.0
  %v2800 = vmax.f32 %v2775, 0.0
  %v2801 = vmax.f32 %v2779, 0.0
  %v2802 = vmax.f32 %v2781, 0.0
  %v2803 = vmax.f32 %v2785, 0.0
  %v2804 = vmax.f32 %v2787, 0.0
  %v2805 = vld [vmem:[%s47] sm:$0xf]
  %2807 = vset.pattern.permute.xlu0 64
  %2808 = vperm.xlu0 %2807, %v2595
  %v2809 = vpop.permute.xlu0 %2808
  %v2812 = vlaneseq
  %v2813 = vshrl.u32 %v2812, 7
  %v2814 = vsub.s32 0, %v2813
  %v2815 = vrot.slane %v2805, %v2814
  %v2816 = vlaneseq
  %v2817 = vshrl.u32 %v2816, 7
  %v2818 = vsub.s32 2, %v2817
  %v2819 = vrot.slane %v2805, %v2818
  %v2822 = vlaneseq
  %v2823 = vshrl.u32 %v2822, 7
  %v2824 = vsub.s32 0, %v2823
  %v2825 = vrot.slane %v2815, %v2824
  %v2826 = vlaneseq
  %v2827 = vshrl.u32 %v2826, 7
  %v2828 = vsub.s32 0, %v2827
  %v2829 = vrot.slane %v2819, %v2828
  %v2830 = vmul.f32 %v2809, %v2825
  %v2831 = vmul.f32 %v2809, %v2829
  %v2832 = vsel %vm942, %v2595, 0
  %2834 = vmatprep.subr.mxu0 %v2790
  %2835 = vmatpush1.msra.mxu0 %v2789
  %2836 = vmatprep.subr.mxu0 %v2792
  %2837 = vmatpush1.msra.mxu0 %v2791
  %2838 = vmatprep.subr.mxu0 %v2794
  %2839 = vmatpush1.msra.mxu0 %v2793
  %2840 = vmatprep.subr.mxu0 %v2796
  %2841 = vmatpush1.msra.mxu0 %v2795
  %2842 = vmatprep.subr.mxu0 %v2798
  %2843 = vmatpush1.msra.mxu0 %v2797
  %2844 = vmatprep.subr.mxu0 %v2800
  %2845 = vmatpush1.msra.mxu0 %v2799
  %2846 = vmatprep.subr.mxu0 %v2802
  %2847 = vmatpush1.msra.mxu0 %v2801
  %2848 = vmatprep.subr.mxu0 %v2804
  %2849 = vmatpush1.msra.mxu0 %v2803
  %2850 = vmatprep.subr.mxu0 0.0
  %2851 = vmatpush1.msra.mxu0 0.0
  %2852 = vmatprep.subr.mxu0 0.0
  %2853 = vmatpush1.msra.mxu0 0.0
  %2854 = vmatprep.subr.mxu0 0.0
  %2855 = vmatpush1.msra.mxu0 0.0
  %2856 = vmatprep.subr.mxu0 0.0
  %2857 = vmatpush1.msra.mxu0 0.0
  %2858 = vmatprep.subr.mxu0 0.0
  %2859 = vmatpush1.msra.mxu0 0.0
  %2860 = vmatprep.subr.mxu0 0.0
  %2861 = vmatpush1.msra.mxu0 0.0
  %2862 = vmatprep.subr.mxu0 0.0
  %2863 = vmatpush1.msra.mxu0 0.0
  %2864 = vmatprep.subr.mxu0 0.0
  %2865 = vmatpush1.msra.mxu0 0.0
  %2866 = vmatprep.subr.mxu0 0.0
  %2867 = vmatpush1.msra.mxu0 0.0
  %2868 = vmatprep.subr.mxu0 0.0
  %2869 = vmatpush1.msra.mxu0 0.0
  %2870 = vmatprep.subr.mxu0 0.0
  %2871 = vmatpush1.msra.mxu0 0.0
  %2872 = vmatprep.subr.mxu0 0.0
  %2873 = vmatpush1.msra.mxu0 0.0
  %2874 = vmatprep.subr.mxu0 0.0
  %2875 = vmatpush1.msra.mxu0 0.0
  %2876 = vmatprep.subr.mxu0 0.0
  %2877 = vmatpush1.msra.mxu0 0.0
  %2878 = vmatprep.subr.mxu0 0.0
  %2879 = vmatpush1.msra.mxu0 0.0
  %2880 = vmatprep.subr.mxu0 0.0
  %2881 = vmatpush1.msra.mxu0 0.0
  %2882 = vmatprep.subr.mxu0 0.0
  %2883 = vmatpush1.msra.mxu0 0.0
  %2884 = vmatprep.subr.mxu0 0.0
  %2885 = vmatpush1.msra.mxu0 0.0
  %2886 = vmatprep.subr.mxu0 0.0
  %2887 = vmatpush1.msra.mxu0 0.0
  %2888 = vmatprep.subr.mxu0 0.0
  %2889 = vmatpush1.msra.mxu0 0.0
  %2890 = vmatprep.subr.mxu0 0.0
  %2891 = vmatpush1.msra.mxu0 0.0
  %2892 = vmatprep.subr.mxu0 0.0
  %2893 = vmatpush1.msra.mxu0 0.0
  %2894 = vmatprep.subr.mxu0 0.0
  %2895 = vmatpush1.msra.mxu0 0.0
  %2896 = vmatprep.subr.mxu0 0.0
  %2897 = vmatpush1.msra.mxu0 0.0
  %2898 = vmatprep.mubr.f32.mxu0 0.0
  %2899 = vmatmul.mubr.f32.gmra.mrb[0].mxu0 %v2832
  %v2900 = vpop.f32.mrb[0].mxu0
  %v2901 = vadd.f32 %v2830, %v2900
  %v2902 = vpop.f32.mrb[0].mxu0
  %v2903 = vadd.f32 %v2831, %v2902
  %2904 = vdwg.mxu0
  %2905 = vset.pattern.permute.xlu0 65
  %2906 = vperm.xlu0 %2905, %v2595
  %v2907 = vpop.permute.xlu0 %2906
  %v2909 = vlaneseq
  %v2910 = vshrl.u32 %v2909, 7
  %v2911 = vsub.s32 1, %v2910
  %v2912 = vrot.slane %v2805, %v2911
  %v2913 = vlaneseq
  %v2914 = vshrl.u32 %v2913, 7
  %v2915 = vsub.s32 3, %v2914
  %v2916 = vrot.slane %v2805, %v2915
  %v2919 = vlaneseq
  %v2920 = vshrl.u32 %v2919, 7
  %v2921 = vsub.s32 1, %v2920
  %v2922 = vrot.slane %v2912, %v2921
  %v2923 = vlaneseq
  %v2924 = vshrl.u32 %v2923, 7
  %v2925 = vsub.s32 1, %v2924
  %v2926 = vrot.slane %v2916, %v2925
  %v2927 = vmul.f32 %v2907, %v2922
  %v2928 = vmul.f32 %v2907, %v2926
  %v2929 = vadd.f32 %v2901, %v2927
  %v2930 = vadd.f32 %v2903, %v2928
  %2931 = vset.pattern.permute.xlu0 66
  %2932 = vperm.xlu0 %2931, %v2595
  %v2933 = vpop.permute.xlu0 %2932
  %v2935 = vadd.f32 %v2929, %v2933
  %v2936 = vadd.f32 %v2930, %v2933
  %2937 = vst [vmem:[%s67] sm:$0xff] %v2935
  %2938 = vst [vmem:[%s67 + $0x8] sm:$0xff] %v2936
  %s2939 = smul.u32 8, 32
  %s2940 = smul.u32 %s2939, 4
  %s2941 = sshll.u32 %s2940, 4
  %2942 = dma.done [#allocation4], %s2941
  %s2943 = smul.u32 512, 1
  %s2944 = sshll.u32 %s2943, 4
  %2945 = dma.done %s433, %s2944
  %v2946 = vld [vmem:[#allocation2] sm:$0xff]
  %v2947 = vld [vmem:[#allocation2 + $0x8] sm:$0xff]
  %v2948 = vld [vmem:[#allocation2 + $0x10] sm:$0xff]
  %v2949 = vld [vmem:[#allocation2 + $0x18] sm:$0xff]
  %v2950 = vld [vmem:[#allocation2 + $0x20] sm:$0xff]
  %v2951 = vld [vmem:[#allocation2 + $0x28] sm:$0xff]
  %v2952 = vld [vmem:[#allocation2 + $0x30] sm:$0xff]
  %v2953 = vld [vmem:[#allocation2 + $0x38] sm:$0xff]
  %v2954 = vld [vmem:[#allocation2 + $0x40] sm:$0xff]
  %v2955 = vld [vmem:[#allocation2 + $0x48] sm:$0xff]
  %v2956 = vld [vmem:[#allocation2 + $0x50] sm:$0xff]
  %v2957 = vld [vmem:[#allocation2 + $0x58] sm:$0xff]
  %v2958 = vld [vmem:[#allocation2 + $0x60] sm:$0xff]
  %v2959 = vld [vmem:[#allocation2 + $0x68] sm:$0xff]
  %v2960 = vld [vmem:[#allocation2 + $0x70] sm:$0xff]
  %v2961 = vld [vmem:[#allocation2 + $0x78] sm:$0xff]
  %v2962 = vld [vmem:[#allocation2 + $0x80] sm:$0xff]
  %v2963 = vld [vmem:[#allocation2 + $0x88] sm:$0xff]
  %v2964 = vld [vmem:[#allocation2 + $0x90] sm:$0xff]
  %v2965 = vld [vmem:[#allocation2 + $0x98] sm:$0xff]
  %v2966 = vld [vmem:[#allocation2 + $0xa0] sm:$0xff]
  %v2967 = vld [vmem:[#allocation2 + $0xa8] sm:$0xff]
  %v2968 = vld [vmem:[#allocation2 + $0xb0] sm:$0xff]
  %v2969 = vld [vmem:[#allocation2 + $0xb8] sm:$0xff]
  %v2970 = vld [vmem:[#allocation2 + $0xc0] sm:$0xff]
  %v2971 = vld [vmem:[#allocation2 + $0xc8] sm:$0xff]
  %v2972 = vld [vmem:[#allocation2 + $0xd0] sm:$0xff]
  %v2973 = vld [vmem:[#allocation2 + $0xd8] sm:$0xff]
  %v2974 = vld [vmem:[#allocation2 + $0xe0] sm:$0xff]
  %v2975 = vld [vmem:[#allocation2 + $0xe8] sm:$0xff]
  %v2976 = vld [vmem:[#allocation2 + $0xf0] sm:$0xff]
  %v2977 = vld [vmem:[#allocation2 + $0xf8] sm:$0xff]
  %v2978 = vld [vmem:[#allocation2 + $0x100] sm:$0xff]
  %v2979 = vld [vmem:[#allocation2 + $0x108] sm:$0xff]
  %v2980 = vld [vmem:[#allocation2 + $0x110] sm:$0xff]
  %v2981 = vld [vmem:[#allocation2 + $0x118] sm:$0xff]
  %v2982 = vld [vmem:[#allocation2 + $0x120] sm:$0xff]
  %v2983 = vld [vmem:[#allocation2 + $0x128] sm:$0xff]
  %v2984 = vld [vmem:[#allocation2 + $0x130] sm:$0xff]
  %v2985 = vld [vmem:[#allocation2 + $0x138] sm:$0xff]
  %v2986 = vld [vmem:[#allocation2 + $0x140] sm:$0xff]
  %v2987 = vld [vmem:[#allocation2 + $0x148] sm:$0xff]
  %v2988 = vld [vmem:[#allocation2 + $0x150] sm:$0xff]
  %v2989 = vld [vmem:[#allocation2 + $0x158] sm:$0xff]
  %v2990 = vld [vmem:[#allocation2 + $0x160] sm:$0xff]
  %v2991 = vld [vmem:[#allocation2 + $0x168] sm:$0xff]
  %v2992 = vld [vmem:[#allocation2 + $0x170] sm:$0xff]
  %v2993 = vld [vmem:[#allocation2 + $0x178] sm:$0xff]
  %v2994 = vld [vmem:[#allocation2 + $0x180] sm:$0xff]
  %v2995 = vld [vmem:[#allocation2 + $0x188] sm:$0xff]
  %v2996 = vld [vmem:[#allocation2 + $0x190] sm:$0xff]
  %v2997 = vld [vmem:[#allocation2 + $0x198] sm:$0xff]
  %v2998 = vld [vmem:[#allocation2 + $0x1a0] sm:$0xff]
  %v2999 = vld [vmem:[#allocation2 + $0x1a8] sm:$0xff]
  %v3000 = vld [vmem:[#allocation2 + $0x1b0] sm:$0xff]
  %v3001 = vld [vmem:[#allocation2 + $0x1b8] sm:$0xff]
  %v3002 = vld [vmem:[#allocation2 + $0x1c0] sm:$0xff]
  %v3003 = vld [vmem:[#allocation2 + $0x1c8] sm:$0xff]
  %v3004 = vld [vmem:[#allocation2 + $0x1d0] sm:$0xff]
  %v3005 = vld [vmem:[#allocation2 + $0x1d8] sm:$0xff]
  %v3006 = vld [vmem:[#allocation2 + $0x1e0] sm:$0xff]
  %v3007 = vld [vmem:[#allocation2 + $0x1e8] sm:$0xff]
  %v3008 = vld [vmem:[#allocation2 + $0x1f0] sm:$0xff]
  %v3009 = vld [vmem:[#allocation2 + $0x1f8] sm:$0xff]
  %v3010 = vld [vmem:[#allocation2 + $0x200] sm:$0xff]
  %v3011 = vld [vmem:[#allocation2 + $0x208] sm:$0xff]
  %v3012 = vld [vmem:[#allocation2 + $0x210] sm:$0xff]
  %v3013 = vld [vmem:[#allocation2 + $0x218] sm:$0xff]
  %v3014 = vld [vmem:[#allocation2 + $0x220] sm:$0xff]
  %v3015 = vld [vmem:[#allocation2 + $0x228] sm:$0xff]
  %v3016 = vld [vmem:[#allocation2 + $0x230] sm:$0xff]
  %v3017 = vld [vmem:[#allocation2 + $0x238] sm:$0xff]
  %v3018 = vld [vmem:[#allocation2 + $0x240] sm:$0xff]
  %v3019 = vld [vmem:[#allocation2 + $0x248] sm:$0xff]
  %v3020 = vld [vmem:[#allocation2 + $0x250] sm:$0xff]
  %v3021 = vld [vmem:[#allocation2 + $0x258] sm:$0xff]
  %v3022 = vld [vmem:[#allocation2 + $0x260] sm:$0xff]
  %v3023 = vld [vmem:[#allocation2 + $0x268] sm:$0xff]
  %v3024 = vld [vmem:[#allocation2 + $0x270] sm:$0xff]
  %v3025 = vld [vmem:[#allocation2 + $0x278] sm:$0xff]
  %v3026 = vld [vmem:[#allocation2 + $0x280] sm:$0xff]
  %v3027 = vld [vmem:[#allocation2 + $0x288] sm:$0xff]
  %v3028 = vld [vmem:[#allocation2 + $0x290] sm:$0xff]
  %v3029 = vld [vmem:[#allocation2 + $0x298] sm:$0xff]
  %v3030 = vld [vmem:[#allocation2 + $0x2a0] sm:$0xff]
  %v3031 = vld [vmem:[#allocation2 + $0x2a8] sm:$0xff]
  %v3032 = vld [vmem:[#allocation2 + $0x2b0] sm:$0xff]
  %v3033 = vld [vmem:[#allocation2 + $0x2b8] sm:$0xff]
  %v3034 = vld [vmem:[#allocation2 + $0x2c0] sm:$0xff]
  %v3035 = vld [vmem:[#allocation2 + $0x2c8] sm:$0xff]
  %v3036 = vld [vmem:[#allocation2 + $0x2d0] sm:$0xff]
  %v3037 = vld [vmem:[#allocation2 + $0x2d8] sm:$0xff]
  %v3038 = vld [vmem:[#allocation2 + $0x2e0] sm:$0xff]
  %v3039 = vld [vmem:[#allocation2 + $0x2e8] sm:$0xff]
  %v3040 = vld [vmem:[#allocation2 + $0x2f0] sm:$0xff]
  %v3041 = vld [vmem:[#allocation2 + $0x2f8] sm:$0xff]
  %v3042 = vld [vmem:[#allocation2 + $0x300] sm:$0xff]
  %v3043 = vld [vmem:[#allocation2 + $0x308] sm:$0xff]
  %v3044 = vld [vmem:[#allocation2 + $0x310] sm:$0xff]
  %v3045 = vld [vmem:[#allocation2 + $0x318] sm:$0xff]
  %v3046 = vld [vmem:[#allocation2 + $0x320] sm:$0xff]
  %v3047 = vld [vmem:[#allocation2 + $0x328] sm:$0xff]
  %v3048 = vld [vmem:[#allocation2 + $0x330] sm:$0xff]
  %v3049 = vld [vmem:[#allocation2 + $0x338] sm:$0xff]
  %v3050 = vld [vmem:[#allocation2 + $0x340] sm:$0xff]
  %v3051 = vld [vmem:[#allocation2 + $0x348] sm:$0xff]
  %v3052 = vld [vmem:[#allocation2 + $0x350] sm:$0xff]
  %v3053 = vld [vmem:[#allocation2 + $0x358] sm:$0xff]
  %v3054 = vld [vmem:[#allocation2 + $0x360] sm:$0xff]
  %v3055 = vld [vmem:[#allocation2 + $0x368] sm:$0xff]
  %v3056 = vld [vmem:[#allocation2 + $0x370] sm:$0xff]
  %v3057 = vld [vmem:[#allocation2 + $0x378] sm:$0xff]
  %v3058 = vld [vmem:[#allocation2 + $0x380] sm:$0xff]
  %v3059 = vld [vmem:[#allocation2 + $0x388] sm:$0xff]
  %v3060 = vld [vmem:[#allocation2 + $0x390] sm:$0xff]
  %v3061 = vld [vmem:[#allocation2 + $0x398] sm:$0xff]
  %v3062 = vld [vmem:[#allocation2 + $0x3a0] sm:$0xff]
  %v3063 = vld [vmem:[#allocation2 + $0x3a8] sm:$0xff]
  %v3064 = vld [vmem:[#allocation2 + $0x3b0] sm:$0xff]
  %v3065 = vld [vmem:[#allocation2 + $0x3b8] sm:$0xff]
  %v3066 = vld [vmem:[#allocation2 + $0x3c0] sm:$0xff]
  %v3067 = vld [vmem:[#allocation2 + $0x3c8] sm:$0xff]
  %v3068 = vld [vmem:[#allocation2 + $0x3d0] sm:$0xff]
  %v3069 = vld [vmem:[#allocation2 + $0x3d8] sm:$0xff]
  %v3070 = vld [vmem:[#allocation2 + $0x3e0] sm:$0xff]
  %v3071 = vld [vmem:[#allocation2 + $0x3e8] sm:$0xff]
  %v3072 = vld [vmem:[#allocation2 + $0x3f0] sm:$0xff]
  %v3073 = vld [vmem:[#allocation2 + $0x3f8] sm:$0xff]
  %v3074 = vld [vmem:[%s59] sm:$0xf]
  %v3076 = vlaneseq
  %v3077 = vshrl.u32 %v3076, 7
  %v3078 = vsub.s32 0, %v3077
  %v3079 = vrot.slane %v3074, %v3078
  %v3080 = vlaneseq
  %v3081 = vshrl.u32 %v3080, 7
  %v3082 = vsub.s32 1, %v3081
  %v3083 = vrot.slane %v3074, %v3082
  %v3084 = vlaneseq
  %v3085 = vshrl.u32 %v3084, 7
  %v3086 = vsub.s32 2, %v3085
  %v3087 = vrot.slane %v3074, %v3086
  %v3088 = vlaneseq
  %v3089 = vshrl.u32 %v3088, 7
  %v3090 = vsub.s32 3, %v3089
  %v3091 = vrot.slane %v3074, %v3090
  %3096 = vmatprep.subr.mxu0 %v2947
  %3097 = vmatpush1.msra.mxu0 %v2946
  %3098 = vmatprep.subr.mxu0 %v2951
  %3099 = vmatpush1.msra.mxu0 %v2950
  %3100 = vmatprep.subr.mxu0 %v2955
  %3101 = vmatpush1.msra.mxu0 %v2954
  %3102 = vmatprep.subr.mxu0 %v2959
  %3103 = vmatpush1.msra.mxu0 %v2958
  %3104 = vmatprep.subr.mxu0 %v2963
  %3105 = vmatpush1.msra.mxu0 %v2962
  %3106 = vmatprep.subr.mxu0 %v2967
  %3107 = vmatpush1.msra.mxu0 %v2966
  %3108 = vmatprep.subr.mxu0 %v2971
  %3109 = vmatpush1.msra.mxu0 %v2970
  %3110 = vmatprep.subr.mxu0 %v2975
  %3111 = vmatpush1.msra.mxu0 %v2974
  %3112 = vmatprep.subr.mxu0 %v2979
  %3113 = vmatpush1.msra.mxu0 %v2978
  %3114 = vmatprep.subr.mxu0 %v2983
  %3115 = vmatpush1.msra.mxu0 %v2982
  %3116 = vmatprep.subr.mxu0 %v2987
  %3117 = vmatpush1.msra.mxu0 %v2986
  %3118 = vmatprep.subr.mxu0 %v2991
  %3119 = vmatpush1.msra.mxu0 %v2990
  %3120 = vmatprep.subr.mxu0 %v2995
  %3121 = vmatpush1.msra.mxu0 %v2994
  %3122 = vmatprep.subr.mxu0 %v2999
  %3123 = vmatpush1.msra.mxu0 %v2998
  %3124 = vmatprep.subr.mxu0 %v3003
  %3125 = vmatpush1.msra.mxu0 %v3002
  %3126 = vmatprep.subr.mxu0 %v3007
  %3127 = vmatpush1.msra.mxu0 %v3006
  %3128 = vmatprep.subr.mxu0 %v3011
  %3129 = vmatpush1.msra.mxu0 %v3010
  %3130 = vmatprep.subr.mxu0 %v3015
  %3131 = vmatpush1.msra.mxu0 %v3014
  %3132 = vmatprep.subr.mxu0 %v3019
  %3133 = vmatpush1.msra.mxu0 %v3018
  %3134 = vmatprep.subr.mxu0 %v3023
  %3135 = vmatpush1.msra.mxu0 %v3022
  %3136 = vmatprep.subr.mxu0 %v3027
  %3137 = vmatpush1.msra.mxu0 %v3026
  %3138 = vmatprep.subr.mxu0 %v3031
  %3139 = vmatpush1.msra.mxu0 %v3030
  %3140 = vmatprep.subr.mxu0 %v3035
  %3141 = vmatpush1.msra.mxu0 %v3034
  %3142 = vmatprep.subr.mxu0 %v3039
  %3143 = vmatpush1.msra.mxu0 %v3038
  %3144 = vmatprep.subr.mxu0 %v3043
  %3145 = vmatpush1.msra.mxu0 %v3042
  %3146 = vmatprep.subr.mxu0 %v3047
  %3147 = vmatpush1.msra.mxu0 %v3046
  %3148 = vmatprep.subr.mxu0 %v3051
  %3149 = vmatpush1.msra.mxu0 %v3050
  %3150 = vmatprep.subr.mxu0 %v3055
  %3151 = vmatpush1.msra.mxu0 %v3054
  %3152 = vmatprep.subr.mxu0 %v3059
  %3153 = vmatpush1.msra.mxu0 %v3058
  %3154 = vmatprep.subr.mxu0 %v3063
  %3155 = vmatpush1.msra.mxu0 %v3062
  %3156 = vmatprep.subr.mxu0 %v3067
  %3157 = vmatpush1.msra.mxu0 %v3066
  %3158 = vmatprep.subr.mxu0 %v3071
  %3159 = vmatpush1.msra.mxu0 %v3070
  %3160 = vmatprep.mubr.f32.mxu0 %v2936
  %3161 = vmatmul.mubr.f32.gmra.mrb[0].mxu0 %v2935
  %v3162 = vpop.f32.mrb[0].mxu0
  %v3163 = vadd.f32 %v3079, %v3162
  %v3164 = vpop.f32.mrb[0].mxu0
  %v3165 = vadd.f32 %v3083, %v3164
  %3166 = vdwg.mxu0
  %3167 = vmatprep.subr.mxu0 %v2949
  %3168 = vmatpush1.msra.mxu0 %v2948
  %3169 = vmatprep.subr.mxu0 %v2953
  %3170 = vmatpush1.msra.mxu0 %v2952
  %3171 = vmatprep.subr.mxu0 %v2957
  %3172 = vmatpush1.msra.mxu0 %v2956
  %3173 = vmatprep.subr.mxu0 %v2961
  %3174 = vmatpush1.msra.mxu0 %v2960
  %3175 = vmatprep.subr.mxu0 %v2965
  %3176 = vmatpush1.msra.mxu0 %v2964
  %3177 = vmatprep.subr.mxu0 %v2969
  %3178 = vmatpush1.msra.mxu0 %v2968
  %3179 = vmatprep.subr.mxu0 %v2973
  %3180 = vmatpush1.msra.mxu0 %v2972
  %3181 = vmatprep.subr.mxu0 %v2977
  %3182 = vmatpush1.msra.mxu0 %v2976
  %3183 = vmatprep.subr.mxu0 %v2981
  %3184 = vmatpush1.msra.mxu0 %v2980
  %3185 = vmatprep.subr.mxu0 %v2985
  %3186 = vmatpush1.msra.mxu0 %v2984
  %3187 = vmatprep.subr.mxu0 %v2989
  %3188 = vmatpush1.msra.mxu0 %v2988
  %3189 = vmatprep.subr.mxu0 %v2993
  %3190 = vmatpush1.msra.mxu0 %v2992
  %3191 = vmatprep.subr.mxu0 %v2997
  %3192 = vmatpush1.msra.mxu0 %v2996
  %3193 = vmatprep.subr.mxu0 %v3001
  %3194 = vmatpush1.msra.mxu0 %v3000
  %3195 = vmatprep.subr.mxu0 %v3005
  %3196 = vmatpush1.msra.mxu0 %v3004
  %3197 = vmatprep.subr.mxu0 %v3009
  %3198 = vmatpush1.msra.mxu0 %v3008
  %3199 = vmatprep.subr.mxu0 %v3013
  %3200 = vmatpush1.msra.mxu0 %v3012
  %3201 = vmatprep.subr.mxu0 %v3017
  %3202 = vmatpush1.msra.mxu0 %v3016
  %3203 = vmatprep.subr.mxu0 %v3021
  %3204 = vmatpush1.msra.mxu0 %v3020
  %3205 = vmatprep.subr.mxu0 %v3025
  %3206 = vmatpush1.msra.mxu0 %v3024
  %3207 = vmatprep.subr.mxu0 %v3029
  %3208 = vmatpush1.msra.mxu0 %v3028
  %3209 = vmatprep.subr.mxu0 %v3033
  %3210 = vmatpush1.msra.mxu0 %v3032
  %3211 = vmatprep.subr.mxu0 %v3037
  %3212 = vmatpush1.msra.mxu0 %v3036
  %3213 = vmatprep.subr.mxu0 %v3041
  %3214 = vmatpush1.msra.mxu0 %v3040
  %3215 = vmatprep.subr.mxu0 %v3045
  %3216 = vmatpush1.msra.mxu0 %v3044
  %3217 = vmatprep.subr.mxu0 %v3049
  %3218 = vmatpush1.msra.mxu0 %v3048
  %3219 = vmatprep.subr.mxu0 %v3053
  %3220 = vmatpush1.msra.mxu0 %v3052
  %3221 = vmatprep.subr.mxu0 %v3057
  %3222 = vmatpush1.msra.mxu0 %v3056
  %3223 = vmatprep.subr.mxu0 %v3061
  %3224 = vmatpush1.msra.mxu0 %v3060
  %3225 = vmatprep.subr.mxu0 %v3065
  %3226 = vmatpush1.msra.mxu0 %v3064
  %3227 = vmatprep.subr.mxu0 %v3069
  %3228 = vmatpush1.msra.mxu0 %v3068
  %3229 = vmatprep.subr.mxu0 %v3073
  %3230 = vmatpush1.msra.mxu0 %v3072
  %3231 = vmatprep.mubr.f32.mxu0 %v2936
  %3232 = vmatmul.mubr.f32.gmra.mrb[0].mxu0 %v2935
  %v3233 = vpop.f32.mrb[0].mxu0
  %v3234 = vadd.f32 %v3087, %v3233
  %v3235 = vpop.f32.mrb[0].mxu0
  %v3236 = vadd.f32 %v3091, %v3235
  %3237 = vdwg.mxu0
  %v3238 = vmax.f32 %v3163, 0.0
  %v3239 = vmax.f32 %v3165, 0.0
  %v3240 = vmax.f32 %v3234, 0.0
  %v3241 = vmax.f32 %v3236, 0.0
  %v3242 = vld [vmem:[#allocation3] sm:$0xff]
  %v3243 = vld [vmem:[#allocation3 + $0x8] sm:$0xff]
  %v3244 = vld [vmem:[#allocation3 + $0x10] sm:$0xff]
  %v3245 = vld [vmem:[#allocation3 + $0x18] sm:$0xff]
  %v3246 = vld [vmem:[#allocation3 + $0x20] sm:$0xff]
  %v3247 = vld [vmem:[#allocation3 + $0x28] sm:$0xff]
  %v3248 = vld [vmem:[#allocation3 + $0x30] sm:$0xff]
  %v3249 = vld [vmem:[#allocation3 + $0x38] sm:$0xff]
  %v3250 = vld [vmem:[#allocation3 + $0x40] sm:$0xff]
  %v3251 = vld [vmem:[#allocation3 + $0x48] sm:$0xff]
  %v3252 = vld [vmem:[#allocation3 + $0x50] sm:$0xff]
  %v3253 = vld [vmem:[#allocation3 + $0x58] sm:$0xff]
  %v3254 = vld [vmem:[#allocation3 + $0x60] sm:$0xff]
  %v3255 = vld [vmem:[#allocation3 + $0x68] sm:$0xff]
  %v3256 = vld [vmem:[#allocation3 + $0x70] sm:$0xff]
  %v3257 = vld [vmem:[#allocation3 + $0x78] sm:$0xff]
  %v3258 = vld [vmem:[#allocation3 + $0x80] sm:$0xff]
  %v3259 = vld [vmem:[#allocation3 + $0x88] sm:$0xff]
  %v3260 = vld [vmem:[#allocation3 + $0x90] sm:$0xff]
  %v3261 = vld [vmem:[#allocation3 + $0x98] sm:$0xff]
  %v3262 = vld [vmem:[#allocation3 + $0xa0] sm:$0xff]
  %v3263 = vld [vmem:[#allocation3 + $0xa8] sm:$0xff]
  %v3264 = vld [vmem:[#allocation3 + $0xb0] sm:$0xff]
  %v3265 = vld [vmem:[#allocation3 + $0xb8] sm:$0xff]
  %v3266 = vld [vmem:[#allocation3 + $0xc0] sm:$0xff]
  %v3267 = vld [vmem:[#allocation3 + $0xc8] sm:$0xff]
  %v3268 = vld [vmem:[#allocation3 + $0xd0] sm:$0xff]
  %v3269 = vld [vmem:[#allocation3 + $0xd8] sm:$0xff]
  %v3270 = vld [vmem:[#allocation3 + $0xe0] sm:$0xff]
  %v3271 = vld [vmem:[#allocation3 + $0xe8] sm:$0xff]
  %v3272 = vld [vmem:[#allocation3 + $0xf0] sm:$0xff]
  %v3273 = vld [vmem:[#allocation3 + $0xf8] sm:$0xff]
  %v3274 = vld [vmem:[#allocation3 + $0x100] sm:$0xff]
  %v3275 = vld [vmem:[#allocation3 + $0x108] sm:$0xff]
  %v3276 = vld [vmem:[#allocation3 + $0x110] sm:$0xff]
  %v3277 = vld [vmem:[#allocation3 + $0x118] sm:$0xff]
  %v3278 = vld [vmem:[#allocation3 + $0x120] sm:$0xff]
  %v3279 = vld [vmem:[#allocation3 + $0x128] sm:$0xff]
  %v3280 = vld [vmem:[#allocation3 + $0x130] sm:$0xff]
  %v3281 = vld [vmem:[#allocation3 + $0x138] sm:$0xff]
  %v3282 = vld [vmem:[#allocation3 + $0x140] sm:$0xff]
  %v3283 = vld [vmem:[#allocation3 + $0x148] sm:$0xff]
  %v3284 = vld [vmem:[#allocation3 + $0x150] sm:$0xff]
  %v3285 = vld [vmem:[#allocation3 + $0x158] sm:$0xff]
  %v3286 = vld [vmem:[#allocation3 + $0x160] sm:$0xff]
  %v3287 = vld [vmem:[#allocation3 + $0x168] sm:$0xff]
  %v3288 = vld [vmem:[#allocation3 + $0x170] sm:$0xff]
  %v3289 = vld [vmem:[#allocation3 + $0x178] sm:$0xff]
  %v3290 = vld [vmem:[#allocation3 + $0x180] sm:$0xff]
  %v3291 = vld [vmem:[#allocation3 + $0x188] sm:$0xff]
  %v3292 = vld [vmem:[#allocation3 + $0x190] sm:$0xff]
  %v3293 = vld [vmem:[#allocation3 + $0x198] sm:$0xff]
  %v3294 = vld [vmem:[#allocation3 + $0x1a0] sm:$0xff]
  %v3295 = vld [vmem:[#allocation3 + $0x1a8] sm:$0xff]
  %v3296 = vld [vmem:[#allocation3 + $0x1b0] sm:$0xff]
  %v3297 = vld [vmem:[#allocation3 + $0x1b8] sm:$0xff]
  %v3298 = vld [vmem:[#allocation3 + $0x1c0] sm:$0xff]
  %v3299 = vld [vmem:[#allocation3 + $0x1c8] sm:$0xff]
  %v3300 = vld [vmem:[#allocation3 + $0x1d0] sm:$0xff]
  %v3301 = vld [vmem:[#allocation3 + $0x1d8] sm:$0xff]
  %v3302 = vld [vmem:[#allocation3 + $0x1e0] sm:$0xff]
  %v3303 = vld [vmem:[#allocation3 + $0x1e8] sm:$0xff]
  %v3304 = vld [vmem:[#allocation3 + $0x1f0] sm:$0xff]
  %v3305 = vld [vmem:[#allocation3 + $0x1f8] sm:$0xff]
  %v3306 = vld [vmem:[%s61] sm:$0x1]
  %v3308 = vlaneseq
  %v3309 = vshrl.u32 %v3308, 7
  %v3310 = vsub.s32 0, %v3309
  %v3311 = vrot.slane %v3306, %v3310
  %3313 = vmatprep.subr.mxu0 0.0
  %3314 = vmatpush1.msra.mxu0 %v3242
  %3315 = vmatprep.subr.mxu0 0.0
  %3316 = vmatpush1.msra.mxu0 %v3243
  %3317 = vmatprep.subr.mxu0 0.0
  %3318 = vmatpush1.msra.mxu0 %v3244
  %3319 = vmatprep.subr.mxu0 0.0
  %3320 = vmatpush1.msra.mxu0 %v3245
  %3321 = vmatprep.subr.mxu0 0.0
  %3322 = vmatpush1.msra.mxu0 %v3246
  %3323 = vmatprep.subr.mxu0 0.0
  %3324 = vmatpush1.msra.mxu0 %v3247
  %3325 = vmatprep.subr.mxu0 0.0
  %3326 = vmatpush1.msra.mxu0 %v3248
  %3327 = vmatprep.subr.mxu0 0.0
  %3328 = vmatpush1.msra.mxu0 %v3249
  %3329 = vmatprep.subr.mxu0 0.0
  %3330 = vmatpush1.msra.mxu0 %v3250
  %3331 = vmatprep.subr.mxu0 0.0
  %3332 = vmatpush1.msra.mxu0 %v3251
  %3333 = vmatprep.subr.mxu0 0.0
  %3334 = vmatpush1.msra.mxu0 %v3252
  %3335 = vmatprep.subr.mxu0 0.0
  %3336 = vmatpush1.msra.mxu0 %v3253
  %3337 = vmatprep.subr.mxu0 0.0
  %3338 = vmatpush1.msra.mxu0 %v3254
  %3339 = vmatprep.subr.mxu0 0.0
  %3340 = vmatpush1.msra.mxu0 %v3255
  %3341 = vmatprep.subr.mxu0 0.0
  %3342 = vmatpush1.msra.mxu0 %v3256
  %3343 = vmatprep.subr.mxu0 0.0
  %3344 = vmatpush1.msra.mxu0 %v3257
  %3345 = vmatprep.subr.mxu0 0.0
  %3346 = vmatpush1.msra.mxu0 %v3258
  %3347 = vmatprep.subr.mxu0 0.0
  %3348 = vmatpush1.msra.mxu0 %v3259
  %3349 = vmatprep.subr.mxu0 0.0
  %3350 = vmatpush1.msra.mxu0 %v3260
  %3351 = vmatprep.subr.mxu0 0.0
  %3352 = vmatpush1.msra.mxu0 %v3261
  %3353 = vmatprep.subr.mxu0 0.0
  %3354 = vmatpush1.msra.mxu0 %v3262
  %3355 = vmatprep.subr.mxu0 0.0
  %3356 = vmatpush1.msra.mxu0 %v3263
  %3357 = vmatprep.subr.mxu0 0.0
  %3358 = vmatpush1.msra.mxu0 %v3264
  %3359 = vmatprep.subr.mxu0 0.0
  %3360 = vmatpush1.msra.mxu0 %v3265
  %3361 = vmatprep.subr.mxu0 0.0
  %3362 = vmatpush1.msra.mxu0 %v3266
  %3363 = vmatprep.subr.mxu0 0.0
  %3364 = vmatpush1.msra.mxu0 %v3267
  %3365 = vmatprep.subr.mxu0 0.0
  %3366 = vmatpush1.msra.mxu0 %v3268
  %3367 = vmatprep.subr.mxu0 0.0
  %3368 = vmatpush1.msra.mxu0 %v3269
  %3369 = vmatprep.subr.mxu0 0.0
  %3370 = vmatpush1.msra.mxu0 %v3270
  %3371 = vmatprep.subr.mxu0 0.0
  %3372 = vmatpush1.msra.mxu0 %v3271
  %3373 = vmatprep.subr.mxu0 0.0
  %3374 = vmatpush1.msra.mxu0 %v3272
  %3375 = vmatprep.subr.mxu0 0.0
  %3376 = vmatpush1.msra.mxu0 %v3273
  %3377 = vmatprep.mubr.f32.mxu0 %v3239
  %3378 = vmatmul.mubr.f32.gmra.mrb[0].mxu0 %v3238
  %v3379 = vpop.f32.mrb[0].mxu0
  %v3380 = vadd.f32 %v3311, %v3379
  %v3381 = vpop.f32.mrb[0].mxu0
  %3382 = vdwg.mxu0
  %3383 = vmatprep.subr.mxu0 0.0
  %3384 = vmatpush1.msra.mxu0 %v3274
  %3385 = vmatprep.subr.mxu0 0.0
  %3386 = vmatpush1.msra.mxu0 %v3275
  %3387 = vmatprep.subr.mxu0 0.0
  %3388 = vmatpush1.msra.mxu0 %v3276
  %3389 = vmatprep.subr.mxu0 0.0
  %3390 = vmatpush1.msra.mxu0 %v3277
  %3391 = vmatprep.subr.mxu0 0.0
  %3392 = vmatpush1.msra.mxu0 %v3278
  %3393 = vmatprep.subr.mxu0 0.0
  %3394 = vmatpush1.msra.mxu0 %v3279
  %3395 = vmatprep.subr.mxu0 0.0
  %3396 = vmatpush1.msra.mxu0 %v3280
  %3397 = vmatprep.subr.mxu0 0.0
  %3398 = vmatpush1.msra.mxu0 %v3281
  %3399 = vmatprep.subr.mxu0 0.0
  %3400 = vmatpush1.msra.mxu0 %v3282
  %3401 = vmatprep.subr.mxu0 0.0
  %3402 = vmatpush1.msra.mxu0 %v3283
  %3403 = vmatprep.subr.mxu0 0.0
  %3404 = vmatpush1.msra.mxu0 %v3284
  %3405 = vmatprep.subr.mxu0 0.0
  %3406 = vmatpush1.msra.mxu0 %v3285
  %3407 = vmatprep.subr.mxu0 0.0
  %3408 = vmatpush1.msra.mxu0 %v3286
  %3409 = vmatprep.subr.mxu0 0.0
  %3410 = vmatpush1.msra.mxu0 %v3287
  %3411 = vmatprep.subr.mxu0 0.0
  %3412 = vmatpush1.msra.mxu0 %v3288
  %3413 = vmatprep.subr.mxu0 0.0
  %3414 = vmatpush1.msra.mxu0 %v3289
  %3415 = vmatprep.subr.mxu0 0.0
  %3416 = vmatpush1.msra.mxu0 %v3290
  %3417 = vmatprep.subr.mxu0 0.0
  %3418 = vmatpush1.msra.mxu0 %v3291
  %3419 = vmatprep.subr.mxu0 0.0
  %3420 = vmatpush1.msra.mxu0 %v3292
  %3421 = vmatprep.subr.mxu0 0.0
  %3422 = vmatpush1.msra.mxu0 %v3293
  %3423 = vmatprep.subr.mxu0 0.0
  %3424 = vmatpush1.msra.mxu0 %v3294
  %3425 = vmatprep.subr.mxu0 0.0
  %3426 = vmatpush1.msra.mxu0 %v3295
  %3427 = vmatprep.subr.mxu0 0.0
  %3428 = vmatpush1.msra.mxu0 %v3296
  %3429 = vmatprep.subr.mxu0 0.0
  %3430 = vmatpush1.msra.mxu0 %v3297
  %3431 = vmatprep.subr.mxu0 0.0
  %3432 = vmatpush1.msra.mxu0 %v3298
  %3433 = vmatprep.subr.mxu0 0.0
  %3434 = vmatpush1.msra.mxu0 %v3299
  %3435 = vmatprep.subr.mxu0 0.0
  %3436 = vmatpush1.msra.mxu0 %v3300
  %3437 = vmatprep.subr.mxu0 0.0
  %3438 = vmatpush1.msra.mxu0 %v3301
  %3439 = vmatprep.subr.mxu0 0.0
  %3440 = vmatpush1.msra.mxu0 %v3302
  %3441 = vmatprep.subr.mxu0 0.0
  %3442 = vmatpush1.msra.mxu0 %v3303
  %3443 = vmatprep.subr.mxu0 0.0
  %3444 = vmatpush1.msra.mxu0 %v3304
  %3445 = vmatprep.subr.mxu0 0.0
  %3446 = vmatpush1.msra.mxu0 %v3305
  %3447 = vmatprep.mubr.f32.mxu0 %v3241
  %3448 = vmatmul.mubr.f32.gmra.mrb[0].mxu0 %v3240
  %v3449 = vpop.f32.mrb[0].mxu0
  %v3450 = vadd.f32 %v3380, %v3449
  %v3451 = vpop.f32.mrb[0].mxu0
  %3452 = vdwg.mxu0
  %3453 = vst [vmem:[%s69] sm:$0xf] 0.0
  %vm3454 = vcmask 257024
  %3455 = vst.msk [vmem:[%s69] sm:$0xf] %vm3454, %v3450
  %vm3456 = vcmask 265472
  %3457 = vst.msk [vmem:[%s69] sm:$0xf] %vm3456, %v2415
  %vm3458 = vcmask 273672
  %3459 = vst.msk [vmem:[%s69] sm:$0xf] %vm3458, %v2420
  // Predicated region
  $region194: #{condlanenet_forward.1} parent=0 // pred_check
    _
  $region195: #{condlanenet_forward.1} parent=0 // pred_check_branch
    %3461 = sbr.rel (0) target = $region197
  $region196: #{condlanenet_forward.1} parent=0 // pred_region
    _
  $region197: #{condlanenet_forward.1} parent=0 // pred_fallthru
    _
  // Predicated region
  $region198: #{condlanenet_forward.1} parent=0 // pred_check
    _
  $region199: #{condlanenet_forward.1} parent=0 // pred_check_branch
    %3463 = sbr.rel (0) target = $region201
  $region200: #{condlanenet_forward.1} parent=0 // pred_region
    _
  $region201: #{condlanenet_forward.1} parent=0 // pred_fallthru
    _
  // Predicated region
  $region202: #{condlanenet_forward.1} parent=0 // pred_check
    _
  $region203: #{condlanenet_forward.1} parent=0 // pred_check_branch
    %3465 = sbr.rel (0) target = $region205
  $region204: #{condlanenet_forward.1} parent=0 // pred_region
    _
  $region205: #{condlanenet_forward.1} parent=0 // pred_fallthru
    _
  // Predicated region
  $region206: #{condlanenet_forward.1} parent=0 // pred_check
    _
  $region207: #{condlanenet_forward.1} parent=0 // pred_check_branch
    %3467 = sbr.rel (0) target = $region209
  $region208: #{condlanenet_forward.1} parent=0 // pred_region
    _
  $region209: #{condlanenet_forward.1} parent=0 // pred_fallthru
    _
  %3468 = vsyncmov [#allocation4]
  %s3469 = vpop.sfrf %3468
  %p3470 = scmp.eq.s32.totalorder %s3469, 0
  %p3471 = pneg %p3470
  %3473 = shalt.err (%p3471)
  %s3474 = scalar_lea.sflag [#allocation4], 1
  %3475 = vsyncmov %s3474
  %s3476 = vpop.sfrf %3475
  %p3477 = scmp.eq.s32.totalorder %s3476, 0
  %p3478 = pneg %p3477
  %3480 = shalt.err (%p3478)

</llo_original>
